<compile_context>
chip_gen: v5e
topology: v5e:2x2
jax: 0.10.0
libtpu: 0.0.40
codegen_flags: <defaults>
</compile_context>

<pallas_src>
import functools
import math

import jax
import jax.numpy as jnp
from jax.experimental import pallas as pl
from jax.experimental.pallas import tpu as pltpu


DEF_TM, DEF_TN, DEF_TK = 256, 256, 512


def _round_up(x, m):
    return (x + m - 1) // m * m


def _pad2d(a, rows, cols):
    r, c = a.shape
    if r == rows and c == cols:
        return a
    return jnp.pad(a, ((0, rows - r), (0, cols - c)))


def _tile_n(n, tn=DEF_TN):
    tn_eff = min(tn, _round_up(n, 128))
    return tn_eff, _round_up(n, tn_eff)


# ------------------------- fused matmul Pallas kernel -------------------------

def _fused_mm_kernel(*refs, nk, has_ln, has_res, activation):
    # refs = [x, w, b, (ln_g, ln_b)?, (residual)?, out, acc, (ln_cache)?]
    x_ref, w_ref, b_ref = refs[0], refs[1], refs[2]
    idx = 3
    if has_ln:
        g_ref, beta_ref = refs[idx], refs[idx + 1]
        idx += 2
    if has_res:
        r_ref = refs[idx]
        idx += 1
    o_ref = refs[idx]
    acc_ref = refs[idx + 1]
    ln_ref = refs[idx + 2] if has_ln else None

    j = pl.program_id(1)
    k = pl.program_id(2)

    @pl.when(k == 0)
    def _():
        acc_ref[...] = jnp.zeros_like(acc_ref)

    if has_ln:
        # LN fused into the consumer matmul.  The wrapper enforces nk == 1 for
        # LN calls and marks the j (N) axis "arbitrary", so the normalized
        # tile is computed once per M-tile and reused for every N tile.
        @pl.when(j == 0)
        def _():
            x = x_ref[...].astype(jnp.float32)
            mean = jnp.mean(x, axis=-1, keepdims=True)
            var = jnp.mean(jnp.square(x - mean), axis=-1, keepdims=True)
            xn = (x - mean) * jax.lax.rsqrt(var + 1e-5)
            xn = xn * g_ref[...] + beta_ref[...]
            ln_ref[...] = xn.astype(jnp.bfloat16)
        lhs = ln_ref[...]
    else:
        lhs = x_ref[...].astype(jnp.bfloat16)

    # bf16 MXU inputs, f32 accumulation (weights are pre-cast to bf16).
    acc_ref[...] += jnp.dot(lhs, w_ref[...], preferred_element_type=jnp.float32)

    @pl.when(k == nk - 1)
    def _():
        y = acc_ref[...] + b_ref[...]
        if activation == "gelu":
            y = jax.nn.gelu(y)  # TODO(synk): tanh approx vs torch erf GELU.
        if has_res:
            y = y + r_ref[...].astype(jnp.float32)
        o_ref[...] = y.astype(o_ref.dtype)


def fused_matmul(x, w_p, b_p, n_out, *, ln=None, residual=None, activation=None,
                 out_dtype=jnp.float32, tm=DEF_TM, tn=DEF_TN, tk=DEF_TK):
    """y = [LN](x) @ w_p + b_p, optional GELU, optional residual add.

    x: (M, K) f32 or bf16.  w_p: (K, n_pad) bf16, pre-padded to a multiple of
    128 lanes by prep_params.  b_p: (1, n_pad) f32.  Returns (M, n_out).
    """
    M, K = x.shape
    Kw, n_pad = w_p.shape
    assert Kw == K
    tn_eff = min(tn, n_pad)
    assert n_pad % tn_eff == 0

    tm_eff = min(tm, _round_up(M, 8))
    m_pad = _round_up(M, tm_eff)

    has_ln = ln is not None
    has_res = residual is not None

    # K-tiling only when LN is not fused (LN needs the full feature row) and
    # K divides cleanly (e.g. ViT-B FFN2, K=3072).
    if (not has_ln) and K > tk and K % tk == 0:
        tk_eff, nk = tk, K // tk
    else:
        tk_eff, nk = K, 1

    x_p = _pad2d(x, m_pad, K)
    inputs = [x_p, w_p, b_p]
    in_specs = [
        pl.BlockSpec((tm_eff, tk_eff), lambda i, j, k: (i, k)),
        pl.BlockSpec((tk_eff, tn_eff), lambda i, j, k: (k, j)),
        pl.BlockSpec((1, tn_eff), lambda i, j, k: (0, j)),
    ]
    scratch = [pltpu.VMEM((tm_eff, tn_eff), jnp.float32)]
    if has_ln:
        g, beta = ln
        inputs += [g.reshape(1, K).astype(jnp.float32),
                   beta.reshape(1, K).astype(jnp.float32)]
        in_specs += [pl.BlockSpec((1, K), lambda i, j, k: (0, 0)),
                     pl.BlockSpec((1, K), lambda i, j, k: (0, 0))]
        scratch.append(pltpu.VMEM((tm_eff, K), jnp.bfloat16))  # cached LN(x)
    if has_res:
        inputs.append(_pad2d(residual, m_pad, n_pad))
        in_specs.append(pl.BlockSpec((tm_eff, tn_eff), lambda i, j, k: (i, j)))

    # For LN calls the N axis must stay on one core (LN cache reuse); M stays
    # parallel so megacore still shards work.
    sem = (("parallel", "arbitrary", "arbitrary") if has_ln
           else ("parallel", "parallel", "arbitrary"))

    kernel = functools.partial(_fused_mm_kernel, nk=nk, has_ln=has_ln,
                               has_res=has_res, activation=activation)
    out = pl.pallas_call(
        kernel,
        out_shape=jax.ShapeDtypeStruct((m_pad, n_pad), out_dtype),
        grid_spec=pltpu.PrefetchScalarGridSpec(
            num_scalar_prefetch=0,
            grid=(m_pad // tm_eff, n_pad // tn_eff, nk),
            in_specs=in_specs,
            out_specs=pl.BlockSpec((tm_eff, tn_eff), lambda i, j, k: (i, j)),
            scratch_shapes=scratch,
        ),
        compiler_params=pltpu.CompilerParams(dimension_semantics=sem),
    )(*inputs)
    return out[:M, :n_out]


# ---------------------------- attention Pallas kernel ----------------------------

def _attention_kernel(q_ref, k_ref, v_ref, o_ref, *, true_s):
    # Blocks are (heads_per_step, S_pad, dh) bf16; all heads of the step run
    # in one kernel body so back-to-back MXU pushes stay pipelined.
    q = q_ref[...]
    k = k_ref[...]
    s = jnp.einsum("hqd,hkd->hqk", q, k, preferred_element_type=jnp.float32)
    key_idx = jax.lax.broadcasted_iota(jnp.int32, s.shape, 2)
    s = jnp.where(key_idx < true_s, s, -jnp.inf)   # mask padded keys
    m = jnp.max(s, axis=-1, keepdims=True)
    p = jnp.exp(s - m)
    denom = jnp.sum(p, axis=-1, keepdims=True)
    attn = (p * pl.reciprocal(denom, approx=True)).astype(jnp.bfloat16)
    o = jnp.einsum("hqk,hkd->hqd", attn, v_ref[...],
                   preferred_element_type=jnp.float32)
    o_ref[...] = o.astype(o_ref.dtype)


def mhsa(q, k, v, *, true_s, head_splits):
    """q, k, v: (B, H, S_pad, dh) bf16 (scale already folded into q).

    Grid is (B, head_splits): all H/head_splits heads of a step share one
    kernel invocation; head_splits=2 keeps both v7x TensorCores busy at
    small batch.
    """
    B, Hh, S_pad, dh = q.shape
    hb = Hh // head_splits
    kernel = functools.partial(_attention_kernel, true_s=true_s)
    spec = pl.BlockSpec((None, hb, S_pad, dh), lambda b, h: (b, h, 0, 0))
    return pl.pallas_call(
        kernel,
        out_shape=jax.ShapeDtypeStruct((B, Hh, S_pad, dh), q.dtype),
        grid=(B, head_splits),
        in_specs=[spec, spec, spec],
        out_specs=spec,
        compiler_params=pltpu.CompilerParams(
            dimension_semantics=("parallel", "parallel")),
    )(q, k, v)


# ---------------------------------- parameters ----------------------------------

def init_params(key, *, img_size, patch_size, num_blocks, d_model, d_ffn,
                num_heads, num_classes):
    patch_len = (img_size // patch_size) ** 2 + 1
    keys = jax.random.split(key, 8 + 8 * num_blocks)
    ki = iter(keys)

    def nrm(k, shape):
        return jax.random.normal(k, shape, jnp.float32) * 0.02

    params = {
        "cls_token": jnp.zeros((d_model,), jnp.float32),   # nn.Parameter(zeros)
        "patch_w": nrm(next(ki), (d_model, 3, patch_size, patch_size)),
        "patch_b": nrm(next(ki), (d_model,)),
        "pos_emb": nrm(next(ki), (patch_len, d_model)),
        "ln_f_g": jnp.ones((d_model,), jnp.float32),
        "ln_f_b": jnp.zeros((d_model,), jnp.float32),
        "head_w": nrm(next(ki), (d_model, num_classes)),
        "head_b": jnp.zeros((num_classes,), jnp.float32),
        "blocks": [],
    }
    for _ in range(num_blocks):
        blk = {
            "ln1_g": jnp.ones((d_model,), jnp.float32),
            "ln1_b": jnp.zeros((d_model,), jnp.float32),
            "wq": nrm(next(ki), (d_model, d_model)), "bq": jnp.zeros((d_model,)),
            "wk": nrm(next(ki), (d_model, d_model)), "bk": jnp.zeros((d_model,)),
            "wv": nrm(next(ki), (d_model, d_model)), "bv": jnp.zeros((d_model,)),
            "wo": nrm(next(ki), (d_model, d_model)), "bo": jnp.zeros((d_model,)),
            "ln2_g": jnp.ones((d_model,), jnp.float32),
            "ln2_b": jnp.zeros((d_model,), jnp.float32),
            "w1": nrm(next(ki), (d_model, d_ffn)), "b1": jnp.zeros((d_ffn,)),
            "w2": nrm(next(ki), (d_ffn, d_model)), "b2": jnp.zeros((d_model,)),
        }
        params["blocks"].append(blk)
    return params


def _prep_linear(w, b):
    """Pre-pad N to the tiling used by fused_matmul and pre-cast to bf16."""
    K, N = w.shape
    _, n_pad = _tile_n(N)
    w_p = _pad2d(w.astype(jnp.float32), K, n_pad).astype(jnp.bfloat16)
    b_p = _pad2d(b.reshape(1, N).astype(jnp.float32), 1, n_pad)
    return w_p, b_p


def prep_params(params, num_heads):
    """One-time weight preprocessing hoisted out of the forward pass:
    QKV concat, 1/sqrt(dh) folded into the Q columns, bf16 cast, lane pad."""
    d = params["cls_token"].shape[0]
    dh = d // num_heads
    scale = 1.0 / math.sqrt(dh)
    C, p = params["patch_w"].shape[1], params["patch_w"].shape[2]

    w_patch = params["patch_w"].reshape(d, C * p * p).T          # (C*p*p, d)
    pw, pb = _prep_linear(w_patch, params["patch_b"])
    hw, hb_ = _prep_linear(params["head_w"], params["head_b"])
    pp = {
        "cls_token": params["cls_token"],
        "pos_emb": params["pos_emb"],
        "patch_w": pw, "patch_b": pb,
        "ln_f_g": params["ln_f_g"], "ln_f_b": params["ln_f_b"],
        "head_w": hw, "head_b": hb_,
        "blocks": [],
    }
    for blk in params["blocks"]:
        wqkv = jnp.concatenate([blk["wq"] * scale, blk["wk"], blk["wv"]], axis=1)
        bqkv = jnp.concatenate([blk["bq"] * scale, blk["bk"], blk["bv"]])
        wqkv_p, bqkv_p = _prep_linear(wqkv, bqkv)
        wo_p, bo_p = _prep_linear(blk["wo"], blk["bo"])
        w1_p, b1_p = _prep_linear(blk["w1"], blk["b1"])
        w2_p, b2_p = _prep_linear(blk["w2"], blk["b2"])
        pp["blocks"].append({
            "ln1_g": blk["ln1_g"], "ln1_b": blk["ln1_b"],
            "wqkv": wqkv_p, "bqkv": bqkv_p,
            "wo": wo_p, "bo": bo_p,
            "ln2_g": blk["ln2_g"], "ln2_b": blk["ln2_b"],
            "w1": w1_p, "b1": b1_p,
            "w2": w2_p, "b2": b2_p,
        })
    return pp


# ---------------------------------- forward pass ----------------------------------

def vit_forward(pp, x, *, patch_size, num_heads, d_ffn, num_classes):
    # x is NCHW float32, identical to the PyTorch module input.
    B, C, H, W = x.shape
    p = patch_size
    d = pp["cls_token"].shape[0]
    nH, nW = H // p, W // p
    P = nH * nW
    S = P + 1
    dh = d // num_heads
    s_pad = _round_up(S, 128)
    head_splits = 2 if num_heads % 2 == 0 else 1

    # Patch-embedding conv (kernel=stride=patch) as im2col + fused matmul.
    patches = (x.reshape(B, C, nH, p, nW, p)
                .transpose(0, 2, 4, 1, 3, 5)
                .reshape(B * P, C * p * p))
    tok = fused_matmul(patches, pp["patch_w"], pp["patch_b"], d).reshape(B, P, d)

    cls = jnp.broadcast_to(pp["cls_token"][None, None, :], (B, 1, d))
    xseq = (jnp.concatenate([cls, tok], axis=1)
            + pp["pos_emb"][None]).reshape(B * S, d)             # f32 residual stream

    for blk in pp["blocks"]:
        # --- fused LN1 + QKV projection (bf16 output; scale pre-folded in wq) ---
        qkv = fused_matmul(xseq, blk["wqkv"], blk["bqkv"], 3 * d,
                           ln=(blk["ln1_g"], blk["ln1_b"]),
                           out_dtype=jnp.bfloat16)

        def heads(t):   # (B*S, d) bf16 -> (B, H, s_pad, dh) bf16
            t = t.reshape(B, S, num_heads, dh).transpose(0, 2, 1, 3)
            return jnp.pad(t, ((0, 0), (0, 0), (0, s_pad - S), (0, 0)))

        q = heads(qkv[:, :d])
        k = heads(qkv[:, d:2 * d])
        v = heads(qkv[:, 2 * d:3 * d])

        o = mhsa(q, k, v, true_s=S, head_splits=head_splits)      # bf16
        o = o[:, :, :S, :].transpose(0, 2, 1, 3).reshape(B * S, d)

        # --- attention output projection with fused residual add (f32 out) ---
        xseq = fused_matmul(o, blk["wo"], blk["bo"], d, residual=xseq)

        # --- fused LN2 + FFN1 + GELU (bf16 out), FFN2 with fused residual ---
        f = fused_matmul(xseq, blk["w1"], blk["b1"], d_ffn,
                         ln=(blk["ln2_g"], blk["ln2_b"]),
                         activation="gelu", out_dtype=jnp.bfloat16)
        xseq = fused_matmul(f, blk["w2"], blk["b2"], d, residual=xseq)

    # Final LayerNorm fused into the classification head matmul.
    out = fused_matmul(xseq, pp["head_w"], pp["head_b"], num_classes,
                       ln=(pp["ln_f_g"], pp["ln_f_b"]))
    return out.reshape(B, S, num_classes)


# ------------------------------- pure-JAX reference -------------------------------
# Mirrors the kernels' mixed-precision policy (bf16 MXU inputs / bf16 stored
# activations, f32 accumulate, f32 LayerNorm/softmax) using the same prepped
# weights, so the self-test checks the Pallas implementation.

def vit_reference(pp, x, *, patch_size, num_heads, d_ffn, num_classes):
    B, C, H, W = x.shape
    p = patch_size
    d = pp["cls_token"].shape[0]
    nH, nW = H // p, W // p
    P = nH * nW
    S = P + 1
    dh = d // num_heads

    def mm(a, w_p, b_p, n):
        return (jnp.dot(a.astype(jnp.bfloat16), w_p[:, :n],
                        preferred_element_type=jnp.float32) + b_p[0, :n])

    def ln(t, g, b):
        mu = jnp.mean(t, -1, keepdims=True)
        var = jnp.mean(jnp.square(t - mu), -1, keepdims=True)
        return (t - mu) * jax.lax.rsqrt(var + 1e-5) * g + b

    patches = (x.reshape(B, C, nH, p, nW, p)
                .transpose(0, 2, 4, 1, 3, 5)
                .reshape(B * P, C * p * p))
    tok = mm(patches, pp["patch_w"], pp["patch_b"], d).reshape(B, P, d)
    cls = jnp.broadcast_to(pp["cls_token"][None, None, :], (B, 1, d))
    x2 = (jnp.concatenate([cls, tok], axis=1) + pp["pos_emb"][None]).reshape(B * S, d)

    for blk in pp["blocks"]:
        h1 = ln(x2, blk["ln1_g"], blk["ln1_b"])
        qkv = mm(h1, blk["wqkv"], blk["bqkv"], 3 * d).astype(jnp.bfloat16)

        def heads(t):
            return t.reshape(B, S, num_heads, dh).transpose(0, 2, 1, 3)

        q = heads(qkv[:, :d])
        k = heads(qkv[:, d:2 * d])
        v = heads(qkv[:, 2 * d:3 * d])
        s = jnp.einsum("bhqd,bhkd->bhqk", q, k, preferred_element_type=jnp.float32)
        attn = jax.nn.softmax(s, axis=-1)
        o = jnp.einsum("bhqk,bhkd->bhqd", attn.astype(jnp.bfloat16), v,
                       preferred_element_type=jnp.float32).astype(jnp.bfloat16)
        o = o.transpose(0, 2, 1, 3).reshape(B * S, d)
        x2 = x2 + mm(o, blk["wo"], blk["bo"], d)
        h2 = ln(x2, blk["ln2_g"], blk["ln2_b"])
        f = jax.nn.gelu(mm(h2, blk["w1"], blk["b1"], d_ffn)).astype(jnp.bfloat16)
        x2 = x2 + mm(f, blk["w2"], blk["b2"], d)

    enc = ln(x2, pp["ln_f_g"], pp["ln_f_b"])
    return mm(enc, pp["head_w"], pp["head_b"], num_classes).reshape(B, S, num_classes)


# --------------------------------------- main ---------------------------------------

if __name__ == "__main__":
    img_size, patch_size = 16, 4
    num_blocks, d_model, d_ffn, num_heads = 2, 32, 64, 4
    num_classes = 10
    batch = 2

    key = jax.random.PRNGKey(0)
    k_params, k_x = jax.random.split(key)
    params = init_params(k_params, img_size=img_size, patch_size=patch_size,
                         num_blocks=num_blocks, d_model=d_model, d_ffn=d_ffn,
                         num_heads=num_heads, num_classes=num_classes)
    pp = prep_params(params, num_heads)    # one-time weight concat/cast/pad
    x = jax.random.normal(k_x, (batch, 3, img_size, img_size), jnp.float32)

    fwd = jax.jit(functools.partial(vit_forward, patch_size=patch_size,
                                    num_heads=num_heads, d_ffn=d_ffn,
                                    num_classes=num_classes))
    out = jax.block_until_ready(fwd(pp, x))

    patch_len = (img_size // patch_size) ** 2 + 1
    assert out.shape == (batch, patch_len, num_classes), out.shape
    assert bool(jnp.all(jnp.isfinite(out)))

    ref = vit_reference(pp, x, patch_size=patch_size, num_heads=num_heads,
                        d_ffn=d_ffn, num_classes=num_classes)
    max_err = float(jnp.max(jnp.abs(out - ref)))
    assert jnp.allclose(out, ref, atol=5e-3, rtol=5e-3), max_err

    print("KERNEL_OK")
</pallas_src>

<mosaic_0001>
module attributes {stable_mosaic.version = 11 : i64} {
  func.func @_fused_mm_kernel(%arg0: i32, %arg1: i32, %arg2: i32, %arg3: memref<40x32xf32, #tpu.memory_space<vmem>>, %arg4: memref<32x128xbf16, #tpu.memory_space<vmem>>, %arg5: memref<1x128xf32, #tpu.memory_space<vmem>>, %arg6: memref<1x32xf32, #tpu.memory_space<vmem>>, %arg7: memref<1x32xf32, #tpu.memory_space<vmem>>, %arg8: memref<40x128xbf16, #tpu.memory_space<vmem>>, %arg9: memref<40x128xf32, #tpu.memory_space<vmem>>, %arg10: memref<40x32xbf16, #tpu.memory_space<vmem>>) attributes {dimension_semantics = [#tpu.dimension_semantics<parallel>, #tpu.dimension_semantics<arbitrary>, #tpu.dimension_semantics<arbitrary>], iteration_bounds = array<i64: 1, 1, 1>, scalar_prefetch = 0 : i64, scratch_operands = 2 : i64, tpu.core_type = #tpu.core_type<tc>, window_params = [{transform_indices = @transform_0, window_bounds = array<i64: 40, 32>}, {transform_indices = @transform_1, window_bounds = array<i64: 32, 128>}, {transform_indices = @transform_2, window_bounds = array<i64: 1, 128>}, {pipeline_mode = #tpu.pipeline_mode<synchronous>, transform_indices = @transform_3, window_bounds = array<i64: 1, 32>}, {pipeline_mode = #tpu.pipeline_mode<synchronous>, transform_indices = @transform_4, window_bounds = array<i64: 1, 32>}, {transform_indices = @transform_5, window_bounds = array<i64: 40, 128>}]} {
    %c0_i32 = arith.constant 0 : i32
    %0 = arith.cmpi eq, %arg2, %c0_i32 : i32
    %1 = arith.extui %0 : i1 to i32
    %c0_i32_0 = arith.constant 0 : i32
    %2 = arith.cmpi ne, %1, %c0_i32_0 : i32
    scf.if %2 {
      %cst_12 = arith.constant 0.000000e+00 : f32
      %15 = vector.broadcast %cst_12 : f32 to vector<40x128xf32>
      %c0_13 = arith.constant 0 : index
      %c0_14 = arith.constant 0 : index
      %16 = vector.load %arg9[%c0_13, %c0_14] : memref<40x128xf32, #tpu.memory_space<vmem>>, vector<40x128xf32>
      tpu.vector_store %arg9[%c0_13, %c0_14], %15 {strides = array<i32>} : memref<40x128xf32, #tpu.memory_space<vmem>>, vector<40x128xf32>,
    } else {
    }
    %c0_i32_1 = arith.constant 0 : i32
    %3 = arith.cmpi eq, %arg1, %c0_i32_1 : i32
    %4 = arith.extui %3 : i1 to i32
    %c0_i32_2 = arith.constant 0 : i32
    %5 = arith.cmpi ne, %4, %c0_i32_2 : i32
    scf.if %5 {
      %c0_12 = arith.constant 0 : index
      %c0_13 = arith.constant 0 : index
      %15 = vector.load %arg3[%c0_12, %c0_13] : memref<40x32xf32, #tpu.memory_space<vmem>>, vector<40x32xf32>
      %cst_14 = arith.constant dense<0.000000e+00> : vector<40xf32>
      %16 = vector.multi_reduction <add>, %15, %cst_14 [1] : vector<40x32xf32> to vector<40xf32>
      %17 = vector.shape_cast %16 : vector<40xf32> to vector<40x1xf32>
      %cst_15 = arith.constant 3.200000e+01 : f32
      %18 = vector.broadcast %cst_15 : f32 to vector<40x1xf32>
      %19 = arith.divf %17, %18 : vector<40x1xf32>
      %20 = vector.broadcast %19 : vector<40x1xf32> to vector<40x32xf32>
      %21 = arith.subf %15, %20 : vector<40x32xf32>
      %22 = arith.mulf %21, %21 : vector<40x32xf32>
      %cst_16 = arith.constant dense<0.000000e+00> : vector<40xf32>
      %23 = vector.multi_reduction <add>, %22, %cst_16 [1] : vector<40x32xf32> to vector<40xf32>
      %24 = vector.shape_cast %23 : vector<40xf32> to vector<40x1xf32>
      %cst_17 = arith.constant 3.200000e+01 : f32
      %25 = vector.broadcast %cst_17 : f32 to vector<40x1xf32>
      %26 = arith.divf %24, %25 : vector<40x1xf32>
      %27 = vector.broadcast %19 : vector<40x1xf32> to vector<40x32xf32>
      %28 = arith.subf %15, %27 : vector<40x32xf32>
      %cst_18 = arith.constant 9.99999974E-6 : f32
      %29 = vector.broadcast %cst_18 : f32 to vector<40x1xf32>
      %30 = arith.addf %26, %29 : vector<40x1xf32>
      %31 = math.rsqrt %30 : vector<40x1xf32>
      %32 = vector.broadcast %31 : vector<40x1xf32> to vector<40x32xf32>
      %33 = arith.mulf %28, %32 : vector<40x32xf32>
      %c0_19 = arith.constant 0 : index
      %c0_20 = arith.constant 0 : index
      %34 = vector.load %arg6[%c0_19, %c0_20] : memref<1x32xf32, #tpu.memory_space<vmem>>, vector<1x32xf32>
      %35 = vector.broadcast %34 : vector<1x32xf32> to vector<40x32xf32>
      %36 = arith.mulf %33, %35 : vector<40x32xf32>
      %c0_21 = arith.constant 0 : index
      %c0_22 = arith.constant 0 : index
      %37 = vector.load %arg7[%c0_21, %c0_22] : memref<1x32xf32, #tpu.memory_space<vmem>>, vector<1x32xf32>
      %38 = vector.broadcast %37 : vector<1x32xf32> to vector<40x32xf32>
      %39 = arith.addf %36, %38 : vector<40x32xf32>
      %40 = arith.truncf %39 : vector<40x32xf32> to vector<40x32xbf16>
      %c0_23 = arith.constant 0 : index
      %c0_24 = arith.constant 0 : index
      %41 = vector.load %arg10[%c0_23, %c0_24] : memref<40x32xbf16, #tpu.memory_space<vmem>>, vector<40x32xbf16>
      tpu.vector_store %arg10[%c0_23, %c0_24], %40 {strides = array<i32>} : memref<40x32xbf16, #tpu.memory_space<vmem>>, vector<40x32xbf16>,
    } else {
    }
    %c0 = arith.constant 0 : index
    %c0_3 = arith.constant 0 : index
    %6 = vector.load %arg10[%c0, %c0_3] : memref<40x32xbf16, #tpu.memory_space<vmem>>, vector<40x32xbf16>
    %c0_4 = arith.constant 0 : index
    %c0_5 = arith.constant 0 : index
    %7 = vector.load %arg9[%c0_4, %c0_5] : memref<40x128xf32, #tpu.memory_space<vmem>>, vector<40x128xf32>
    %c0_6 = arith.constant 0 : index
    %c0_7 = arith.constant 0 : index
    %8 = vector.load %arg4[%c0_6, %c0_7] : memref<32x128xbf16, #tpu.memory_space<vmem>>, vector<32x128xbf16>
    %cst = arith.constant dense<0.000000e+00> : vector<40x128xf32>
    %9 = tpu.matmul %6, %8, %cst {dimension_numbers = #tpu.dot_dimension_numbers<[1], [0], [0], [1], [0, 0, 1, 1], [], []>} : vector<40x32xbf16>, vector<32x128xbf16>, vector<40x128xf32> -> vector<40x128xf32>
    %10 = arith.addf %7, %9 : vector<40x128xf32>
    %c0_8 = arith.constant 0 : index
    %c0_9 = arith.constant 0 : index
    %11 = vector.load %arg9[%c0_8, %c0_9] : memref<40x128xf32, #tpu.memory_space<vmem>>, vector<40x128xf32>
    tpu.vector_store %arg9[%c0_8, %c0_9], %10 {strides = array<i32>} : memref<40x128xf32, #tpu.memory_space<vmem>>, vector<40x128xf32>,
    %c0_i32_10 = arith.constant 0 : i32
    %12 = arith.cmpi eq, %arg2, %c0_i32_10 : i32
    %13 = arith.extui %12 : i1 to i32
    %c0_i32_11 = arith.constant 0 : i32
    %14 = arith.cmpi ne, %13, %c0_i32_11 : i32
    scf.if %14 {
      %c0_12 = arith.constant 0 : index
      %c0_13 = arith.constant 0 : index
      %15 = vector.load %arg9[%c0_12, %c0_13] : memref<40x128xf32, #tpu.memory_space<vmem>>, vector<40x128xf32>
      %c0_14 = arith.constant 0 : index
      %c0_15 = arith.constant 0 : index
      %16 = vector.load %arg5[%c0_14, %c0_15] : memref<1x128xf32, #tpu.memory_space<vmem>>, vector<1x128xf32>
      %17 = vector.broadcast %16 : vector<1x128xf32> to vector<40x128xf32>
      %18 = arith.addf %15, %17 : vector<40x128xf32>
      %19 = arith.truncf %18 : vector<40x128xf32> to vector<40x128xbf16>
      %c0_16 = arith.constant 0 : index
      %c0_17 = arith.constant 0 : index
      %20 = vector.load %arg8[%c0_16, %c0_17] : memref<40x128xbf16, #tpu.memory_space<vmem>>, vector<40x128xbf16>
      tpu.vector_store %arg8[%c0_16, %c0_17], %19 {strides = array<i32>} : memref<40x128xbf16, #tpu.memory_space<vmem>>, vector<40x128xbf16>,
    } else {
    }
    return
  }
  func.func @transform_0(%arg0: i32, %arg1: i32, %arg2: i32) -> (i32, i32) {
    %c0_i32 = arith.constant 0 : i32
    return %arg0, %arg2 : i32, i32
  }
  func.func @transform_1(%arg0: i32, %arg1: i32, %arg2: i32) -> (i32, i32) {
    %c0_i32 = arith.constant 0 : i32
    return %arg2, %arg1 : i32, i32
  }
  func.func @transform_2(%arg0: i32, %arg1: i32, %arg2: i32) -> (i32, i32) {
    %c0_i32 = arith.constant 0 : i32
    %c0_i32_0 = arith.constant 0 : i32
    return %c0_i32, %arg1 : i32, i32
  }
  func.func @transform_3(%arg0: i32, %arg1: i32, %arg2: i32) -> (i32, i32) {
    %c0_i32 = arith.constant 0 : i32
    %c0_i32_0 = arith.constant 0 : i32
    %c0_i32_1 = arith.constant 0 : i32
    return %c0_i32, %c0_i32_0 : i32, i32
  }
  func.func @transform_4(%arg0: i32, %arg1: i32, %arg2: i32) -> (i32, i32) {
    %c0_i32 = arith.constant 0 : i32
    %c0_i32_0 = arith.constant 0 : i32
    %c0_i32_1 = arith.constant 0 : i32
    return %c0_i32, %c0_i32_0 : i32, i32
  }
  func.func @transform_5(%arg0: i32, %arg1: i32, %arg2: i32) -> (i32, i32) {
    %c0_i32 = arith.constant 0 : i32
    return %arg0, %arg1 : i32, i32
  }
}

module attributes {stable_mosaic.version = 11 : i64} {
  func.func @_fused_mm_kernel(%arg0: i32, %arg1: i32, %arg2: i32, %arg3: memref<32x48xf32, #tpu.memory_space<vmem>>, %arg4: memref<48x128xbf16, #tpu.memory_space<vmem>>, %arg5: memref<1x128xf32, #tpu.memory_space<vmem>>, %arg6: memref<32x128xf32, #tpu.memory_space<vmem>>, %arg7: memref<32x128xf32, #tpu.memory_space<vmem>>) attributes {dimension_semantics = [#tpu.dimension_semantics<parallel>, #tpu.dimension_semantics<parallel>, #tpu.dimension_semantics<arbitrary>], iteration_bounds = array<i64: 1, 1, 1>, scalar_prefetch = 0 : i64, scratch_operands = 1 : i64, tpu.core_type = #tpu.core_type<tc>, window_params = [{transform_indices = @transform_0, window_bounds = array<i64: 32, 48>}, {transform_indices = @transform_1, window_bounds = array<i64: 48, 128>}, {transform_indices = @transform_2, window_bounds = array<i64: 1, 128>}, {transform_indices = @transform_3, window_bounds = array<i64: 32, 128>}]} {
    %c0_i32 = arith.constant 0 : i32
    %0 = arith.cmpi eq, %arg2, %c0_i32 : i32
    %1 = arith.extui %0 : i1 to i32
    %c0_i32_0 = arith.constant 0 : i32
    %2 = arith.cmpi ne, %1, %c0_i32_0 : i32
    scf.if %2 {
      %cst_10 = arith.constant 0.000000e+00 : f32
      %13 = vector.broadcast %cst_10 : f32 to vector<32x128xf32>
      %c0_11 = arith.constant 0 : index
      %c0_12 = arith.constant 0 : index
      %14 = vector.load %arg7[%c0_11, %c0_12] : memref<32x128xf32, #tpu.memory_space<vmem>>, vector<32x128xf32>
      tpu.vector_store %arg7[%c0_11, %c0_12], %13 {strides = array<i32>} : memref<32x128xf32, #tpu.memory_space<vmem>>, vector<32x128xf32>,
    } else {
    }
    %c0 = arith.constant 0 : index
    %c0_1 = arith.constant 0 : index
    %3 = vector.load %arg3[%c0, %c0_1] : memref<32x48xf32, #tpu.memory_space<vmem>>, vector<32x48xf32>
    %4 = arith.truncf %3 : vector<32x48xf32> to vector<32x48xbf16>
    %c0_2 = arith.constant 0 : index
    %c0_3 = arith.constant 0 : index
    %5 = vector.load %arg7[%c0_2, %c0_3] : memref<32x128xf32, #tpu.memory_space<vmem>>, vector<32x128xf32>
    %c0_4 = arith.constant 0 : index
    %c0_5 = arith.constant 0 : index
    %6 = vector.load %arg4[%c0_4, %c0_5] : memref<48x128xbf16, #tpu.memory_space<vmem>>, vector<48x128xbf16>
    %cst = arith.constant dense<0.000000e+00> : vector<32x128xf32>
    %7 = tpu.matmul %4, %6, %cst {dimension_numbers = #tpu.dot_dimension_numbers<[1], [0], [0], [1], [0, 0, 1, 1], [], []>} : vector<32x48xbf16>, vector<48x128xbf16>, vector<32x128xf32> -> vector<32x128xf32>
    %8 = arith.addf %5, %7 : vector<32x128xf32>
    %c0_6 = arith.constant 0 : index
    %c0_7 = arith.constant 0 : index
    %9 = vector.load %arg7[%c0_6, %c0_7] : memref<32x128xf32, #tpu.memory_space<vmem>>, vector<32x128xf32>
    tpu.vector_store %arg7[%c0_6, %c0_7], %8 {strides = array<i32>} : memref<32x128xf32, #tpu.memory_space<vmem>>, vector<32x128xf32>,
    %c0_i32_8 = arith.constant 0 : i32
    %10 = arith.cmpi eq, %arg2, %c0_i32_8 : i32
    %11 = arith.extui %10 : i1 to i32
    %c0_i32_9 = arith.constant 0 : i32
    %12 = arith.cmpi ne, %11, %c0_i32_9 : i32
    scf.if %12 {
      %c0_10 = arith.constant 0 : index
      %c0_11 = arith.constant 0 : index
      %13 = vector.load %arg7[%c0_10, %c0_11] : memref<32x128xf32, #tpu.memory_space<vmem>>, vector<32x128xf32>
      %c0_12 = arith.constant 0 : index
      %c0_13 = arith.constant 0 : index
      %14 = vector.load %arg5[%c0_12, %c0_13] : memref<1x128xf32, #tpu.memory_space<vmem>>, vector<1x128xf32>
      %15 = vector.broadcast %14 : vector<1x128xf32> to vector<32x128xf32>
      %16 = arith.addf %13, %15 : vector<32x128xf32>
      %c0_14 = arith.constant 0 : index
      %c0_15 = arith.constant 0 : index
      %17 = vector.load %arg6[%c0_14, %c0_15] : memref<32x128xf32, #tpu.memory_space<vmem>>, vector<32x128xf32>
      tpu.vector_store %arg6[%c0_14, %c0_15], %16 {strides = array<i32>} : memref<32x128xf32, #tpu.memory_space<vmem>>, vector<32x128xf32>,
    } else {
    }
    return
  }
  func.func @transform_0(%arg0: i32, %arg1: i32, %arg2: i32) -> (i32, i32) {
    %c0_i32 = arith.constant 0 : i32
    return %arg0, %arg2 : i32, i32
  }
  func.func @transform_1(%arg0: i32, %arg1: i32, %arg2: i32) -> (i32, i32) {
    %c0_i32 = arith.constant 0 : i32
    return %arg2, %arg1 : i32, i32
  }
  func.func @transform_2(%arg0: i32, %arg1: i32, %arg2: i32) -> (i32, i32) {
    %c0_i32 = arith.constant 0 : i32
    %c0_i32_0 = arith.constant 0 : i32
    return %c0_i32, %arg1 : i32, i32
  }
  func.func @transform_3(%arg0: i32, %arg1: i32, %arg2: i32) -> (i32, i32) {
    %c0_i32 = arith.constant 0 : i32
    return %arg0, %arg1 : i32, i32
  }
}

module attributes {stable_mosaic.version = 11 : i64} {
  func.func @_attention_kernel(%arg0: i32, %arg1: i32, %arg2: memref<1x2x128x8xbf16, #tpu.memory_space<vmem>>, %arg3: memref<1x2x128x8xbf16, #tpu.memory_space<vmem>>, %arg4: memref<1x2x128x8xbf16, #tpu.memory_space<vmem>>, %arg5: memref<1x2x128x8xbf16, #tpu.memory_space<vmem>>) attributes {dimension_semantics = [#tpu.dimension_semantics<parallel>, #tpu.dimension_semantics<parallel>], iteration_bounds = array<i64: 2, 2>, scalar_prefetch = 0 : i64, scratch_operands = 0 : i64, tpu.core_type = #tpu.core_type<tc>, window_params = [{transform_indices = @transform_0, window_bounds = array<i64: 1, 2, 128, 8>}, {transform_indices = @transform_1, window_bounds = array<i64: 1, 2, 128, 8>}, {transform_indices = @transform_2, window_bounds = array<i64: 1, 2, 128, 8>}, {transform_indices = @transform_3, window_bounds = array<i64: 1, 2, 128, 8>}]} {
    %c0 = arith.constant 0 : index
    %c0_0 = arith.constant 0 : index
    %c0_1 = arith.constant 0 : index
    %c0_2 = arith.constant 0 : index
    %0 = vector.load %arg2[%c0, %c0_0, %c0_1, %c0_2] : memref<1x2x128x8xbf16, #tpu.memory_space<vmem>>, vector<1x2x128x8xbf16>
    %1 = vector.shape_cast %0 : vector<1x2x128x8xbf16> to vector<2x128x8xbf16>
    %c0_3 = arith.constant 0 : index
    %c0_4 = arith.constant 0 : index
    %c0_5 = arith.constant 0 : index
    %c0_6 = arith.constant 0 : index
    %2 = vector.load %arg3[%c0_3, %c0_4, %c0_5, %c0_6] : memref<1x2x128x8xbf16, #tpu.memory_space<vmem>>, vector<1x2x128x8xbf16>
    %3 = vector.shape_cast %2 : vector<1x2x128x8xbf16> to vector<2x128x8xbf16>
    "tpu.trace_start"() <{level = 10 : i32, message = "hqd,hkd->hqk"}> : () -> ()
    %cst = arith.constant dense<0.000000e+00> : vector<2x128x128xf32>
    %4 = tpu.matmul %1, %3, %cst {dimension_numbers = #tpu.dot_dimension_numbers<[2], [2], [1], [1], [0, 0, 0, 1, 1, 1], [0], [0]>} : vector<2x128x8xbf16>, vector<2x128x8xbf16>, vector<2x128x128xf32> -> vector<2x128x128xf32>
    "tpu.trace_stop"() : () -> ()
    %5 = tpu.iota {dimensions = array<i32: 2>} : vector<2x128x128xi32>
    %c17_i32 = arith.constant 17 : i32
    %6 = vector.broadcast %c17_i32 : i32 to vector<2x128x128xi32>
    %7 = arith.cmpi slt, %5, %6 : vector<2x128x128xi32>
    %cst_7 = arith.constant 0xFF800000 : f32
    %8 = vector.broadcast %cst_7 : f32 to vector<2x128x128xf32>
    %9 = arith.select %7, %4, %8 : vector<2x128x128xi1>, vector<2x128x128xf32>
    %cst_8 = arith.constant dense<0xFF800000> : vector<2x128xf32>
    %10 = vector.multi_reduction <maximumf>, %9, %cst_8 [2] : vector<2x128x128xf32> to vector<2x128xf32>
    %11 = vector.shape_cast %10 : vector<2x128xf32> to vector<2x128x1xf32>
    %12 = vector.broadcast %11 : vector<2x128x1xf32> to vector<2x128x128xf32>
    %13 = arith.subf %9, %12 : vector<2x128x128xf32>
    %14 = math.exp %13 : vector<2x128x128xf32>
    %cst_9 = arith.constant dense<0.000000e+00> : vector<2x128xf32>
    %15 = vector.multi_reduction <add>, %14, %cst_9 [2] : vector<2x128x128xf32> to vector<2x128xf32>
    %16 = vector.shape_cast %15 : vector<2x128xf32> to vector<2x128x1xf32>
    %17 = tpu.reciprocal %16 {approx = true} : vector<2x128x1xf32> -> vector<2x128x1xf32>
    %18 = vector.broadcast %17 : vector<2x128x1xf32> to vector<2x128x128xf32>
    %19 = arith.mulf %14, %18 : vector<2x128x128xf32>
    %20 = arith.truncf %19 : vector<2x128x128xf32> to vector<2x128x128xbf16>
    %c0_10 = arith.constant 0 : index
    %c0_11 = arith.constant 0 : index
    %c0_12 = arith.constant 0 : index
    %c0_13 = arith.constant 0 : index
    %21 = vector.load %arg4[%c0_10, %c0_11, %c0_12, %c0_13] : memref<1x2x128x8xbf16, #tpu.memory_space<vmem>>, vector<1x2x128x8xbf16>
    %22 = vector.shape_cast %21 : vector<1x2x128x8xbf16> to vector<2x128x8xbf16>
    "tpu.trace_start"() <{level = 10 : i32, message = "hqk,hkd->hqd"}> : () -> ()
    %cst_14 = arith.constant dense<0.000000e+00> : vector<2x128x8xf32>
    %23 = tpu.matmul %20, %22, %cst_14 {dimension_numbers = #tpu.dot_dimension_numbers<[2], [1], [1], [2], [0, 0, 0, 1, 1, 2], [0], [0]>} : vector<2x128x128xbf16>, vector<2x128x8xbf16>, vector<2x128x8xf32> -> vector<2x128x8xf32>
    "tpu.trace_stop"() : () -> ()
    %24 = arith.truncf %23 : vector<2x128x8xf32> to vector<2x128x8xbf16>
    %c0_15 = arith.constant 0 : index
    %c0_16 = arith.constant 0 : index
    %c0_17 = arith.constant 0 : index
    %c0_18 = arith.constant 0 : index
    %25 = vector.load %arg5[%c0_15, %c0_16, %c0_17, %c0_18] : memref<1x2x128x8xbf16, #tpu.memory_space<vmem>>, vector<1x2x128x8xbf16>
    %26 = vector.shape_cast %25 : vector<1x2x128x8xbf16> to vector<2x128x8xbf16>
    %27 = vector.shape_cast %24 : vector<2x128x8xbf16> to vector<1x2x128x8xbf16>
    tpu.vector_store %arg5[%c0_15, %c0_16, %c0_17, %c0_18], %27 {strides = array<i32>} : memref<1x2x128x8xbf16, #tpu.memory_space<vmem>>, vector<1x2x128x8xbf16>,
    return
  }
  func.func @transform_0(%arg0: i32, %arg1: i32) -> (i32, i32, i32, i32) {
    %c0_i32 = arith.constant 0 : i32
    %c0_i32_0 = arith.constant 0 : i32
    %c0_i32_1 = arith.constant 0 : i32
    return %arg0, %arg1, %c0_i32, %c0_i32_0 : i32, i32, i32, i32
  }
  func.func @transform_1(%arg0: i32, %arg1: i32) -> (i32, i32, i32, i32) {
    %c0_i32 = arith.constant 0 : i32
    %c0_i32_0 = arith.constant 0 : i32
    %c0_i32_1 = arith.constant 0 : i32
    return %arg0, %arg1, %c0_i32, %c0_i32_0 : i32, i32, i32, i32
  }
  func.func @transform_2(%arg0: i32, %arg1: i32) -> (i32, i32, i32, i32) {
    %c0_i32 = arith.constant 0 : i32
    %c0_i32_0 = arith.constant 0 : i32
    %c0_i32_1 = arith.constant 0 : i32
    return %arg0, %arg1, %c0_i32, %c0_i32_0 : i32, i32, i32, i32
  }
  func.func @transform_3(%arg0: i32, %arg1: i32) -> (i32, i32, i32, i32) {
    %c0_i32 = arith.constant 0 : i32
    %c0_i32_0 = arith.constant 0 : i32
    %c0_i32_1 = arith.constant 0 : i32
    return %arg0, %arg1, %c0_i32, %c0_i32_0 : i32, i32, i32, i32
  }
}

module attributes {stable_mosaic.version = 11 : i64} {
  func.func @_fused_mm_kernel(%arg0: i32, %arg1: i32, %arg2: i32, %arg3: memref<40x32xf32, #tpu.memory_space<vmem>>, %arg4: memref<32x128xbf16, #tpu.memory_space<vmem>>, %arg5: memref<1x128xf32, #tpu.memory_space<vmem>>, %arg6: memref<1x32xf32, #tpu.memory_space<vmem>>, %arg7: memref<1x32xf32, #tpu.memory_space<vmem>>, %arg8: memref<40x128xbf16, #tpu.memory_space<vmem>>, %arg9: memref<40x128xf32, #tpu.memory_space<vmem>>, %arg10: memref<40x32xbf16, #tpu.memory_space<vmem>>) attributes {dimension_semantics = [#tpu.dimension_semantics<parallel>, #tpu.dimension_semantics<arbitrary>, #tpu.dimension_semantics<arbitrary>], iteration_bounds = array<i64: 1, 1, 1>, scalar_prefetch = 0 : i64, scratch_operands = 2 : i64, tpu.core_type = #tpu.core_type<tc>, window_params = [{transform_indices = @transform_0, window_bounds = array<i64: 40, 32>}, {transform_indices = @transform_1, window_bounds = array<i64: 32, 128>}, {transform_indices = @transform_2, window_bounds = array<i64: 1, 128>}, {pipeline_mode = #tpu.pipeline_mode<synchronous>, transform_indices = @transform_3, window_bounds = array<i64: 1, 32>}, {pipeline_mode = #tpu.pipeline_mode<synchronous>, transform_indices = @transform_4, window_bounds = array<i64: 1, 32>}, {transform_indices = @transform_5, window_bounds = array<i64: 40, 128>}]} {
    %c0_i32 = arith.constant 0 : i32
    %0 = arith.cmpi eq, %arg2, %c0_i32 : i32
    %1 = arith.extui %0 : i1 to i32
    %c0_i32_0 = arith.constant 0 : i32
    %2 = arith.cmpi ne, %1, %c0_i32_0 : i32
    scf.if %2 {
      %cst_12 = arith.constant 0.000000e+00 : f32
      %15 = vector.broadcast %cst_12 : f32 to vector<40x128xf32>
      %c0_13 = arith.constant 0 : index
      %c0_14 = arith.constant 0 : index
      %16 = vector.load %arg9[%c0_13, %c0_14] : memref<40x128xf32, #tpu.memory_space<vmem>>, vector<40x128xf32>
      tpu.vector_store %arg9[%c0_13, %c0_14], %15 {strides = array<i32>} : memref<40x128xf32, #tpu.memory_space<vmem>>, vector<40x128xf32>,
    } else {
    }
    %c0_i32_1 = arith.constant 0 : i32
    %3 = arith.cmpi eq, %arg1, %c0_i32_1 : i32
    %4 = arith.extui %3 : i1 to i32
    %c0_i32_2 = arith.constant 0 : i32
    %5 = arith.cmpi ne, %4, %c0_i32_2 : i32
    scf.if %5 {
      %c0_12 = arith.constant 0 : index
      %c0_13 = arith.constant 0 : index
      %15 = vector.load %arg3[%c0_12, %c0_13] : memref<40x32xf32, #tpu.memory_space<vmem>>, vector<40x32xf32>
      %cst_14 = arith.constant dense<0.000000e+00> : vector<40xf32>
      %16 = vector.multi_reduction <add>, %15, %cst_14 [1] : vector<40x32xf32> to vector<40xf32>
      %17 = vector.shape_cast %16 : vector<40xf32> to vector<40x1xf32>
      %cst_15 = arith.constant 3.200000e+01 : f32
      %18 = vector.broadcast %cst_15 : f32 to vector<40x1xf32>
      %19 = arith.divf %17, %18 : vector<40x1xf32>
      %20 = vector.broadcast %19 : vector<40x1xf32> to vector<40x32xf32>
      %21 = arith.subf %15, %20 : vector<40x32xf32>
      %22 = arith.mulf %21, %21 : vector<40x32xf32>
      %cst_16 = arith.constant dense<0.000000e+00> : vector<40xf32>
      %23 = vector.multi_reduction <add>, %22, %cst_16 [1] : vector<40x32xf32> to vector<40xf32>
      %24 = vector.shape_cast %23 : vector<40xf32> to vector<40x1xf32>
      %cst_17 = arith.constant 3.200000e+01 : f32
      %25 = vector.broadcast %cst_17 : f32 to vector<40x1xf32>
      %26 = arith.divf %24, %25 : vector<40x1xf32>
      %27 = vector.broadcast %19 : vector<40x1xf32> to vector<40x32xf32>
      %28 = arith.subf %15, %27 : vector<40x32xf32>
      %cst_18 = arith.constant 9.99999974E-6 : f32
      %29 = vector.broadcast %cst_18 : f32 to vector<40x1xf32>
      %30 = arith.addf %26, %29 : vector<40x1xf32>
      %31 = math.rsqrt %30 : vector<40x1xf32>
      %32 = vector.broadcast %31 : vector<40x1xf32> to vector<40x32xf32>
      %33 = arith.mulf %28, %32 : vector<40x32xf32>
      %c0_19 = arith.constant 0 : index
      %c0_20 = arith.constant 0 : index
      %34 = vector.load %arg6[%c0_19, %c0_20] : memref<1x32xf32, #tpu.memory_space<vmem>>, vector<1x32xf32>
      %35 = vector.broadcast %34 : vector<1x32xf32> to vector<40x32xf32>
      %36 = arith.mulf %33, %35 : vector<40x32xf32>
      %c0_21 = arith.constant 0 : index
      %c0_22 = arith.constant 0 : index
      %37 = vector.load %arg7[%c0_21, %c0_22] : memref<1x32xf32, #tpu.memory_space<vmem>>, vector<1x32xf32>
      %38 = vector.broadcast %37 : vector<1x32xf32> to vector<40x32xf32>
      %39 = arith.addf %36, %38 : vector<40x32xf32>
      %40 = arith.truncf %39 : vector<40x32xf32> to vector<40x32xbf16>
      %c0_23 = arith.constant 0 : index
      %c0_24 = arith.constant 0 : index
      %41 = vector.load %arg10[%c0_23, %c0_24] : memref<40x32xbf16, #tpu.memory_space<vmem>>, vector<40x32xbf16>
      tpu.vector_store %arg10[%c0_23, %c0_24], %40 {strides = array<i32>} : memref<40x32xbf16, #tpu.memory_space<vmem>>, vector<40x32xbf16>,
    } else {
    }
    %c0 = arith.constant 0 : index
    %c0_3 = arith.constant 0 : index
    %6 = vector.load %arg10[%c0, %c0_3] : memref<40x32xbf16, #tpu.memory_space<vmem>>, vector<40x32xbf16>
    %c0_4 = arith.constant 0 : index
    %c0_5 = arith.constant 0 : index
    %7 = vector.load %arg9[%c0_4, %c0_5] : memref<40x128xf32, #tpu.memory_space<vmem>>, vector<40x128xf32>
    %c0_6 = arith.constant 0 : index
    %c0_7 = arith.constant 0 : index
    %8 = vector.load %arg4[%c0_6, %c0_7] : memref<32x128xbf16, #tpu.memory_space<vmem>>, vector<32x128xbf16>
    %cst = arith.constant dense<0.000000e+00> : vector<40x128xf32>
    %9 = tpu.matmul %6, %8, %cst {dimension_numbers = #tpu.dot_dimension_numbers<[1], [0], [0], [1], [0, 0, 1, 1], [], []>} : vector<40x32xbf16>, vector<32x128xbf16>, vector<40x128xf32> -> vector<40x128xf32>
    %10 = arith.addf %7, %9 : vector<40x128xf32>
    %c0_8 = arith.constant 0 : index
    %c0_9 = arith.constant 0 : index
    %11 = vector.load %arg9[%c0_8, %c0_9] : memref<40x128xf32, #tpu.memory_space<vmem>>, vector<40x128xf32>
    tpu.vector_store %arg9[%c0_8, %c0_9], %10 {strides = array<i32>} : memref<40x128xf32, #tpu.memory_space<vmem>>, vector<40x128xf32>,
    %c0_i32_10 = arith.constant 0 : i32
    %12 = arith.cmpi eq, %arg2, %c0_i32_10 : i32
    %13 = arith.extui %12 : i1 to i32
    %c0_i32_11 = arith.constant 0 : i32
    %14 = arith.cmpi ne, %13, %c0_i32_11 : i32
    scf.if %14 {
      %c0_12 = arith.constant 0 : index
      %c0_13 = arith.constant 0 : index
      %15 = vector.load %arg9[%c0_12, %c0_13] : memref<40x128xf32, #tpu.memory_space<vmem>>, vector<40x128xf32>
      %c0_14 = arith.constant 0 : index
      %c0_15 = arith.constant 0 : index
      %16 = vector.load %arg5[%c0_14, %c0_15] : memref<1x128xf32, #tpu.memory_space<vmem>>, vector<1x128xf32>
      %17 = vector.broadcast %16 : vector<1x128xf32> to vector<40x128xf32>
      %18 = arith.addf %15, %17 : vector<40x128xf32>
      %19 = arith.mulf %18, %18 : vector<40x128xf32>
      %20 = arith.mulf %18, %19 : vector<40x128xf32>
      %cst_16 = arith.constant 4.471500e-02 : f32
      %21 = vector.broadcast %cst_16 : f32 to vector<40x128xf32>
      %22 = arith.mulf %21, %20 : vector<40x128xf32>
      %23 = arith.addf %18, %22 : vector<40x128xf32>
      %cst_17 = arith.constant 0.797884583 : f32
      %24 = vector.broadcast %cst_17 : f32 to vector<40x128xf32>
      %25 = arith.mulf %24, %23 : vector<40x128xf32>
      %26 = math.tanh %25 : vector<40x128xf32>
      %cst_18 = arith.constant 1.000000e+00 : f32
      %27 = vector.broadcast %cst_18 : f32 to vector<40x128xf32>
      %28 = arith.addf %27, %26 : vector<40x128xf32>
      %cst_19 = arith.constant 5.000000e-01 : f32
      %29 = vector.broadcast %cst_19 : f32 to vector<40x128xf32>
      %30 = arith.mulf %29, %28 : vector<40x128xf32>
      %31 = arith.mulf %18, %30 : vector<40x128xf32>
      %32 = arith.truncf %31 : vector<40x128xf32> to vector<40x128xbf16>
      %c0_20 = arith.constant 0 : index
      %c0_21 = arith.constant 0 : index
      %33 = vector.load %arg8[%c0_20, %c0_21] : memref<40x128xbf16, #tpu.memory_space<vmem>>, vector<40x128xbf16>
      tpu.vector_store %arg8[%c0_20, %c0_21], %32 {strides = array<i32>} : memref<40x128xbf16, #tpu.memory_space<vmem>>, vector<40x128xbf16>,
    } else {
    }
    return
  }
  func.func @transform_0(%arg0: i32, %arg1: i32, %arg2: i32) -> (i32, i32) {
    %c0_i32 = arith.constant 0 : i32
    return %arg0, %arg2 : i32, i32
  }
  func.func @transform_1(%arg0: i32, %arg1: i32, %arg2: i32) -> (i32, i32) {
    %c0_i32 = arith.constant 0 : i32
    return %arg2, %arg1 : i32, i32
  }
  func.func @transform_2(%arg0: i32, %arg1: i32, %arg2: i32) -> (i32, i32) {
    %c0_i32 = arith.constant 0 : i32
    %c0_i32_0 = arith.constant 0 : i32
    return %c0_i32, %arg1 : i32, i32
  }
  func.func @transform_3(%arg0: i32, %arg1: i32, %arg2: i32) -> (i32, i32) {
    %c0_i32 = arith.constant 0 : i32
    %c0_i32_0 = arith.constant 0 : i32
    %c0_i32_1 = arith.constant 0 : i32
    return %c0_i32, %c0_i32_0 : i32, i32
  }
  func.func @transform_4(%arg0: i32, %arg1: i32, %arg2: i32) -> (i32, i32) {
    %c0_i32 = arith.constant 0 : i32
    %c0_i32_0 = arith.constant 0 : i32
    %c0_i32_1 = arith.constant 0 : i32
    return %c0_i32, %c0_i32_0 : i32, i32
  }
  func.func @transform_5(%arg0: i32, %arg1: i32, %arg2: i32) -> (i32, i32) {
    %c0_i32 = arith.constant 0 : i32
    return %arg0, %arg1 : i32, i32
  }
}

module attributes {stable_mosaic.version = 11 : i64} {
  func.func @_fused_mm_kernel(%arg0: i32, %arg1: i32, %arg2: i32, %arg3: memref<40x32xbf16, #tpu.memory_space<vmem>>, %arg4: memref<32x128xbf16, #tpu.memory_space<vmem>>, %arg5: memref<1x128xf32, #tpu.memory_space<vmem>>, %arg6: memref<40x128xf32, #tpu.memory_space<vmem>>, %arg7: memref<40x128xf32, #tpu.memory_space<vmem>>, %arg8: memref<40x128xf32, #tpu.memory_space<vmem>>) attributes {dimension_semantics = [#tpu.dimension_semantics<parallel>, #tpu.dimension_semantics<parallel>, #tpu.dimension_semantics<arbitrary>], iteration_bounds = array<i64: 1, 1, 1>, scalar_prefetch = 0 : i64, scratch_operands = 1 : i64, tpu.core_type = #tpu.core_type<tc>, window_params = [{transform_indices = @transform_0, window_bounds = array<i64: 40, 32>}, {transform_indices = @transform_1, window_bounds = array<i64: 32, 128>}, {transform_indices = @transform_2, window_bounds = array<i64: 1, 128>}, {transform_indices = @transform_3, window_bounds = array<i64: 40, 128>}, {transform_indices = @transform_4, window_bounds = array<i64: 40, 128>}]} {
    %c0_i32 = arith.constant 0 : i32
    %0 = arith.cmpi eq, %arg2, %c0_i32 : i32
    %1 = arith.extui %0 : i1 to i32
    %c0_i32_0 = arith.constant 0 : i32
    %2 = arith.cmpi ne, %1, %c0_i32_0 : i32
    scf.if %2 {
      %cst_10 = arith.constant 0.000000e+00 : f32
      %12 = vector.broadcast %cst_10 : f32 to vector<40x128xf32>
      %c0_11 = arith.constant 0 : index
      %c0_12 = arith.constant 0 : index
      %13 = vector.load %arg8[%c0_11, %c0_12] : memref<40x128xf32, #tpu.memory_space<vmem>>, vector<40x128xf32>
      tpu.vector_store %arg8[%c0_11, %c0_12], %12 {strides = array<i32>} : memref<40x128xf32, #tpu.memory_space<vmem>>, vector<40x128xf32>,
    } else {
    }
    %c0 = arith.constant 0 : index
    %c0_1 = arith.constant 0 : index
    %3 = vector.load %arg3[%c0, %c0_1] : memref<40x32xbf16, #tpu.memory_space<vmem>>, vector<40x32xbf16>
    %c0_2 = arith.constant 0 : index
    %c0_3 = arith.constant 0 : index
    %4 = vector.load %arg8[%c0_2, %c0_3] : memref<40x128xf32, #tpu.memory_space<vmem>>, vector<40x128xf32>
    %c0_4 = arith.constant 0 : index
    %c0_5 = arith.constant 0 : index
    %5 = vector.load %arg4[%c0_4, %c0_5] : memref<32x128xbf16, #tpu.memory_space<vmem>>, vector<32x128xbf16>
    %cst = arith.constant dense<0.000000e+00> : vector<40x128xf32>
    %6 = tpu.matmul %3, %5, %cst {dimension_numbers = #tpu.dot_dimension_numbers<[1], [0], [0], [1], [0, 0, 1, 1], [], []>} : vector<40x32xbf16>, vector<32x128xbf16>, vector<40x128xf32> -> vector<40x128xf32>
    %7 = arith.addf %4, %6 : vector<40x128xf32>
    %c0_6 = arith.constant 0 : index
    %c0_7 = arith.constant 0 : index
    %8 = vector.load %arg8[%c0_6, %c0_7] : memref<40x128xf32, #tpu.memory_space<vmem>>, vector<40x128xf32>
    tpu.vector_store %arg8[%c0_6, %c0_7], %7 {strides = array<i32>} : memref<40x128xf32, #tpu.memory_space<vmem>>, vector<40x128xf32>,
    %c0_i32_8 = arith.constant 0 : i32
    %9 = arith.cmpi eq, %arg2, %c0_i32_8 : i32
    %10 = arith.extui %9 : i1 to i32
    %c0_i32_9 = arith.constant 0 : i32
    %11 = arith.cmpi ne, %10, %c0_i32_9 : i32
    scf.if %11 {
      %c0_10 = arith.constant 0 : index
      %c0_11 = arith.constant 0 : index
      %12 = vector.load %arg8[%c0_10, %c0_11] : memref<40x128xf32, #tpu.memory_space<vmem>>, vector<40x128xf32>
      %c0_12 = arith.constant 0 : index
      %c0_13 = arith.constant 0 : index
      %13 = vector.load %arg5[%c0_12, %c0_13] : memref<1x128xf32, #tpu.memory_space<vmem>>, vector<1x128xf32>
      %14 = vector.broadcast %13 : vector<1x128xf32> to vector<40x128xf32>
      %15 = arith.addf %12, %14 : vector<40x128xf32>
      %c0_14 = arith.constant 0 : index
      %c0_15 = arith.constant 0 : index
      %16 = vector.load %arg6[%c0_14, %c0_15] : memref<40x128xf32, #tpu.memory_space<vmem>>, vector<40x128xf32>
      %17 = arith.addf %15, %16 : vector<40x128xf32>
      %c0_16 = arith.constant 0 : index
      %c0_17 = arith.constant 0 : index
      %18 = vector.load %arg7[%c0_16, %c0_17] : memref<40x128xf32, #tpu.memory_space<vmem>>, vector<40x128xf32>
      tpu.vector_store %arg7[%c0_16, %c0_17], %17 {strides = array<i32>} : memref<40x128xf32, #tpu.memory_space<vmem>>, vector<40x128xf32>,
    } else {
    }
    return
  }
  func.func @transform_0(%arg0: i32, %arg1: i32, %arg2: i32) -> (i32, i32) {
    %c0_i32 = arith.constant 0 : i32
    return %arg0, %arg2 : i32, i32
  }
  func.func @transform_1(%arg0: i32, %arg1: i32, %arg2: i32) -> (i32, i32) {
    %c0_i32 = arith.constant 0 : i32
    return %arg2, %arg1 : i32, i32
  }
  func.func @transform_2(%arg0: i32, %arg1: i32, %arg2: i32) -> (i32, i32) {
    %c0_i32 = arith.constant 0 : i32
    %c0_i32_0 = arith.constant 0 : i32
    return %c0_i32, %arg1 : i32, i32
  }
  func.func @transform_3(%arg0: i32, %arg1: i32, %arg2: i32) -> (i32, i32) {
    %c0_i32 = arith.constant 0 : i32
    return %arg0, %arg1 : i32, i32
  }
  func.func @transform_4(%arg0: i32, %arg1: i32, %arg2: i32) -> (i32, i32) {
    %c0_i32 = arith.constant 0 : i32
    return %arg0, %arg1 : i32, i32
  }
}

module attributes {stable_mosaic.version = 11 : i64} {
  func.func @_fused_mm_kernel(%arg0: i32, %arg1: i32, %arg2: i32, %arg3: memref<40x64xbf16, #tpu.memory_space<vmem>>, %arg4: memref<64x128xbf16, #tpu.memory_space<vmem>>, %arg5: memref<1x128xf32, #tpu.memory_space<vmem>>, %arg6: memref<40x128xf32, #tpu.memory_space<vmem>>, %arg7: memref<40x128xf32, #tpu.memory_space<vmem>>, %arg8: memref<40x128xf32, #tpu.memory_space<vmem>>) attributes {dimension_semantics = [#tpu.dimension_semantics<parallel>, #tpu.dimension_semantics<parallel>, #tpu.dimension_semantics<arbitrary>], iteration_bounds = array<i64: 1, 1, 1>, scalar_prefetch = 0 : i64, scratch_operands = 1 : i64, tpu.core_type = #tpu.core_type<tc>, window_params = [{transform_indices = @transform_0, window_bounds = array<i64: 40, 64>}, {transform_indices = @transform_1, window_bounds = array<i64: 64, 128>}, {transform_indices = @transform_2, window_bounds = array<i64: 1, 128>}, {transform_indices = @transform_3, window_bounds = array<i64: 40, 128>}, {transform_indices = @transform_4, window_bounds = array<i64: 40, 128>}]} {
    %c0_i32 = arith.constant 0 : i32
    %0 = arith.cmpi eq, %arg2, %c0_i32 : i32
    %1 = arith.extui %0 : i1 to i32
    %c0_i32_0 = arith.constant 0 : i32
    %2 = arith.cmpi ne, %1, %c0_i32_0 : i32
    scf.if %2 {
      %cst_10 = arith.constant 0.000000e+00 : f32
      %12 = vector.broadcast %cst_10 : f32 to vector<40x128xf32>
      %c0_11 = arith.constant 0 : index
      %c0_12 = arith.constant 0 : index
      %13 = vector.load %arg8[%c0_11, %c0_12] : memref<40x128xf32, #tpu.memory_space<vmem>>, vector<40x128xf32>
      tpu.vector_store %arg8[%c0_11, %c0_12], %12 {strides = array<i32>} : memref<40x128xf32, #tpu.memory_space<vmem>>, vector<40x128xf32>,
    } else {
    }
    %c0 = arith.constant 0 : index
    %c0_1 = arith.constant 0 : index
    %3 = vector.load %arg3[%c0, %c0_1] : memref<40x64xbf16, #tpu.memory_space<vmem>>, vector<40x64xbf16>
    %c0_2 = arith.constant 0 : index
    %c0_3 = arith.constant 0 : index
    %4 = vector.load %arg8[%c0_2, %c0_3] : memref<40x128xf32, #tpu.memory_space<vmem>>, vector<40x128xf32>
    %c0_4 = arith.constant 0 : index
    %c0_5 = arith.constant 0 : index
    %5 = vector.load %arg4[%c0_4, %c0_5] : memref<64x128xbf16, #tpu.memory_space<vmem>>, vector<64x128xbf16>
    %cst = arith.constant dense<0.000000e+00> : vector<40x128xf32>
    %6 = tpu.matmul %3, %5, %cst {dimension_numbers = #tpu.dot_dimension_numbers<[1], [0], [0], [1], [0, 0, 1, 1], [], []>} : vector<40x64xbf16>, vector<64x128xbf16>, vector<40x128xf32> -> vector<40x128xf32>
    %7 = arith.addf %4, %6 : vector<40x128xf32>
    %c0_6 = arith.constant 0 : index
    %c0_7 = arith.constant 0 : index
    %8 = vector.load %arg8[%c0_6, %c0_7] : memref<40x128xf32, #tpu.memory_space<vmem>>, vector<40x128xf32>
    tpu.vector_store %arg8[%c0_6, %c0_7], %7 {strides = array<i32>} : memref<40x128xf32, #tpu.memory_space<vmem>>, vector<40x128xf32>,
    %c0_i32_8 = arith.constant 0 : i32
    %9 = arith.cmpi eq, %arg2, %c0_i32_8 : i32
    %10 = arith.extui %9 : i1 to i32
    %c0_i32_9 = arith.constant 0 : i32
    %11 = arith.cmpi ne, %10, %c0_i32_9 : i32
    scf.if %11 {
      %c0_10 = arith.constant 0 : index
      %c0_11 = arith.constant 0 : index
      %12 = vector.load %arg8[%c0_10, %c0_11] : memref<40x128xf32, #tpu.memory_space<vmem>>, vector<40x128xf32>
      %c0_12 = arith.constant 0 : index
      %c0_13 = arith.constant 0 : index
      %13 = vector.load %arg5[%c0_12, %c0_13] : memref<1x128xf32, #tpu.memory_space<vmem>>, vector<1x128xf32>
      %14 = vector.broadcast %13 : vector<1x128xf32> to vector<40x128xf32>
      %15 = arith.addf %12, %14 : vector<40x128xf32>
      %c0_14 = arith.constant 0 : index
      %c0_15 = arith.constant 0 : index
      %16 = vector.load %arg6[%c0_14, %c0_15] : memref<40x128xf32, #tpu.memory_space<vmem>>, vector<40x128xf32>
      %17 = arith.addf %15, %16 : vector<40x128xf32>
      %c0_16 = arith.constant 0 : index
      %c0_17 = arith.constant 0 : index
      %18 = vector.load %arg7[%c0_16, %c0_17] : memref<40x128xf32, #tpu.memory_space<vmem>>, vector<40x128xf32>
      tpu.vector_store %arg7[%c0_16, %c0_17], %17 {strides = array<i32>} : memref<40x128xf32, #tpu.memory_space<vmem>>, vector<40x128xf32>,
    } else {
    }
    return
  }
  func.func @transform_0(%arg0: i32, %arg1: i32, %arg2: i32) -> (i32, i32) {
    %c0_i32 = arith.constant 0 : i32
    return %arg0, %arg2 : i32, i32
  }
  func.func @transform_1(%arg0: i32, %arg1: i32, %arg2: i32) -> (i32, i32) {
    %c0_i32 = arith.constant 0 : i32
    return %arg2, %arg1 : i32, i32
  }
  func.func @transform_2(%arg0: i32, %arg1: i32, %arg2: i32) -> (i32, i32) {
    %c0_i32 = arith.constant 0 : i32
    %c0_i32_0 = arith.constant 0 : i32
    return %c0_i32, %arg1 : i32, i32
  }
  func.func @transform_3(%arg0: i32, %arg1: i32, %arg2: i32) -> (i32, i32) {
    %c0_i32 = arith.constant 0 : i32
    return %arg0, %arg1 : i32, i32
  }
  func.func @transform_4(%arg0: i32, %arg1: i32, %arg2: i32) -> (i32, i32) {
    %c0_i32 = arith.constant 0 : i32
    return %arg0, %arg1 : i32, i32
  }
}

module attributes {stable_mosaic.version = 11 : i64} {
  func.func @_fused_mm_kernel(%arg0: i32, %arg1: i32, %arg2: i32, %arg3: memref<40x32xf32, #tpu.memory_space<vmem>>, %arg4: memref<32x128xbf16, #tpu.memory_space<vmem>>, %arg5: memref<1x128xf32, #tpu.memory_space<vmem>>, %arg6: memref<1x32xf32, #tpu.memory_space<vmem>>, %arg7: memref<1x32xf32, #tpu.memory_space<vmem>>, %arg8: memref<40x128xf32, #tpu.memory_space<vmem>>, %arg9: memref<40x128xf32, #tpu.memory_space<vmem>>, %arg10: memref<40x32xbf16, #tpu.memory_space<vmem>>) attributes {dimension_semantics = [#tpu.dimension_semantics<parallel>, #tpu.dimension_semantics<arbitrary>, #tpu.dimension_semantics<arbitrary>], iteration_bounds = array<i64: 1, 1, 1>, scalar_prefetch = 0 : i64, scratch_operands = 2 : i64, tpu.core_type = #tpu.core_type<tc>, window_params = [{transform_indices = @transform_0, window_bounds = array<i64: 40, 32>}, {transform_indices = @transform_1, window_bounds = array<i64: 32, 128>}, {transform_indices = @transform_2, window_bounds = array<i64: 1, 128>}, {pipeline_mode = #tpu.pipeline_mode<synchronous>, transform_indices = @transform_3, window_bounds = array<i64: 1, 32>}, {pipeline_mode = #tpu.pipeline_mode<synchronous>, transform_indices = @transform_4, window_bounds = array<i64: 1, 32>}, {transform_indices = @transform_5, window_bounds = array<i64: 40, 128>}]} {
    %c0_i32 = arith.constant 0 : i32
    %0 = arith.cmpi eq, %arg2, %c0_i32 : i32
    %1 = arith.extui %0 : i1 to i32
    %c0_i32_0 = arith.constant 0 : i32
    %2 = arith.cmpi ne, %1, %c0_i32_0 : i32
    scf.if %2 {
      %cst_12 = arith.constant 0.000000e+00 : f32
      %15 = vector.broadcast %cst_12 : f32 to vector<40x128xf32>
      %c0_13 = arith.constant 0 : index
      %c0_14 = arith.constant 0 : index
      %16 = vector.load %arg9[%c0_13, %c0_14] : memref<40x128xf32, #tpu.memory_space<vmem>>, vector<40x128xf32>
      tpu.vector_store %arg9[%c0_13, %c0_14], %15 {strides = array<i32>} : memref<40x128xf32, #tpu.memory_space<vmem>>, vector<40x128xf32>,
    } else {
    }
    %c0_i32_1 = arith.constant 0 : i32
    %3 = arith.cmpi eq, %arg1, %c0_i32_1 : i32
    %4 = arith.extui %3 : i1 to i32
    %c0_i32_2 = arith.constant 0 : i32
    %5 = arith.cmpi ne, %4, %c0_i32_2 : i32
    scf.if %5 {
      %c0_12 = arith.constant 0 : index
      %c0_13 = arith.constant 0 : index
      %15 = vector.load %arg3[%c0_12, %c0_13] : memref<40x32xf32, #tpu.memory_space<vmem>>, vector<40x32xf32>
      %cst_14 = arith.constant dense<0.000000e+00> : vector<40xf32>
      %16 = vector.multi_reduction <add>, %15, %cst_14 [1] : vector<40x32xf32> to vector<40xf32>
      %17 = vector.shape_cast %16 : vector<40xf32> to vector<40x1xf32>
      %cst_15 = arith.constant 3.200000e+01 : f32
      %18 = vector.broadcast %cst_15 : f32 to vector<40x1xf32>
      %19 = arith.divf %17, %18 : vector<40x1xf32>
      %20 = vector.broadcast %19 : vector<40x1xf32> to vector<40x32xf32>
      %21 = arith.subf %15, %20 : vector<40x32xf32>
      %22 = arith.mulf %21, %21 : vector<40x32xf32>
      %cst_16 = arith.constant dense<0.000000e+00> : vector<40xf32>
      %23 = vector.multi_reduction <add>, %22, %cst_16 [1] : vector<40x32xf32> to vector<40xf32>
      %24 = vector.shape_cast %23 : vector<40xf32> to vector<40x1xf32>
      %cst_17 = arith.constant 3.200000e+01 : f32
      %25 = vector.broadcast %cst_17 : f32 to vector<40x1xf32>
      %26 = arith.divf %24, %25 : vector<40x1xf32>
      %27 = vector.broadcast %19 : vector<40x1xf32> to vector<40x32xf32>
      %28 = arith.subf %15, %27 : vector<40x32xf32>
      %cst_18 = arith.constant 9.99999974E-6 : f32
      %29 = vector.broadcast %cst_18 : f32 to vector<40x1xf32>
      %30 = arith.addf %26, %29 : vector<40x1xf32>
      %31 = math.rsqrt %30 : vector<40x1xf32>
      %32 = vector.broadcast %31 : vector<40x1xf32> to vector<40x32xf32>
      %33 = arith.mulf %28, %32 : vector<40x32xf32>
      %c0_19 = arith.constant 0 : index
      %c0_20 = arith.constant 0 : index
      %34 = vector.load %arg6[%c0_19, %c0_20] : memref<1x32xf32, #tpu.memory_space<vmem>>, vector<1x32xf32>
      %35 = vector.broadcast %34 : vector<1x32xf32> to vector<40x32xf32>
      %36 = arith.mulf %33, %35 : vector<40x32xf32>
      %c0_21 = arith.constant 0 : index
      %c0_22 = arith.constant 0 : index
      %37 = vector.load %arg7[%c0_21, %c0_22] : memref<1x32xf32, #tpu.memory_space<vmem>>, vector<1x32xf32>
      %38 = vector.broadcast %37 : vector<1x32xf32> to vector<40x32xf32>
      %39 = arith.addf %36, %38 : vector<40x32xf32>
      %40 = arith.truncf %39 : vector<40x32xf32> to vector<40x32xbf16>
      %c0_23 = arith.constant 0 : index
      %c0_24 = arith.constant 0 : index
      %41 = vector.load %arg10[%c0_23, %c0_24] : memref<40x32xbf16, #tpu.memory_space<vmem>>, vector<40x32xbf16>
      tpu.vector_store %arg10[%c0_23, %c0_24], %40 {strides = array<i32>} : memref<40x32xbf16, #tpu.memory_space<vmem>>, vector<40x32xbf16>,
    } else {
    }
    %c0 = arith.constant 0 : index
    %c0_3 = arith.constant 0 : index
    %6 = vector.load %arg10[%c0, %c0_3] : memref<40x32xbf16, #tpu.memory_space<vmem>>, vector<40x32xbf16>
    %c0_4 = arith.constant 0 : index
    %c0_5 = arith.constant 0 : index
    %7 = vector.load %arg9[%c0_4, %c0_5] : memref<40x128xf32, #tpu.memory_space<vmem>>, vector<40x128xf32>
    %c0_6 = arith.constant 0 : index
    %c0_7 = arith.constant 0 : index
    %8 = vector.load %arg4[%c0_6, %c0_7] : memref<32x128xbf16, #tpu.memory_space<vmem>>, vector<32x128xbf16>
    %cst = arith.constant dense<0.000000e+00> : vector<40x128xf32>
    %9 = tpu.matmul %6, %8, %cst {dimension_numbers = #tpu.dot_dimension_numbers<[1], [0], [0], [1], [0, 0, 1, 1], [], []>} : vector<40x32xbf16>, vector<32x128xbf16>, vector<40x128xf32> -> vector<40x128xf32>
    %10 = arith.addf %7, %9 : vector<40x128xf32>
    %c0_8 = arith.constant 0 : index
    %c0_9 = arith.constant 0 : index
    %11 = vector.load %arg9[%c0_8, %c0_9] : memref<40x128xf32, #tpu.memory_space<vmem>>, vector<40x128xf32>
    tpu.vector_store %arg9[%c0_8, %c0_9], %10 {strides = array<i32>} : memref<40x128xf32, #tpu.memory_space<vmem>>, vector<40x128xf32>,
    %c0_i32_10 = arith.constant 0 : i32
    %12 = arith.cmpi eq, %arg2, %c0_i32_10 : i32
    %13 = arith.extui %12 : i1 to i32
    %c0_i32_11 = arith.constant 0 : i32
    %14 = arith.cmpi ne, %13, %c0_i32_11 : i32
    scf.if %14 {
      %c0_12 = arith.constant 0 : index
      %c0_13 = arith.constant 0 : index
      %15 = vector.load %arg9[%c0_12, %c0_13] : memref<40x128xf32, #tpu.memory_space<vmem>>, vector<40x128xf32>
      %c0_14 = arith.constant 0 : index
      %c0_15 = arith.constant 0 : index
      %16 = vector.load %arg5[%c0_14, %c0_15] : memref<1x128xf32, #tpu.memory_space<vmem>>, vector<1x128xf32>
      %17 = vector.broadcast %16 : vector<1x128xf32> to vector<40x128xf32>
      %18 = arith.addf %15, %17 : vector<40x128xf32>
      %c0_16 = arith.constant 0 : index
      %c0_17 = arith.constant 0 : index
      %19 = vector.load %arg8[%c0_16, %c0_17] : memref<40x128xf32, #tpu.memory_space<vmem>>, vector<40x128xf32>
      tpu.vector_store %arg8[%c0_16, %c0_17], %18 {strides = array<i32>} : memref<40x128xf32, #tpu.memory_space<vmem>>, vector<40x128xf32>,
    } else {
    }
    return
  }
  func.func @transform_0(%arg0: i32, %arg1: i32, %arg2: i32) -> (i32, i32) {
    %c0_i32 = arith.constant 0 : i32
    return %arg0, %arg2 : i32, i32
  }
  func.func @transform_1(%arg0: i32, %arg1: i32, %arg2: i32) -> (i32, i32) {
    %c0_i32 = arith.constant 0 : i32
    return %arg2, %arg1 : i32, i32
  }
  func.func @transform_2(%arg0: i32, %arg1: i32, %arg2: i32) -> (i32, i32) {
    %c0_i32 = arith.constant 0 : i32
    %c0_i32_0 = arith.constant 0 : i32
    return %c0_i32, %arg1 : i32, i32
  }
  func.func @transform_3(%arg0: i32, %arg1: i32, %arg2: i32) -> (i32, i32) {
    %c0_i32 = arith.constant 0 : i32
    %c0_i32_0 = arith.constant 0 : i32
    %c0_i32_1 = arith.constant 0 : i32
    return %c0_i32, %c0_i32_0 : i32, i32
  }
  func.func @transform_4(%arg0: i32, %arg1: i32, %arg2: i32) -> (i32, i32) {
    %c0_i32 = arith.constant 0 : i32
    %c0_i32_0 = arith.constant 0 : i32
    %c0_i32_1 = arith.constant 0 : i32
    return %c0_i32, %c0_i32_0 : i32, i32
  }
  func.func @transform_5(%arg0: i32, %arg1: i32, %arg2: i32) -> (i32, i32) {
    %c0_i32 = arith.constant 0 : i32
    return %arg0, %arg1 : i32, i32
  }
}

</mosaic_0001>

<llo_original>
// kernel: vit_forward.12
$region0: #{vit_forward.12}
  #allocation0 [shape = 'u32[]', space=smem, size = 0x4, offset = 0x4, fixed_abs, tag = 'smem constant byte address 0x4 - core index']
  #allocation1 [shape = 'u32[72,128]{1,0:T(1,128)}', space=vmem, size = 0x9000, scoped, tag = 'internal scratch']
  #allocation2 [shape = 'f32[32,128]{1,0:T(8,128)}', space=vmem, size = 0x4000, scoped, tag = 'scratch operand']
  %s0 = inlined_call_operand.vmem [shape: f32[32,48], index: 0, kind: input, shape index: {}]
  %s1 = inlined_call_operand.vmem [shape: bf16[48,128], index: 1, kind: input, shape index: {}]
  %s2 = inlined_call_operand.vmem [shape: f32[1,128], index: 2, kind: input, shape index: {}]
  %s3 = inlined_call_operand.vmem [shape: f32[32,128], index: 3, kind: output, shape index: {}]
  %s4 = sld [smem:[#allocation0]]
  $region30: #{vit_forward.12} parent=0
    _
  %s6 = ssub.s32 1, %s4
  %s7 = scalar_select 0, %s6, %s4
  // Predicated region
  $region2: #{vit_forward.12} parent=0 // pred_check
    _
  $region3: #{vit_forward.12} parent=0 // pred_check_branch
    %9 = sbr.rel (0) target = $region5
  $region4: #{vit_forward.12} parent=0 // pred_region
    _
  $region5: #{vit_forward.12} parent=0 // pred_fallthru
    _
  // Predicated region
  $region6: #{vit_forward.12} parent=0 // pred_check
    _
  $region7: #{vit_forward.12} parent=0 // pred_check_branch
    %11 = sbr.rel (0) target = $region9
  $region8: #{vit_forward.12} parent=0 // pred_region
    _
  $region9: #{vit_forward.12} parent=0 // pred_fallthru
    _
  // Predicated region
  $region10: #{vit_forward.12} parent=0 // pred_check
    _
  $region11: #{vit_forward.12} parent=0 // pred_check_branch
    %13 = sbr.rel (0) target = $region13
  $region12: #{vit_forward.12} parent=0 // pred_region
    _
  $region13: #{vit_forward.12} parent=0 // pred_fallthru
    _
  %p15 = scmp.eq.s32.totalorder 0, 0
  // Predicated region
  $region14: #{vit_forward.12} parent=0 // pred_check
    %p16 = pneg %p15
  $region15: #{vit_forward.12} parent=0 // pred_check_branch
    %18 = sbr.rel (%p16) target = $region17
  $region16: #{vit_forward.12} parent=0 // pred_region
    %19 = vst [vmem:[#allocation2] sm:$0xff] 0.0
    %20 = vst [vmem:[#allocation2 + $0x8] sm:$0xff] 0.0
    %21 = vst [vmem:[#allocation2 + $0x10] sm:$0xff] 0.0
    %22 = vst [vmem:[#allocation2 + $0x18] sm:$0xff] 0.0
  $region17: #{vit_forward.12} parent=0 // pred_fallthru
    _
  %v23 = vld [vmem:[%s0] sm:$0xff]
  %v24 = vld [vmem:[%s0 + $0x8] sm:$0xff]
  %v25 = vld [vmem:[%s0 + $0x10] sm:$0xff]
  %v26 = vld [vmem:[%s0 + $0x18] sm:$0xff]
  %v27 = vpack.c.bf16 %v24, %v23
  %v28 = vpack.c.bf16 %v26, %v25
  %v29 = vld [vmem:[#allocation2] sm:$0xff]
  %v30 = vld [vmem:[#allocation2 + $0x8] sm:$0xff]
  %v31 = vld [vmem:[#allocation2 + $0x10] sm:$0xff]
  %v32 = vld [vmem:[#allocation2 + $0x18] sm:$0xff]
  %v33 = vld [vmem:[%s1] sm:$0xf]
  %v34 = vld [vmem:[%s1 + $0x4] sm:$0xf]
  %v35 = vld [vmem:[%s1 + $0x8] sm:$0xf]
  %v36 = vld [vmem:[%s1 + $0xc] sm:$0xf]
  %v37 = vld [vmem:[%s1 + $0x10] sm:$0xf]
  %v38 = vld [vmem:[%s1 + $0x14] sm:$0xf]
  %v45 = vunpack.c.l.b16 %v33
  %v46 = vunpack.c.l.b16 %v34
  %v47 = vunpack.c.l.b16 %v35
  %v48 = vunpack.c.l.b16 %v36
  %v49 = vunpack.c.l.b16 %v37
  %v50 = vunpack.c.l.b16 %v38
  %v51 = vpack.c.b16 %v46, %v45
  %v52 = vpack.c.b16 %v48, %v47
  %v53 = vpack.c.b16 %v50, %v49
  %vm57 = vcmask 392192
  %v59 = vsel %vm57, %v27, 0
  %v62 = vsel %vm57, %v28, 0
  %64 = vmatpush.bf16.msra.mxu0 0
  %65 = vmatpush.bf16.msra.mxu0 0
  %66 = vmatpush.bf16.msra.mxu0 0
  %67 = vmatpush.bf16.msra.mxu0 0
  %68 = vmatpush.bf16.msra.mxu0 0
  %69 = vmatpush.bf16.msra.mxu0 %v53
  %70 = vmatpush.bf16.msra.mxu0 %v52
  %71 = vmatpush.bf16.msra.mxu0 %v51
  %72 = vmatmul.bf16.gmra.mxu0 %v59
  %v73 = vpop.f32.mrf.mxu0
  %v74 = vadd.f32 0.0, %v73
  %v75 = vpop.f32.mrf.mxu0
  %v76 = vadd.f32 0.0, %v75
  %77 = vmatmul.bf16.gmra.mxu0 %v62
  %v78 = vpop.f32.mrf.mxu0
  %v79 = vadd.f32 0.0, %v78
  %v80 = vpop.f32.mrf.mxu0
  %v81 = vadd.f32 0.0, %v80
  %82 = vdwg.mxu0
  %v83 = vadd.f32 %v29, %v74
  %v84 = vadd.f32 %v30, %v76
  %v85 = vadd.f32 %v31, %v79
  %v86 = vadd.f32 %v32, %v81
  %87 = vst [vmem:[#allocation2] sm:$0xff] %v83
  %88 = vst [vmem:[#allocation2 + $0x8] sm:$0xff] %v84
  %89 = vst [vmem:[#allocation2 + $0x10] sm:$0xff] %v85
  %90 = vst [vmem:[#allocation2 + $0x18] sm:$0xff] %v86
  // Predicated region
  $region18: #{vit_forward.12} parent=0 // pred_check
    %p91 = pneg %p15
  $region19: #{vit_forward.12} parent=0 // pred_check_branch
    %93 = sbr.rel (%p91) target = $region21
  $region20: #{vit_forward.12} parent=0 // pred_region
    %v94 = vld [vmem:[#allocation2] sm:$0xff]
    %v95 = vld [vmem:[#allocation2 + $0x8] sm:$0xff]
    %v96 = vld [vmem:[#allocation2 + $0x10] sm:$0xff]
    %v97 = vld [vmem:[#allocation2 + $0x18] sm:$0xff]
    %v98 = vld [vmem:[%s2] sm:$0x1]
    %v100 = vperm.slane %v98, 0
    %v102 = vadd.f32 %v94, %v100
    %v103 = vadd.f32 %v95, %v100
    %v104 = vadd.f32 %v96, %v100
    %v105 = vadd.f32 %v97, %v100
    %106 = vst [vmem:[%s3] sm:$0xff] %v102
    %107 = vst [vmem:[%s3 + $0x8] sm:$0xff] %v103
    %108 = vst [vmem:[%s3 + $0x10] sm:$0xff] %v104
    %109 = vst [vmem:[%s3 + $0x18] sm:$0xff] %v105
  $region21: #{vit_forward.12} parent=0 // pred_fallthru
    _
  // Predicated region
  $region22: #{vit_forward.12} parent=0 // pred_check
    _
  $region23: #{vit_forward.12} parent=0 // pred_check_branch
    %111 = sbr.rel (0) target = $region25
  $region24: #{vit_forward.12} parent=0 // pred_region
    _
  $region25: #{vit_forward.12} parent=0 // pred_fallthru
    _
  // Predicated region
  $region26: #{vit_forward.12} parent=0 // pred_check
    _
  $region27: #{vit_forward.12} parent=0 // pred_check_branch
    %113 = sbr.rel (0) target = $region29
  $region28: #{vit_forward.12} parent=0 // pred_region
    _
  $region29: #{vit_forward.12} parent=0 // pred_fallthru
    _

// kernel: vit_forward.13
$region0: #{vit_forward.13}
  #allocation0 [shape = 'u32[]', space=smem, size = 0x4, offset = 0x4, fixed_abs, tag = 'smem constant byte address 0x4 - core index']
  #allocation1 [shape = 'u32[72,128]{1,0:T(1,128)}', space=vmem, size = 0x9000, scoped, tag = 'internal scratch']
  #allocation2 [shape = 'f32[40,128]{1,0:T(8,128)}', space=vmem, size = 0x5000, scoped, tag = 'scratch operand']
  #allocation3 [shape = 'bf16[40,32]{1,0:T(8,128)(2,1)}', space=vmem, size = 0x2800, scoped, tag = 'scratch operand']
  %s0 = inlined_call_operand.vmem [shape: f32[40,32], index: 0, kind: input, shape index: {}]
  %s1 = inlined_call_operand.vmem [shape: bf16[32,128], index: 1, kind: input, shape index: {}]
  %s2 = inlined_call_operand.vmem [shape: f32[1,128], index: 2, kind: input, shape index: {}]
  %s3 = inlined_call_operand.vmem [shape: f32[1,32], index: 3, kind: input, shape index: {}]
  %s4 = inlined_call_operand.vmem [shape: f32[1,32], index: 4, kind: input, shape index: {}]
  %s5 = inlined_call_operand.vmem [shape: bf16[40,128], index: 5, kind: output, shape index: {}]
  %s6 = sld [smem:[#allocation0]]
  $region42: #{vit_forward.13} parent=0
    _
  %s8 = ssub.s32 1, %s6
  %s9 = scalar_select 0, %s8, %s6
  // Predicated region
  $region2: #{vit_forward.13} parent=0 // pred_check
    _
  $region3: #{vit_forward.13} parent=0 // pred_check_branch
    %11 = sbr.rel (0) target = $region5
  $region4: #{vit_forward.13} parent=0 // pred_region
    _
  $region5: #{vit_forward.13} parent=0 // pred_fallthru
    _
  // Predicated region
  $region6: #{vit_forward.13} parent=0 // pred_check
    _
  $region7: #{vit_forward.13} parent=0 // pred_check_branch
    %13 = sbr.rel (0) target = $region9
  $region8: #{vit_forward.13} parent=0 // pred_region
    _
  $region9: #{vit_forward.13} parent=0 // pred_fallthru
    _
  // Predicated region
  $region10: #{vit_forward.13} parent=0 // pred_check
    _
  $region11: #{vit_forward.13} parent=0 // pred_check_branch
    %15 = sbr.rel (0) target = $region13
  $region12: #{vit_forward.13} parent=0 // pred_region
    _
  $region13: #{vit_forward.13} parent=0 // pred_fallthru
    _
  // Predicated region
  $region14: #{vit_forward.13} parent=0 // pred_check
    _
  $region15: #{vit_forward.13} parent=0 // pred_check_branch
    %17 = sbr.rel (0) target = $region17
  $region16: #{vit_forward.13} parent=0 // pred_region
    _
  $region17: #{vit_forward.13} parent=0 // pred_fallthru
    _
  // Predicated region
  $region18: #{vit_forward.13} parent=0 // pred_check
    _
  $region19: #{vit_forward.13} parent=0 // pred_check_branch
    %19 = sbr.rel (0) target = $region21
  $region20: #{vit_forward.13} parent=0 // pred_region
    _
  $region21: #{vit_forward.13} parent=0 // pred_fallthru
    _
  %p21 = scmp.eq.s32.totalorder 0, 0
  // Predicated region
  $region22: #{vit_forward.13} parent=0 // pred_check
    %p22 = pneg %p21
  $region23: #{vit_forward.13} parent=0 // pred_check_branch
    %24 = sbr.rel (%p22) target = $region25
  $region24: #{vit_forward.13} parent=0 // pred_region
    %25 = vst [vmem:[#allocation2] sm:$0xff] 0.0
    %26 = vst [vmem:[#allocation2 + $0x8] sm:$0xff] 0.0
    %27 = vst [vmem:[#allocation2 + $0x10] sm:$0xff] 0.0
    %28 = vst [vmem:[#allocation2 + $0x18] sm:$0xff] 0.0
    %29 = vst [vmem:[#allocation2 + $0x20] sm:$0xff] 0.0
  $region25: #{vit_forward.13} parent=0 // pred_fallthru
    _
  %p30 = scmp.eq.s32.totalorder 0, 0
  // Predicated region
  $region26: #{vit_forward.13} parent=0 // pred_check
    %p31 = pneg %p30
  $region27: #{vit_forward.13} parent=0 // pred_check_branch
    %33 = sbr.rel (%p31) target = $region29
  $region28: #{vit_forward.13} parent=0 // pred_region
    %v34 = vld [vmem:[%s0] sm:$0xff]
    %v35 = vld [vmem:[%s0 + $0x8] sm:$0xff]
    %v36 = vld [vmem:[%s0 + $0x10] sm:$0xff]
    %v37 = vld [vmem:[%s0 + $0x18] sm:$0xff]
    %v38 = vld [vmem:[%s0 + $0x20] sm:$0xff]
    %vm39 = vcmask 261120
    %v40 = vsel %vm39, %v34, 0.0
    %41 = vadd.xlane.f32.xlu0 %v40
    %v42 = vpop.xlane.xlu0 %41
    %v43 = vsel %vm39, %v35, 0.0
    %44 = vadd.xlane.f32.xlu0 %v43
    %v45 = vpop.xlane.xlu0 %44
    %v46 = vsel %vm39, %v36, 0.0
    %47 = vadd.xlane.f32.xlu0 %v46
    %v48 = vpop.xlane.xlu0 %47
    %v49 = vsel %vm39, %v37, 0.0
    %50 = vadd.xlane.f32.xlu0 %v49
    %v51 = vpop.xlane.xlu0 %50
    %v52 = vsel %vm39, %v38, 0.0
    %53 = vadd.xlane.f32.xlu0 %v52
    %v54 = vpop.xlane.xlu0 %53
    %v55 = vrcp.pop 32.0
    %v56 = vmul.f32 32.0, %v55
    %v57 = vsub.f32 1.0, %v56
    %v58 = vmul.f32 %v55, %v57
    %v59 = vadd.f32 %v55, %v58
    %vm60 = vweird.f32 %v55
    %v61 = vsel %vm60, %v55, %v59
    %v62 = vmul.f32 %v42, %v61
    %v63 = vmul.f32 %v45, %v61
    %v64 = vmul.f32 %v48, %v61
    %v65 = vmul.f32 %v51, %v61
    %v66 = vmul.f32 %v54, %v61
    %v67 = vsub.f32 %v34, %v62
    %v68 = vsub.f32 %v35, %v63
    %v69 = vsub.f32 %v36, %v64
    %v70 = vsub.f32 %v37, %v65
    %v71 = vsub.f32 %v38, %v66
    %v72 = vmul.f32 %v67, %v67
    %v73 = vmul.f32 %v68, %v68
    %v74 = vmul.f32 %v69, %v69
    %v75 = vmul.f32 %v70, %v70
    %v76 = vmul.f32 %v71, %v71
    %v77 = vsel %vm39, %v72, 0.0
    %78 = vadd.xlane.f32.xlu0 %v77
    %v79 = vpop.xlane.xlu0 %78
    %v80 = vsel %vm39, %v73, 0.0
    %81 = vadd.xlane.f32.xlu0 %v80
    %v82 = vpop.xlane.xlu0 %81
    %v83 = vsel %vm39, %v74, 0.0
    %84 = vadd.xlane.f32.xlu0 %v83
    %v85 = vpop.xlane.xlu0 %84
    %v86 = vsel %vm39, %v75, 0.0
    %87 = vadd.xlane.f32.xlu0 %v86
    %v88 = vpop.xlane.xlu0 %87
    %v89 = vsel %vm39, %v76, 0.0
    %90 = vadd.xlane.f32.xlu0 %v89
    %v91 = vpop.xlane.xlu0 %90
    %v92 = vmul.f32 %v79, %v61
    %v93 = vmul.f32 %v82, %v61
    %v94 = vmul.f32 %v85, %v61
    %v95 = vmul.f32 %v88, %v61
    %v96 = vmul.f32 %v91, %v61
    %v97 = vadd.f32 %v92, 1e-05
    %v98 = vadd.f32 %v93, 1e-05
    %v99 = vadd.f32 %v94, 1e-05
    %v100 = vadd.f32 %v95, 1e-05
    %v101 = vadd.f32 %v96, 1e-05
    %v102 = vrsqrt.pop %v97
    %v103 = vmul.f32 %v102, %v97
    %v104 = vmul.f32 %v103, %v102
    %v105 = vmul.f32 0.5, %v104
    %v106 = vsub.f32 1.5, %v105
    %v107 = vmul.f32 %v102, %v106
    %vm108 = vweird.f32 %v97
    %vm109 = vweird.f32 %v102
    %vm110 = vmor %vm108, %vm109
    %v111 = vsel %vm110, %v102, %v107
    %v112 = vrsqrt.pop %v98
    %v113 = vmul.f32 %v112, %v98
    %v114 = vmul.f32 %v113, %v112
    %v115 = vmul.f32 0.5, %v114
    %v116 = vsub.f32 1.5, %v115
    %v117 = vmul.f32 %v112, %v116
    %vm118 = vweird.f32 %v98
    %vm119 = vweird.f32 %v112
    %vm120 = vmor %vm118, %vm119
    %v121 = vsel %vm120, %v112, %v117
    %v122 = vrsqrt.pop %v99
    %v123 = vmul.f32 %v122, %v99
    %v124 = vmul.f32 %v123, %v122
    %v125 = vmul.f32 0.5, %v124
    %v126 = vsub.f32 1.5, %v125
    %v127 = vmul.f32 %v122, %v126
    %vm128 = vweird.f32 %v99
    %vm129 = vweird.f32 %v122
    %vm130 = vmor %vm128, %vm129
    %v131 = vsel %vm130, %v122, %v127
    %v132 = vrsqrt.pop %v100
    %v133 = vmul.f32 %v132, %v100
    %v134 = vmul.f32 %v133, %v132
    %v135 = vmul.f32 0.5, %v134
    %v136 = vsub.f32 1.5, %v135
    %v137 = vmul.f32 %v132, %v136
    %vm138 = vweird.f32 %v100
    %vm139 = vweird.f32 %v132
    %vm140 = vmor %vm138, %vm139
    %v141 = vsel %vm140, %v132, %v137
    %v142 = vrsqrt.pop %v101
    %v143 = vmul.f32 %v142, %v101
    %v144 = vmul.f32 %v143, %v142
    %v145 = vmul.f32 0.5, %v144
    %v146 = vsub.f32 1.5, %v145
    %v147 = vmul.f32 %v142, %v146
    %vm148 = vweird.f32 %v101
    %vm149 = vweird.f32 %v142
    %vm150 = vmor %vm148, %vm149
    %v151 = vsel %vm150, %v142, %v147
    %v152 = vmul.f32 %v67, %v111
    %v153 = vmul.f32 %v68, %v121
    %v154 = vmul.f32 %v69, %v131
    %v155 = vmul.f32 %v70, %v141
    %v156 = vmul.f32 %v71, %v151
    %v157 = vld [vmem:[%s3] sm:$0x1]
    %v159 = vperm.slane %v157, 0
    %v161 = vmul.f32 %v152, %v159
    %v162 = vmul.f32 %v153, %v159
    %v163 = vmul.f32 %v154, %v159
    %v164 = vmul.f32 %v155, %v159
    %v165 = vmul.f32 %v156, %v159
    %v166 = vld [vmem:[%s4] sm:$0x1]
    %v168 = vperm.slane %v166, 0
    %v170 = vadd.f32 %v161, %v168
    %v171 = vadd.f32 %v162, %v168
    %v172 = vadd.f32 %v163, %v168
    %v173 = vadd.f32 %v164, %v168
    %v174 = vadd.f32 %v165, %v168
    %v175 = vpack.c.bf16 %v170, %v170
    %v176 = vpack.c.bf16 %v171, %v171
    %v177 = vpack.c.bf16 %v172, %v172
    %v178 = vpack.c.bf16 %v173, %v173
    %v179 = vpack.c.bf16 %v174, %v174
    %vm180 = vcmask 257024
    %181 = vst.msk [vmem:[#allocation3] sm:$0xf] %vm180, %v175
    %182 = vst.msk [vmem:[#allocation3 + $0x4] sm:$0xf] %vm180, %v176
    %183 = vst.msk [vmem:[#allocation3 + $0x8] sm:$0xf] %vm180, %v177
    %184 = vst.msk [vmem:[#allocation3 + $0xc] sm:$0xf] %vm180, %v178
    %185 = vst.msk [vmem:[#allocation3 + $0x10] sm:$0xf] %vm180, %v179
  $region29: #{vit_forward.13} parent=0 // pred_fallthru
    _
  %v186 = vld [vmem:[#allocation3] sm:$0xf]
  %v187 = vld [vmem:[#allocation3 + $0x4] sm:$0xf]
  %v188 = vld [vmem:[#allocation3 + $0x8] sm:$0xf]
  %v189 = vld [vmem:[#allocation3 + $0xc] sm:$0xf]
  %v190 = vld [vmem:[#allocation3 + $0x10] sm:$0xf]
  %v191 = vld [vmem:[#allocation2] sm:$0xff]
  %v192 = vld [vmem:[#allocation2 + $0x8] sm:$0xff]
  %v193 = vld [vmem:[#allocation2 + $0x10] sm:$0xff]
  %v194 = vld [vmem:[#allocation2 + $0x18] sm:$0xff]
  %v195 = vld [vmem:[#allocation2 + $0x20] sm:$0xff]
  %v196 = vld [vmem:[%s1] sm:$0xf]
  %v197 = vld [vmem:[%s1 + $0x4] sm:$0xf]
  %v198 = vld [vmem:[%s1 + $0x8] sm:$0xf]
  %v199 = vld [vmem:[%s1 + $0xc] sm:$0xf]
  %v205 = vunpack.c.l.b16 %v186
  %v206 = vunpack.c.l.b16 %v187
  %v207 = vunpack.c.l.b16 %v188
  %v208 = vunpack.c.l.b16 %v189
  %v209 = vunpack.c.l.b16 %v190
  %v210 = vpack.c.b16 %v206, %v205
  %v211 = vpack.c.b16 %v208, %v207
  %v212 = vpack.c.b16 %v209, %v209
  %v217 = vunpack.c.l.b16 %v196
  %v218 = vunpack.c.l.b16 %v197
  %v219 = vunpack.c.l.b16 %v198
  %v220 = vunpack.c.l.b16 %v199
  %v221 = vpack.c.b16 %v218, %v217
  %v222 = vpack.c.b16 %v220, %v219
  %vm225 = vcmask 261120
  %v227 = vsel %vm225, %v210, 0
  %v230 = vsel %vm225, %v211, 0
  %v233 = vsel %vm225, %v212, 0
  %235 = vmatpush.bf16.msra.mxu0 0
  %236 = vmatpush.bf16.msra.mxu0 0
  %237 = vmatpush.bf16.msra.mxu0 0
  %238 = vmatpush.bf16.msra.mxu0 0
  %239 = vmatpush.bf16.msra.mxu0 0
  %240 = vmatpush.bf16.msra.mxu0 0
  %241 = vmatpush.bf16.msra.mxu0 %v222
  %242 = vmatpush.bf16.msra.mxu0 %v221
  %243 = vmatmul.bf16.gmra.mxu0 %v227
  %v244 = vpop.f32.mrf.mxu0
  %v245 = vadd.f32 0.0, %v244
  %v246 = vpop.f32.mrf.mxu0
  %v247 = vadd.f32 0.0, %v246
  %248 = vmatmul.bf16.gmra.mxu0 %v230
  %v249 = vpop.f32.mrf.mxu0
  %v250 = vadd.f32 0.0, %v249
  %v251 = vpop.f32.mrf.mxu0
  %v252 = vadd.f32 0.0, %v251
  %253 = vmatmul.bf16.gmra.mxu0 %v233
  %v254 = vpop.f32.mrf.mxu0
  %v255 = vadd.f32 0.0, %v254
  %v256 = vpop.f32.mrf.mxu0
  %257 = vdwg.mxu0
  %v258 = vadd.f32 %v191, %v245
  %v259 = vadd.f32 %v192, %v247
  %v260 = vadd.f32 %v193, %v250
  %v261 = vadd.f32 %v194, %v252
  %v262 = vadd.f32 %v195, %v255
  %263 = vst [vmem:[#allocation2] sm:$0xff] %v258
  %264 = vst [vmem:[#allocation2 + $0x8] sm:$0xff] %v259
  %265 = vst [vmem:[#allocation2 + $0x10] sm:$0xff] %v260
  %266 = vst [vmem:[#allocation2 + $0x18] sm:$0xff] %v261
  %267 = vst [vmem:[#allocation2 + $0x20] sm:$0xff] %v262
  // Predicated region
  $region30: #{vit_forward.13} parent=0 // pred_check
    %p268 = pneg %p21
  $region31: #{vit_forward.13} parent=0 // pred_check_branch
    %270 = sbr.rel (%p268) target = $region33
  $region32: #{vit_forward.13} parent=0 // pred_region
    %v271 = vld [vmem:[#allocation2] sm:$0xff]
    %v272 = vld [vmem:[#allocation2 + $0x8] sm:$0xff]
    %v273 = vld [vmem:[#allocation2 + $0x10] sm:$0xff]
    %v274 = vld [vmem:[#allocation2 + $0x18] sm:$0xff]
    %v275 = vld [vmem:[#allocation2 + $0x20] sm:$0xff]
    %v276 = vld [vmem:[%s2] sm:$0x1]
    %v278 = vperm.slane %v276, 0
    %v280 = vadd.f32 %v271, %v278
    %v281 = vadd.f32 %v272, %v278
    %v282 = vadd.f32 %v273, %v278
    %v283 = vadd.f32 %v274, %v278
    %v284 = vadd.f32 %v275, %v278
    %v285 = vpack.c.bf16 %v280, %v280
    %v286 = vpack.c.bf16 %v281, %v281
    %v287 = vpack.c.bf16 %v282, %v282
    %v288 = vpack.c.bf16 %v283, %v283
    %v289 = vpack.c.bf16 %v284, %v284
    %290 = vst [vmem:[%s5] sm:$0xf] %v285
    %291 = vst [vmem:[%s5 + $0x4] sm:$0xf] %v286
    %292 = vst [vmem:[%s5 + $0x8] sm:$0xf] %v287
    %293 = vst [vmem:[%s5 + $0xc] sm:$0xf] %v288
    %294 = vst [vmem:[%s5 + $0x10] sm:$0xf] %v289
  $region33: #{vit_forward.13} parent=0 // pred_fallthru
    _
  // Predicated region
  $region34: #{vit_forward.13} parent=0 // pred_check
    _
  $region35: #{vit_forward.13} parent=0 // pred_check_branch
    %296 = sbr.rel (0) target = $region37
  $region36: #{vit_forward.13} parent=0 // pred_region
    _
  $region37: #{vit_forward.13} parent=0 // pred_fallthru
    _
  // Predicated region
  $region38: #{vit_forward.13} parent=0 // pred_check
    _
  $region39: #{vit_forward.13} parent=0 // pred_check_branch
    %298 = sbr.rel (0) target = $region41
  $region40: #{vit_forward.13} parent=0 // pred_region
    _
  $region41: #{vit_forward.13} parent=0 // pred_fallthru
    _

// kernel: vit_forward.14
$region0: #{vit_forward.14}
  #allocation0 [shape = 'u32[]', space=smem, size = 0x4, offset = 0x4, fixed_abs, tag = 'smem constant byte address 0x4 - core index']
  #allocation1 [shape = 'u32[72,128]{1,0:T(1,128)}', space=vmem, size = 0x9000, scoped, tag = 'internal scratch']
  %s0 = inlined_call_operand.vmem [shape: bf16[2,4,128,8], index: 0, kind: input, shape index: {}]
  %s1 = inlined_call_operand.vmem [shape: bf16[2,4,128,8], index: 1, kind: input, shape index: {}]
  %s2 = inlined_call_operand.vmem [shape: bf16[2,4,128,8], index: 2, kind: input, shape index: {}]
  %s3 = inlined_call_operand.vmem [shape: bf16[2,4,128,8], index: 3, kind: output, shape index: {}]
  %s4 = sld [smem:[#allocation0]]
  $region45: #{vit_forward.14} parent=0
    _
  %s6 = ssub.s32 1, %s4
  %s7 = scalar_select 0, %s6, %s4
  loop: start=0, step=1, limit=6
  $region2: #{vit_forward.14} parent=0 // loop_pre_header
    _
  $region3: #{vit_forward.14} parent=0 // loop_header
    %s9 = sphi 0, %s13
    %p10 = scmp.ge.s32.totalorder %s9, 6
    %s16 = sphi 0, %s28
    %s17 = sphi 0, %s24
    %s18 = sphi 0, %s16
    %s19 = sphi 0, %s17
    %s20 = sphi 0, %s18
    %s21 = sphi 0, %s19
    %s33 = sphi 0, %s35
    %s36 = sphi 0, %s33
    %s37 = sphi 0, %s36
    %s53 = sphi 0, %s37
    %s61 = sphi 0, %s63
    %s64 = sphi 0, %s61
    %s65 = sphi 0, %s64
    %s81 = sphi 0, %s65
    %s89 = sphi 0, %s91
    %s92 = sphi 0, %s89
    %s93 = sphi 0, %s92
    %s109 = sphi 0, %s93
    %s117 = sphi 0, %s119
    %s120 = sphi 0, %s117
    %s121 = sphi 0, %s120
    %s137 = sphi 0, %s121
  $region4: #{vit_forward.14} parent=0 // loop_header_branch
    %12 = sbr.rel (%p10) target = $region8
  $region5: #{vit_forward.14} parent=0 // loop_body
    %s14 = ssub.s32 %s9, 1
    %s15 = ssub.s32 %s9, 2
    %s22 = sadd.s32 1, %s17
    %p23 = scmp.ge.s32.totalorder %s22, 2
    %s24 = scalar_select %p23, 0, %s22
    %s25 = sadd.s32 1, %s16
    %s26 = scalar_select %p23, %s25, %s16
    %p27 = scmp.ge.s32.totalorder %s26, 2
    %s28 = scalar_select %p27, 0, %s26
    %s29 = ssub.s32 %s16, %s28
    %s30 = ssub.s32 %s17, %s24
    %s31 = sor.u32 %s29, %s30
    %p32 = scmp.eq.s32.totalorder %s31, 0
    %s34 = sadd.s32 %s33, 1
    %s35 = scalar_select %p32, %s33, %s34
    %p38 = pneg %p32
    %p39 = scmp.eq.s32.totalorder %s9, 3
    %p40 = por %p38, %p39
    %p41 = scmp.ne.s32.totalorder %s33, %s36
    %p42 = scmp.eq.s32.totalorder %s9, 0
    %p43 = por %p41, %p42
    %p44 = scmp.ne.s32.totalorder %s33, %s36
    %p45 = scmp.eq.s32.totalorder %s14, 3
    %p46 = por %p44, %p45
    %p47 = scmp.ne.s32.totalorder %s36, %s37
    %p48 = scmp.eq.s32.totalorder %s14, 0
    %p49 = por %p47, %p48
    %p50 = scmp.ne.s32.totalorder %s36, %s37
    %p51 = scmp.eq.s32.totalorder %s15, 3
    %p52 = por %p50, %p51
    %p54 = scmp.ne.s32.totalorder %s37, %s53
    %p55 = scmp.eq.s32.totalorder %s15, 0
    %p56 = por %p54, %p55
    %s57 = ssub.s32 %s16, %s28
    %s58 = ssub.s32 %s17, %s24
    %s59 = sor.u32 %s57, %s58
    %p60 = scmp.eq.s32.totalorder %s59, 0
    %s62 = sadd.s32 %s61, 1
    %s63 = scalar_select %p60, %s61, %s62
    %p66 = pneg %p60
    %p67 = scmp.eq.s32.totalorder %s9, 3
    %p68 = por %p66, %p67
    %p69 = scmp.ne.s32.totalorder %s61, %s64
    %p70 = scmp.eq.s32.totalorder %s9, 0
    %p71 = por %p69, %p70
    %p72 = scmp.ne.s32.totalorder %s61, %s64
    %p73 = scmp.eq.s32.totalorder %s14, 3
    %p74 = por %p72, %p73
    %p75 = scmp.ne.s32.totalorder %s64, %s65
    %p76 = scmp.eq.s32.totalorder %s14, 0
    %p77 = por %p75, %p76
    %p78 = scmp.ne.s32.totalorder %s64, %s65
    %p79 = scmp.eq.s32.totalorder %s15, 3
    %p80 = por %p78, %p79
    %p82 = scmp.ne.s32.totalorder %s65, %s81
    %p83 = scmp.eq.s32.totalorder %s15, 0
    %p84 = por %p82, %p83
    %s85 = ssub.s32 %s16, %s28
    %s86 = ssub.s32 %s17, %s24
    %s87 = sor.u32 %s85, %s86
    %p88 = scmp.eq.s32.totalorder %s87, 0
    %s90 = sadd.s32 %s89, 1
    %s91 = scalar_select %p88, %s89, %s90
    %p94 = pneg %p88
    %p95 = scmp.eq.s32.totalorder %s9, 3
    %p96 = por %p94, %p95
    %p97 = scmp.ne.s32.totalorder %s89, %s92
    %p98 = scmp.eq.s32.totalorder %s9, 0
    %p99 = por %p97, %p98
    %p100 = scmp.ne.s32.totalorder %s89, %s92
    %p101 = scmp.eq.s32.totalorder %s14, 3
    %p102 = por %p100, %p101
    %p103 = scmp.ne.s32.totalorder %s92, %s93
    %p104 = scmp.eq.s32.totalorder %s14, 0
    %p105 = por %p103, %p104
    %p106 = scmp.ne.s32.totalorder %s92, %s93
    %p107 = scmp.eq.s32.totalorder %s15, 3
    %p108 = por %p106, %p107
    %p110 = scmp.ne.s32.totalorder %s93, %s109
    %p111 = scmp.eq.s32.totalorder %s15, 0
    %p112 = por %p110, %p111
    %s113 = ssub.s32 %s16, %s28
    %s114 = ssub.s32 %s17, %s24
    %s115 = sor.u32 %s113, %s114
    %p116 = scmp.eq.s32.totalorder %s115, 0
    %s118 = sadd.s32 %s117, 1
    %s119 = scalar_select %p116, %s117, %s118
    %p122 = pneg %p116
    %p123 = scmp.eq.s32.totalorder %s9, 3
    %p124 = por %p122, %p123
    %p125 = scmp.ne.s32.totalorder %s117, %s120
    %p126 = scmp.eq.s32.totalorder %s9, 0
    %p127 = por %p125, %p126
    %p128 = scmp.ne.s32.totalorder %s117, %s120
    %p129 = scmp.eq.s32.totalorder %s14, 3
    %p130 = por %p128, %p129
    %p131 = scmp.ne.s32.totalorder %s120, %s121
    %p132 = scmp.eq.s32.totalorder %s14, 0
    %p133 = por %p131, %p132
    %p134 = scmp.ne.s32.totalorder %s120, %s121
    %p135 = scmp.eq.s32.totalorder %s15, 3
    %p136 = por %p134, %p135
    %p138 = scmp.ne.s32.totalorder %s121, %s137
    %p139 = scmp.eq.s32.totalorder %s15, 0
    %p140 = por %p138, %p139
    %p141 = scmp.le.s32.totalorder 1, %s9
    %p142 = scmp.lt.s32.totalorder %s9, 5
    %p143 = pnand %p141, %p142
    %p144 = pneg %p143
    // Predicated region
    $region9: #{vit_forward.14} parent=5 // pred_check
      _
    $region10: #{vit_forward.14} parent=5 // pred_check_branch
      %146 = sbr.rel (%p143) target = $region12
    $region11: #{vit_forward.14} parent=5 // pred_region
      %s147 = ssub.s32 %s9, 1
    $region12: #{vit_forward.14} parent=5 // pred_fallthru
      _
    %p148 = scmp.lt.s32.totalorder %s9, 4
    // Predicated region
    $region13: #{vit_forward.14} parent=5 // pred_check
      %p149 = pneg %p148
    $region14: #{vit_forward.14} parent=5 // pred_check_branch
      %151 = sbr.rel (%p149) target = $region16
    $region15: #{vit_forward.14} parent=5 // pred_region
      // Predicated region
      $region17: #{vit_forward.14} parent=15 // pred_check
        %p152 = pneg %p43
      $region18: #{vit_forward.14} parent=15 // pred_check_branch
        %154 = sbr.rel (%p152) target = $region20
      $region19: #{vit_forward.14} parent=15 // pred_region
        %s155 = smul.u32 2, %s17
        %p156 = scmp.lt.s32.totalorder %s16, 1
        %s157 = scalar_select %p156, %s16, 1
        %p158 = scmp.lt.s32.totalorder %s155, 3
        %s159 = scalar_select %p158, %s155, 3
        %s160 = smul.addr %s159, 16
        %s161 = smul.addr %s157, 64
        %s162 = sadd.s32 %s160, %s161
        %s163 = smul.addr %s162, 4
        %s164 = scalar_lea.vmem %s0, %s163
        %s165 = smul.u32 2, %s17
      $region20: #{vit_forward.14} parent=15 // pred_fallthru
        _
      // Predicated region
      $region21: #{vit_forward.14} parent=15 // pred_check
        %p166 = pneg %p71
      $region22: #{vit_forward.14} parent=15 // pred_check_branch
        %168 = sbr.rel (%p166) target = $region24
      $region23: #{vit_forward.14} parent=15 // pred_region
        %s169 = smul.u32 2, %s17
        %p170 = scmp.lt.s32.totalorder %s16, 1
        %s171 = scalar_select %p170, %s16, 1
        %p172 = scmp.lt.s32.totalorder %s169, 3
        %s173 = scalar_select %p172, %s169, 3
        %s174 = smul.addr %s173, 16
        %s175 = smul.addr %s171, 64
        %s176 = sadd.s32 %s174, %s175
        %s177 = smul.addr %s176, 4
        %s178 = scalar_lea.vmem %s1, %s177
        %s179 = smul.u32 2, %s17
      $region24: #{vit_forward.14} parent=15 // pred_fallthru
        _
      // Predicated region
      $region25: #{vit_forward.14} parent=15 // pred_check
        %p180 = pneg %p99
      $region26: #{vit_forward.14} parent=15 // pred_check_branch
        %182 = sbr.rel (%p180) target = $region28
      $region27: #{vit_forward.14} parent=15 // pred_region
        %s183 = smul.u32 2, %s17
        %p184 = scmp.lt.s32.totalorder %s16, 1
        %s185 = scalar_select %p184, %s16, 1
        %p186 = scmp.lt.s32.totalorder %s183, 3
        %s187 = scalar_select %p186, %s183, 3
        %s188 = smul.addr %s187, 16
        %s189 = smul.addr %s185, 64
        %s190 = sadd.s32 %s188, %s189
        %s191 = smul.addr %s190, 4
        %s192 = scalar_lea.vmem %s2, %s191
        %s193 = smul.u32 2, %s17
      $region28: #{vit_forward.14} parent=15 // pred_fallthru
        _
    $region16: #{vit_forward.14} parent=5 // pred_fallthru
      _
    %p194 = scmp.le.s32.totalorder 1, %s9
    %p195 = scmp.lt.s32.totalorder %s9, 5
    %p196 = pnand %p194, %p195
    %p197 = pneg %p196
    // Predicated region
    $region29: #{vit_forward.14} parent=5 // pred_check
      _
    $region30: #{vit_forward.14} parent=5 // pred_check_branch
      %199 = sbr.rel (%p196) target = $region32
    $region31: #{vit_forward.14} parent=5 // pred_region
      %s200 = ssub.s32 %s9, 1
      %s201 = smul.u32 2, %s19
      %p202 = scmp.lt.s32.totalorder %s18, 1
      %s203 = scalar_select %p202, %s18, 1
      %p204 = scmp.lt.s32.totalorder %s201, 3
      %s205 = scalar_select %p204, %s201, 3
      %s206 = smul.addr %s205, 16
      %s207 = smul.addr %s203, 64
      %s208 = sadd.s32 %s206, %s207
      %s209 = smul.addr %s208, 4
      %s210 = scalar_lea.vmem %s0, %s209
      %p211 = pneg %p49
      %p212 = pneg %p46
      %s213 = smul.u32 2, %s19
      %p214 = scmp.lt.s32.totalorder %s18, 1
      %s215 = scalar_select %p214, %s18, 1
      %p216 = scmp.lt.s32.totalorder %s213, 3
      %s217 = scalar_select %p216, %s213, 3
      %s218 = smul.addr %s217, 16
      %s219 = smul.addr %s215, 64
      %s220 = sadd.s32 %s218, %s219
      %s221 = smul.addr %s220, 4
      %s222 = scalar_lea.vmem %s1, %s221
      %p223 = pneg %p77
      %p224 = pneg %p74
      %s225 = smul.u32 2, %s19
      %p226 = scmp.lt.s32.totalorder %s18, 1
      %s227 = scalar_select %p226, %s18, 1
      %p228 = scmp.lt.s32.totalorder %s225, 3
      %s229 = scalar_select %p228, %s225, 3
      %s230 = smul.addr %s229, 16
      %s231 = smul.addr %s227, 64
      %s232 = sadd.s32 %s230, %s231
      %s233 = smul.addr %s232, 4
      %s234 = scalar_lea.vmem %s2, %s233
      %p235 = pneg %p105
      %p236 = pneg %p102
      %p237 = pneg %p133
      %p238 = pneg %p130
      %s239 = smul.u32 2, %s19
      %p240 = scmp.lt.s32.totalorder %s18, 1
      %s241 = scalar_select %p240, %s18, 1
      %p242 = scmp.lt.s32.totalorder %s239, 3
      %s243 = scalar_select %p242, %s239, 3
      %s244 = smul.addr %s243, 16
      %s245 = smul.addr %s241, 64
      %s246 = sadd.s32 %s244, %s245
      %s247 = smul.addr %s246, 4
      %s248 = scalar_lea.vmem %s3, %s247
      %s249 = smul.u32 2, %s19
      %p250 = scmp.lt.s32.totalorder %s18, 1
      %s251 = scalar_select %p250, %s18, 1
      %p252 = scmp.lt.s32.totalorder %s249, 3
      %s253 = scalar_select %p252, %s249, 3
      %s254 = smul.addr %s253, 16
      %s255 = smul.addr %s251, 64
      %s256 = sadd.s32 %s254, %s255
      %s257 = smul.addr %s256, 4
      %s258 = scalar_lea.vmem %s0, %s257
      %s259 = smul.u32 2, %s19
      %s260 = smul.u32 2, %s19
      %p261 = scmp.lt.s32.totalorder %s18, 1
      %s262 = scalar_select %p261, %s18, 1
      %p263 = scmp.lt.s32.totalorder %s260, 3
      %s264 = scalar_select %p263, %s260, 3
      %s265 = smul.addr %s264, 16
      %s266 = smul.addr %s262, 64
      %s267 = sadd.s32 %s265, %s266
      %s268 = smul.addr %s267, 4
      %s269 = scalar_lea.vmem %s1, %s268
      %s270 = smul.u32 2, %s19
      %s271 = smul.u32 2, %s19
      %p272 = scmp.lt.s32.totalorder %s18, 1
      %s273 = scalar_select %p272, %s18, 1
      %p274 = scmp.lt.s32.totalorder %s271, 3
      %s275 = scalar_select %p274, %s271, 3
      %s276 = smul.addr %s275, 16
      %s277 = smul.addr %s273, 64
      %s278 = sadd.s32 %s276, %s277
      %s279 = smul.addr %s278, 4
      %s280 = scalar_lea.vmem %s2, %s279
      %s281 = smul.u32 2, %s19
      %s282 = smul.u32 2, %s19
      %p283 = scmp.lt.s32.totalorder %s18, 1
      %s284 = scalar_select %p283, %s18, 1
      %p285 = scmp.lt.s32.totalorder %s282, 3
      %s286 = scalar_select %p285, %s282, 3
      %s287 = smul.addr %s286, 16
      %s288 = smul.addr %s284, 64
      %s289 = sadd.s32 %s287, %s288
      %s290 = smul.addr %s289, 4
      %s291 = scalar_lea.vmem %s3, %s290
      %s292 = smul.u32 2, %s19
      %v293 = vld [vmem:[%s258] sm:$0xf]
      %v294 = vld [vmem:[%s258 + $0x4] sm:$0xf]
      %v295 = vld [vmem:[%s258 + $0x8] sm:$0xf]
      %v296 = vld [vmem:[%s258 + $0xc] sm:$0xf]
      %v297 = vld [vmem:[%s258 + $0x10] sm:$0xf]
      %v298 = vld [vmem:[%s258 + $0x14] sm:$0xf]
      %v299 = vld [vmem:[%s258 + $0x18] sm:$0xf]
      %v300 = vld [vmem:[%s258 + $0x1c] sm:$0xf]
      %v301 = vld [vmem:[%s258 + $0x20] sm:$0xf]
      %v302 = vld [vmem:[%s258 + $0x24] sm:$0xf]
      %v303 = vld [vmem:[%s258 + $0x28] sm:$0xf]
      %v304 = vld [vmem:[%s258 + $0x2c] sm:$0xf]
      %v305 = vld [vmem:[%s258 + $0x30] sm:$0xf]
      %v306 = vld [vmem:[%s258 + $0x34] sm:$0xf]
      %v307 = vld [vmem:[%s258 + $0x38] sm:$0xf]
      %v308 = vld [vmem:[%s258 + $0x3c] sm:$0xf]
      %v309 = vld [vmem:[%s258 + $0x40] sm:$0xf]
      %v310 = vld [vmem:[%s258 + $0x44] sm:$0xf]
      %v311 = vld [vmem:[%s258 + $0x48] sm:$0xf]
      %v312 = vld [vmem:[%s258 + $0x4c] sm:$0xf]
      %v313 = vld [vmem:[%s258 + $0x50] sm:$0xf]
      %v314 = vld [vmem:[%s258 + $0x54] sm:$0xf]
      %v315 = vld [vmem:[%s258 + $0x58] sm:$0xf]
      %v316 = vld [vmem:[%s258 + $0x5c] sm:$0xf]
      %v317 = vld [vmem:[%s258 + $0x60] sm:$0xf]
      %v318 = vld [vmem:[%s258 + $0x64] sm:$0xf]
      %v319 = vld [vmem:[%s258 + $0x68] sm:$0xf]
      %v320 = vld [vmem:[%s258 + $0x6c] sm:$0xf]
      %v321 = vld [vmem:[%s258 + $0x70] sm:$0xf]
      %v322 = vld [vmem:[%s258 + $0x74] sm:$0xf]
      %v323 = vld [vmem:[%s258 + $0x78] sm:$0xf]
      %v324 = vld [vmem:[%s258 + $0x7c] sm:$0xf]
      %v325 = vld [vmem:[%s269] sm:$0xf]
      %v326 = vld [vmem:[%s269 + $0x4] sm:$0xf]
      %v327 = vld [vmem:[%s269 + $0x8] sm:$0xf]
      %v328 = vld [vmem:[%s269 + $0xc] sm:$0xf]
      %v329 = vld [vmem:[%s269 + $0x10] sm:$0xf]
      %v330 = vld [vmem:[%s269 + $0x14] sm:$0xf]
      %v331 = vld [vmem:[%s269 + $0x18] sm:$0xf]
      %v332 = vld [vmem:[%s269 + $0x1c] sm:$0xf]
      %v333 = vld [vmem:[%s269 + $0x20] sm:$0xf]
      %v334 = vld [vmem:[%s269 + $0x24] sm:$0xf]
      %v335 = vld [vmem:[%s269 + $0x28] sm:$0xf]
      %v336 = vld [vmem:[%s269 + $0x2c] sm:$0xf]
      %v337 = vld [vmem:[%s269 + $0x30] sm:$0xf]
      %v338 = vld [vmem:[%s269 + $0x34] sm:$0xf]
      %v339 = vld [vmem:[%s269 + $0x38] sm:$0xf]
      %v340 = vld [vmem:[%s269 + $0x3c] sm:$0xf]
      %v341 = vld [vmem:[%s269 + $0x40] sm:$0xf]
      %v342 = vld [vmem:[%s269 + $0x44] sm:$0xf]
      %v343 = vld [vmem:[%s269 + $0x48] sm:$0xf]
      %v344 = vld [vmem:[%s269 + $0x4c] sm:$0xf]
      %v345 = vld [vmem:[%s269 + $0x50] sm:$0xf]
      %v346 = vld [vmem:[%s269 + $0x54] sm:$0xf]
      %v347 = vld [vmem:[%s269 + $0x58] sm:$0xf]
      %v348 = vld [vmem:[%s269 + $0x5c] sm:$0xf]
      %v349 = vld [vmem:[%s269 + $0x60] sm:$0xf]
      %v350 = vld [vmem:[%s269 + $0x64] sm:$0xf]
      %v351 = vld [vmem:[%s269 + $0x68] sm:$0xf]
      %v352 = vld [vmem:[%s269 + $0x6c] sm:$0xf]
      %v353 = vld [vmem:[%s269 + $0x70] sm:$0xf]
      %v354 = vld [vmem:[%s269 + $0x74] sm:$0xf]
      %v355 = vld [vmem:[%s269 + $0x78] sm:$0xf]
      %v356 = vld [vmem:[%s269 + $0x7c] sm:$0xf]
      %v373 = vunpack.c.l.b16 %v293
      %v374 = vunpack.c.l.b16 %v294
      %v375 = vunpack.c.l.b16 %v295
      %v376 = vunpack.c.l.b16 %v296
      %v377 = vunpack.c.l.b16 %v297
      %v378 = vunpack.c.l.b16 %v298
      %v379 = vunpack.c.l.b16 %v299
      %v380 = vunpack.c.l.b16 %v300
      %v381 = vunpack.c.l.b16 %v301
      %v382 = vunpack.c.l.b16 %v302
      %v383 = vunpack.c.l.b16 %v303
      %v384 = vunpack.c.l.b16 %v304
      %v385 = vunpack.c.l.b16 %v305
      %v386 = vunpack.c.l.b16 %v306
      %v387 = vunpack.c.l.b16 %v307
      %v388 = vunpack.c.l.b16 %v308
      %v389 = vpack.c.b16 %v374, %v373
      %v390 = vpack.c.b16 %v376, %v375
      %v391 = vpack.c.b16 %v378, %v377
      %v392 = vpack.c.b16 %v380, %v379
      %v393 = vpack.c.b16 %v382, %v381
      %v394 = vpack.c.b16 %v384, %v383
      %v395 = vpack.c.b16 %v386, %v385
      %v396 = vpack.c.b16 %v388, %v387
      %v413 = vunpack.c.l.b16 %v325
      %v414 = vunpack.c.l.b16 %v326
      %v415 = vunpack.c.l.b16 %v327
      %v416 = vunpack.c.l.b16 %v328
      %v417 = vunpack.c.l.b16 %v329
      %v418 = vunpack.c.l.b16 %v330
      %v419 = vunpack.c.l.b16 %v331
      %v420 = vunpack.c.l.b16 %v332
      %v421 = vunpack.c.l.b16 %v333
      %v422 = vunpack.c.l.b16 %v334
      %v423 = vunpack.c.l.b16 %v335
      %v424 = vunpack.c.l.b16 %v336
      %v425 = vunpack.c.l.b16 %v337
      %v426 = vunpack.c.l.b16 %v338
      %v427 = vunpack.c.l.b16 %v339
      %v428 = vunpack.c.l.b16 %v340
      %v429 = vpack.c.b16 %v414, %v413
      %v430 = vpack.c.b16 %v416, %v415
      %v431 = vpack.c.b16 %v418, %v417
      %v432 = vpack.c.b16 %v420, %v419
      %v433 = vpack.c.b16 %v422, %v421
      %v434 = vpack.c.b16 %v424, %v423
      %v435 = vpack.c.b16 %v426, %v425
      %v436 = vpack.c.b16 %v428, %v427
      %vm437 = vcmask 64512
      %v439 = vsel %vm437, %v389, 0
      %v442 = vsel %vm437, %v390, 0
      %v445 = vsel %vm437, %v391, 0
      %v448 = vsel %vm437, %v392, 0
      %v451 = vsel %vm437, %v393, 0
      %v454 = vsel %vm437, %v394, 0
      %v457 = vsel %vm437, %v395, 0
      %v460 = vsel %vm437, %v396, 0
      %v463 = vsel %vm437, %v429, 0
      %v466 = vsel %vm437, %v430, 0
      %v469 = vsel %vm437, %v431, 0
      %v472 = vsel %vm437, %v432, 0
      %v475 = vsel %vm437, %v433, 0
      %v478 = vsel %vm437, %v434, 0
      %v481 = vsel %vm437, %v435, 0
      %v484 = vsel %vm437, %v436, 0
      %486 = vmatpush.bf16.xpose.msra.mxu0 %v484
      %487 = vmatpush.bf16.xpose.msra.mxu0 %v481
      %488 = vmatpush.bf16.xpose.msra.mxu0 %v478
      %489 = vmatpush.bf16.xpose.msra.mxu0 %v475
      %490 = vmatpush.bf16.xpose.msra.mxu0 %v472
      %491 = vmatpush.bf16.xpose.msra.mxu0 %v469
      %492 = vmatpush.bf16.xpose.msra.mxu0 %v466
      %493 = vmatpush.bf16.xpose.msra.mxu0 %v463
      %494 = vmatmul.bf16.gmra.mxu0 %v439
      %v495 = vpop.f32.mrf.mxu0
      %v496 = vadd.f32 0.0, %v495
      %v497 = vpop.f32.mrf.mxu0
      %v498 = vadd.f32 0.0, %v497
      %499 = vmatmul.bf16.gmra.mxu0 %v442
      %v500 = vpop.f32.mrf.mxu0
      %v501 = vadd.f32 0.0, %v500
      %v502 = vpop.f32.mrf.mxu0
      %v503 = vadd.f32 0.0, %v502
      %504 = vmatmul.bf16.gmra.mxu0 %v445
      %v505 = vpop.f32.mrf.mxu0
      %v506 = vadd.f32 0.0, %v505
      %v507 = vpop.f32.mrf.mxu0
      %v508 = vadd.f32 0.0, %v507
      %509 = vmatmul.bf16.gmra.mxu0 %v448
      %v510 = vpop.f32.mrf.mxu0
      %v511 = vadd.f32 0.0, %v510
      %v512 = vpop.f32.mrf.mxu0
      %v513 = vadd.f32 0.0, %v512
      %514 = vmatmul.bf16.gmra.mxu0 %v451
      %v515 = vpop.f32.mrf.mxu0
      %v516 = vadd.f32 0.0, %v515
      %v517 = vpop.f32.mrf.mxu0
      %v518 = vadd.f32 0.0, %v517
      %519 = vmatmul.bf16.gmra.mxu0 %v454
      %v520 = vpop.f32.mrf.mxu0
      %v521 = vadd.f32 0.0, %v520
      %v522 = vpop.f32.mrf.mxu0
      %v523 = vadd.f32 0.0, %v522
      %524 = vmatmul.bf16.gmra.mxu0 %v457
      %v525 = vpop.f32.mrf.mxu0
      %v526 = vadd.f32 0.0, %v525
      %v527 = vpop.f32.mrf.mxu0
      %v528 = vadd.f32 0.0, %v527
      %529 = vmatmul.bf16.gmra.mxu0 %v460
      %v530 = vpop.f32.mrf.mxu0
      %v531 = vadd.f32 0.0, %v530
      %v532 = vpop.f32.mrf.mxu0
      %v533 = vadd.f32 0.0, %v532
      %534 = vdwg.mxu0
      %v551 = vunpack.c.l.b16 %v309
      %v552 = vunpack.c.l.b16 %v310
      %v553 = vunpack.c.l.b16 %v311
      %v554 = vunpack.c.l.b16 %v312
      %v555 = vunpack.c.l.b16 %v313
      %v556 = vunpack.c.l.b16 %v314
      %v557 = vunpack.c.l.b16 %v315
      %v558 = vunpack.c.l.b16 %v316
      %v559 = vunpack.c.l.b16 %v317
      %v560 = vunpack.c.l.b16 %v318
      %v561 = vunpack.c.l.b16 %v319
      %v562 = vunpack.c.l.b16 %v320
      %v563 = vunpack.c.l.b16 %v321
      %v564 = vunpack.c.l.b16 %v322
      %v565 = vunpack.c.l.b16 %v323
      %v566 = vunpack.c.l.b16 %v324
      %v567 = vpack.c.b16 %v552, %v551
      %v568 = vpack.c.b16 %v554, %v553
      %v569 = vpack.c.b16 %v556, %v555
      %v570 = vpack.c.b16 %v558, %v557
      %v571 = vpack.c.b16 %v560, %v559
      %v572 = vpack.c.b16 %v562, %v561
      %v573 = vpack.c.b16 %v564, %v563
      %v574 = vpack.c.b16 %v566, %v565
      %v591 = vunpack.c.l.b16 %v341
      %v592 = vunpack.c.l.b16 %v342
      %v593 = vunpack.c.l.b16 %v343
      %v594 = vunpack.c.l.b16 %v344
      %v595 = vunpack.c.l.b16 %v345
      %v596 = vunpack.c.l.b16 %v346
      %v597 = vunpack.c.l.b16 %v347
      %v598 = vunpack.c.l.b16 %v348
      %v599 = vunpack.c.l.b16 %v349
      %v600 = vunpack.c.l.b16 %v350
      %v601 = vunpack.c.l.b16 %v351
      %v602 = vunpack.c.l.b16 %v352
      %v603 = vunpack.c.l.b16 %v353
      %v604 = vunpack.c.l.b16 %v354
      %v605 = vunpack.c.l.b16 %v355
      %v606 = vunpack.c.l.b16 %v356
      %v607 = vpack.c.b16 %v592, %v591
      %v608 = vpack.c.b16 %v594, %v593
      %v609 = vpack.c.b16 %v596, %v595
      %v610 = vpack.c.b16 %v598, %v597
      %v611 = vpack.c.b16 %v600, %v599
      %v612 = vpack.c.b16 %v602, %v601
      %v613 = vpack.c.b16 %v604, %v603
      %v614 = vpack.c.b16 %v606, %v605
      %v616 = vsel %vm437, %v567, 0
      %v619 = vsel %vm437, %v568, 0
      %v622 = vsel %vm437, %v569, 0
      %v625 = vsel %vm437, %v570, 0
      %v628 = vsel %vm437, %v571, 0
      %v631 = vsel %vm437, %v572, 0
      %v634 = vsel %vm437, %v573, 0
      %v637 = vsel %vm437, %v574, 0
      %v640 = vsel %vm437, %v607, 0
      %v643 = vsel %vm437, %v608, 0
      %v646 = vsel %vm437, %v609, 0
      %v649 = vsel %vm437, %v610, 0
      %v652 = vsel %vm437, %v611, 0
      %v655 = vsel %vm437, %v612, 0
      %v658 = vsel %vm437, %v613, 0
      %v661 = vsel %vm437, %v614, 0
      %663 = vmatpush.bf16.xpose.msra.mxu0 %v661
      %664 = vmatpush.bf16.xpose.msra.mxu0 %v658
      %665 = vmatpush.bf16.xpose.msra.mxu0 %v655
      %666 = vmatpush.bf16.xpose.msra.mxu0 %v652
      %667 = vmatpush.bf16.xpose.msra.mxu0 %v649
      %668 = vmatpush.bf16.xpose.msra.mxu0 %v646
      %669 = vmatpush.bf16.xpose.msra.mxu0 %v643
      %670 = vmatpush.bf16.xpose.msra.mxu0 %v640
      %671 = vmatmul.bf16.gmra.mxu0 %v616
      %v672 = vpop.f32.mrf.mxu0
      %v673 = vadd.f32 0.0, %v672
      %v674 = vpop.f32.mrf.mxu0
      %v675 = vadd.f32 0.0, %v674
      %676 = vmatmul.bf16.gmra.mxu0 %v619
      %v677 = vpop.f32.mrf.mxu0
      %v678 = vadd.f32 0.0, %v677
      %v679 = vpop.f32.mrf.mxu0
      %v680 = vadd.f32 0.0, %v679
      %681 = vmatmul.bf16.gmra.mxu0 %v622
      %v682 = vpop.f32.mrf.mxu0
      %v683 = vadd.f32 0.0, %v682
      %v684 = vpop.f32.mrf.mxu0
      %v685 = vadd.f32 0.0, %v684
      %686 = vmatmul.bf16.gmra.mxu0 %v625
      %v687 = vpop.f32.mrf.mxu0
      %v688 = vadd.f32 0.0, %v687
      %v689 = vpop.f32.mrf.mxu0
      %v690 = vadd.f32 0.0, %v689
      %691 = vmatmul.bf16.gmra.mxu0 %v628
      %v692 = vpop.f32.mrf.mxu0
      %v693 = vadd.f32 0.0, %v692
      %v694 = vpop.f32.mrf.mxu0
      %v695 = vadd.f32 0.0, %v694
      %696 = vmatmul.bf16.gmra.mxu0 %v631
      %v697 = vpop.f32.mrf.mxu0
      %v698 = vadd.f32 0.0, %v697
      %v699 = vpop.f32.mrf.mxu0
      %v700 = vadd.f32 0.0, %v699
      %701 = vmatmul.bf16.gmra.mxu0 %v634
      %v702 = vpop.f32.mrf.mxu0
      %v703 = vadd.f32 0.0, %v702
      %v704 = vpop.f32.mrf.mxu0
      %v705 = vadd.f32 0.0, %v704
      %706 = vmatmul.bf16.gmra.mxu0 %v637
      %v707 = vpop.f32.mrf.mxu0
      %v708 = vadd.f32 0.0, %v707
      %v709 = vpop.f32.mrf.mxu0
      %v710 = vadd.f32 0.0, %v709
      %711 = vdwg.mxu0
      %v712 = vlaneseq
      %v713 = vand.u32 %v712, 127
      %vm714 = vcmp.lt.s32.totalorder %v713, 17
      %v715 = vsel %vm714, %v496, -inf
      %v716 = vsel %vm714, %v498, -inf
      %v717 = vsel %vm714, %v501, -inf
      %v718 = vsel %vm714, %v503, -inf
      %v719 = vsel %vm714, %v506, -inf
      %v720 = vsel %vm714, %v508, -inf
      %v721 = vsel %vm714, %v511, -inf
      %v722 = vsel %vm714, %v513, -inf
      %v723 = vsel %vm714, %v516, -inf
      %v724 = vsel %vm714, %v518, -inf
      %v725 = vsel %vm714, %v521, -inf
      %v726 = vsel %vm714, %v523, -inf
      %v727 = vsel %vm714, %v526, -inf
      %v728 = vsel %vm714, %v528, -inf
      %v729 = vsel %vm714, %v531, -inf
      %v730 = vsel %vm714, %v533, -inf
      %v731 = vsel %vm714, %v673, -inf
      %v732 = vsel %vm714, %v675, -inf
      %v733 = vsel %vm714, %v678, -inf
      %v734 = vsel %vm714, %v680, -inf
      %v735 = vsel %vm714, %v683, -inf
      %v736 = vsel %vm714, %v685, -inf
      %v737 = vsel %vm714, %v688, -inf
      %v738 = vsel %vm714, %v690, -inf
      %v739 = vsel %vm714, %v693, -inf
      %v740 = vsel %vm714, %v695, -inf
      %v741 = vsel %vm714, %v698, -inf
      %v742 = vsel %vm714, %v700, -inf
      %v743 = vsel %vm714, %v703, -inf
      %v744 = vsel %vm714, %v705, -inf
      %v745 = vsel %vm714, %v708, -inf
      %v746 = vsel %vm714, %v710, -inf
      %747 = vmax.xlane.f32.xlu0 %v715
      %v748 = vpop.xlane.xlu0 %747
      %749 = vmax.xlane.f32.xlu0 %v716
      %v750 = vpop.xlane.xlu0 %749
      %751 = vmax.xlane.f32.xlu0 %v717
      %v752 = vpop.xlane.xlu0 %751
      %753 = vmax.xlane.f32.xlu0 %v718
      %v754 = vpop.xlane.xlu0 %753
      %755 = vmax.xlane.f32.xlu0 %v719
      %v756 = vpop.xlane.xlu0 %755
      %757 = vmax.xlane.f32.xlu0 %v720
      %v758 = vpop.xlane.xlu0 %757
      %759 = vmax.xlane.f32.xlu0 %v721
      %v760 = vpop.xlane.xlu0 %759
      %761 = vmax.xlane.f32.xlu0 %v722
      %v762 = vpop.xlane.xlu0 %761
      %763 = vmax.xlane.f32.xlu0 %v723
      %v764 = vpop.xlane.xlu0 %763
      %765 = vmax.xlane.f32.xlu0 %v724
      %v766 = vpop.xlane.xlu0 %765
      %767 = vmax.xlane.f32.xlu0 %v725
      %v768 = vpop.xlane.xlu0 %767
      %769 = vmax.xlane.f32.xlu0 %v726
      %v770 = vpop.xlane.xlu0 %769
      %771 = vmax.xlane.f32.xlu0 %v727
      %v772 = vpop.xlane.xlu0 %771
      %773 = vmax.xlane.f32.xlu0 %v728
      %v774 = vpop.xlane.xlu0 %773
      %775 = vmax.xlane.f32.xlu0 %v729
      %v776 = vpop.xlane.xlu0 %775
      %777 = vmax.xlane.f32.xlu0 %v730
      %v778 = vpop.xlane.xlu0 %777
      %779 = vmax.xlane.f32.xlu0 %v731
      %v780 = vpop.xlane.xlu0 %779
      %781 = vmax.xlane.f32.xlu0 %v732
      %v782 = vpop.xlane.xlu0 %781
      %783 = vmax.xlane.f32.xlu0 %v733
      %v784 = vpop.xlane.xlu0 %783
      %785 = vmax.xlane.f32.xlu0 %v734
      %v786 = vpop.xlane.xlu0 %785
      %787 = vmax.xlane.f32.xlu0 %v735
      %v788 = vpop.xlane.xlu0 %787
      %789 = vmax.xlane.f32.xlu0 %v736
      %v790 = vpop.xlane.xlu0 %789
      %791 = vmax.xlane.f32.xlu0 %v737
      %v792 = vpop.xlane.xlu0 %791
      %793 = vmax.xlane.f32.xlu0 %v738
      %v794 = vpop.xlane.xlu0 %793
      %795 = vmax.xlane.f32.xlu0 %v739
      %v796 = vpop.xlane.xlu0 %795
      %797 = vmax.xlane.f32.xlu0 %v740
      %v798 = vpop.xlane.xlu0 %797
      %799 = vmax.xlane.f32.xlu0 %v741
      %v800 = vpop.xlane.xlu0 %799
      %801 = vmax.xlane.f32.xlu0 %v742
      %v802 = vpop.xlane.xlu0 %801
      %803 = vmax.xlane.f32.xlu0 %v743
      %v804 = vpop.xlane.xlu0 %803
      %805 = vmax.xlane.f32.xlu0 %v744
      %v806 = vpop.xlane.xlu0 %805
      %807 = vmax.xlane.f32.xlu0 %v745
      %v808 = vpop.xlane.xlu0 %807
      %809 = vmax.xlane.f32.xlu0 %v746
      %v810 = vpop.xlane.xlu0 %809
      %v811 = vsub.f32 %v715, %v748
      %v812 = vsub.f32 %v716, %v750
      %v813 = vsub.f32 %v717, %v752
      %v814 = vsub.f32 %v718, %v754
      %v815 = vsub.f32 %v719, %v756
      %v816 = vsub.f32 %v720, %v758
      %v817 = vsub.f32 %v721, %v760
      %v818 = vsub.f32 %v722, %v762
      %v819 = vsub.f32 %v723, %v764
      %v820 = vsub.f32 %v724, %v766
      %v821 = vsub.f32 %v725, %v768
      %v822 = vsub.f32 %v726, %v770
      %v823 = vsub.f32 %v727, %v772
      %v824 = vsub.f32 %v728, %v774
      %v825 = vsub.f32 %v729, %v776
      %v826 = vsub.f32 %v730, %v778
      %v827 = vsub.f32 %v731, %v780
      %v828 = vsub.f32 %v732, %v782
      %v829 = vsub.f32 %v733, %v784
      %v830 = vsub.f32 %v734, %v786
      %v831 = vsub.f32 %v735, %v788
      %v832 = vsub.f32 %v736, %v790
      %v833 = vsub.f32 %v737, %v792
      %v834 = vsub.f32 %v738, %v794
      %v835 = vsub.f32 %v739, %v796
      %v836 = vsub.f32 %v740, %v798
      %v837 = vsub.f32 %v741, %v800
      %v838 = vsub.f32 %v742, %v802
      %v839 = vsub.f32 %v743, %v804
      %v840 = vsub.f32 %v744, %v806
      %v841 = vsub.f32 %v745, %v808
      %v842 = vsub.f32 %v746, %v810
      %v843 = vmul.f32 %v811, 1.442695
      %v844 = vpow.pop %v843
      %v845 = vmul.f32 %v812, 1.442695
      %v846 = vpow.pop %v845
      %v847 = vmul.f32 %v813, 1.442695
      %v848 = vpow.pop %v847
      %v849 = vmul.f32 %v814, 1.442695
      %v850 = vpow.pop %v849
      %v851 = vmul.f32 %v815, 1.442695
      %v852 = vpow.pop %v851
      %v853 = vmul.f32 %v816, 1.442695
      %v854 = vpow.pop %v853
      %v855 = vmul.f32 %v817, 1.442695
      %v856 = vpow.pop %v855
      %v857 = vmul.f32 %v818, 1.442695
      %v858 = vpow.pop %v857
      %v859 = vmul.f32 %v819, 1.442695
      %v860 = vpow.pop %v859
      %v861 = vmul.f32 %v820, 1.442695
      %v862 = vpow.pop %v861
      %v863 = vmul.f32 %v821, 1.442695
      %v864 = vpow.pop %v863
      %v865 = vmul.f32 %v822, 1.442695
      %v866 = vpow.pop %v865
      %v867 = vmul.f32 %v823, 1.442695
      %v868 = vpow.pop %v867
      %v869 = vmul.f32 %v824, 1.442695
      %v870 = vpow.pop %v869
      %v871 = vmul.f32 %v825, 1.442695
      %v872 = vpow.pop %v871
      %v873 = vmul.f32 %v826, 1.442695
      %v874 = vpow.pop %v873
      %v875 = vmul.f32 %v827, 1.442695
      %v876 = vpow.pop %v875
      %v877 = vmul.f32 %v828, 1.442695
      %v878 = vpow.pop %v877
      %v879 = vmul.f32 %v829, 1.442695
      %v880 = vpow.pop %v879
      %v881 = vmul.f32 %v830, 1.442695
      %v882 = vpow.pop %v881
      %v883 = vmul.f32 %v831, 1.442695
      %v884 = vpow.pop %v883
      %v885 = vmul.f32 %v832, 1.442695
      %v886 = vpow.pop %v885
      %v887 = vmul.f32 %v833, 1.442695
      %v888 = vpow.pop %v887
      %v889 = vmul.f32 %v834, 1.442695
      %v890 = vpow.pop %v889
      %v891 = vmul.f32 %v835, 1.442695
      %v892 = vpow.pop %v891
      %v893 = vmul.f32 %v836, 1.442695
      %v894 = vpow.pop %v893
      %v895 = vmul.f32 %v837, 1.442695
      %v896 = vpow.pop %v895
      %v897 = vmul.f32 %v838, 1.442695
      %v898 = vpow.pop %v897
      %v899 = vmul.f32 %v839, 1.442695
      %v900 = vpow.pop %v899
      %v901 = vmul.f32 %v840, 1.442695
      %v902 = vpow.pop %v901
      %v903 = vmul.f32 %v841, 1.442695
      %v904 = vpow.pop %v903
      %v905 = vmul.f32 %v842, 1.442695
      %v906 = vpow.pop %v905
      %907 = vadd.xlane.f32.xlu0 %v844
      %v908 = vpop.xlane.xlu0 %907
      %909 = vadd.xlane.f32.xlu0 %v846
      %v910 = vpop.xlane.xlu0 %909
      %911 = vadd.xlane.f32.xlu0 %v848
      %v912 = vpop.xlane.xlu0 %911
      %913 = vadd.xlane.f32.xlu0 %v850
      %v914 = vpop.xlane.xlu0 %913
      %915 = vadd.xlane.f32.xlu0 %v852
      %v916 = vpop.xlane.xlu0 %915
      %917 = vadd.xlane.f32.xlu0 %v854
      %v918 = vpop.xlane.xlu0 %917
      %919 = vadd.xlane.f32.xlu0 %v856
      %v920 = vpop.xlane.xlu0 %919
      %921 = vadd.xlane.f32.xlu0 %v858
      %v922 = vpop.xlane.xlu0 %921
      %923 = vadd.xlane.f32.xlu0 %v860
      %v924 = vpop.xlane.xlu0 %923
      %925 = vadd.xlane.f32.xlu0 %v862
      %v926 = vpop.xlane.xlu0 %925
      %927 = vadd.xlane.f32.xlu0 %v864
      %v928 = vpop.xlane.xlu0 %927
      %929 = vadd.xlane.f32.xlu0 %v866
      %v930 = vpop.xlane.xlu0 %929
      %931 = vadd.xlane.f32.xlu0 %v868
      %v932 = vpop.xlane.xlu0 %931
      %933 = vadd.xlane.f32.xlu0 %v870
      %v934 = vpop.xlane.xlu0 %933
      %935 = vadd.xlane.f32.xlu0 %v872
      %v936 = vpop.xlane.xlu0 %935
      %937 = vadd.xlane.f32.xlu0 %v874
      %v938 = vpop.xlane.xlu0 %937
      %939 = vadd.xlane.f32.xlu0 %v876
      %v940 = vpop.xlane.xlu0 %939
      %941 = vadd.xlane.f32.xlu0 %v878
      %v942 = vpop.xlane.xlu0 %941
      %943 = vadd.xlane.f32.xlu0 %v880
      %v944 = vpop.xlane.xlu0 %943
      %945 = vadd.xlane.f32.xlu0 %v882
      %v946 = vpop.xlane.xlu0 %945
      %947 = vadd.xlane.f32.xlu0 %v884
      %v948 = vpop.xlane.xlu0 %947
      %949 = vadd.xlane.f32.xlu0 %v886
      %v950 = vpop.xlane.xlu0 %949
      %951 = vadd.xlane.f32.xlu0 %v888
      %v952 = vpop.xlane.xlu0 %951
      %953 = vadd.xlane.f32.xlu0 %v890
      %v954 = vpop.xlane.xlu0 %953
      %955 = vadd.xlane.f32.xlu0 %v892
      %v956 = vpop.xlane.xlu0 %955
      %957 = vadd.xlane.f32.xlu0 %v894
      %v958 = vpop.xlane.xlu0 %957
      %959 = vadd.xlane.f32.xlu0 %v896
      %v960 = vpop.xlane.xlu0 %959
      %961 = vadd.xlane.f32.xlu0 %v898
      %v962 = vpop.xlane.xlu0 %961
      %963 = vadd.xlane.f32.xlu0 %v900
      %v964 = vpop.xlane.xlu0 %963
      %965 = vadd.xlane.f32.xlu0 %v902
      %v966 = vpop.xlane.xlu0 %965
      %967 = vadd.xlane.f32.xlu0 %v904
      %v968 = vpop.xlane.xlu0 %967
      %969 = vadd.xlane.f32.xlu0 %v906
      %v970 = vpop.xlane.xlu0 %969
      %v971 = vrcp.pop %v908
      %v972 = vrcp.pop %v910
      %v973 = vrcp.pop %v912
      %v974 = vrcp.pop %v914
      %v975 = vrcp.pop %v916
      %v976 = vrcp.pop %v918
      %v977 = vrcp.pop %v920
      %v978 = vrcp.pop %v922
      %v979 = vrcp.pop %v924
      %v980 = vrcp.pop %v926
      %v981 = vrcp.pop %v928
      %v982 = vrcp.pop %v930
      %v983 = vrcp.pop %v932
      %v984 = vrcp.pop %v934
      %v985 = vrcp.pop %v936
      %v986 = vrcp.pop %v938
      %v987 = vrcp.pop %v940
      %v988 = vrcp.pop %v942
      %v989 = vrcp.pop %v944
      %v990 = vrcp.pop %v946
      %v991 = vrcp.pop %v948
      %v992 = vrcp.pop %v950
      %v993 = vrcp.pop %v952
      %v994 = vrcp.pop %v954
      %v995 = vrcp.pop %v956
      %v996 = vrcp.pop %v958
      %v997 = vrcp.pop %v960
      %v998 = vrcp.pop %v962
      %v999 = vrcp.pop %v964
      %v1000 = vrcp.pop %v966
      %v1001 = vrcp.pop %v968
      %v1002 = vrcp.pop %v970
      %v1003 = vmul.f32 %v844, %v971
      %v1004 = vmul.f32 %v846, %v972
      %v1005 = vmul.f32 %v848, %v973
      %v1006 = vmul.f32 %v850, %v974
      %v1007 = vmul.f32 %v852, %v975
      %v1008 = vmul.f32 %v854, %v976
      %v1009 = vmul.f32 %v856, %v977
      %v1010 = vmul.f32 %v858, %v978
      %v1011 = vmul.f32 %v860, %v979
      %v1012 = vmul.f32 %v862, %v980
      %v1013 = vmul.f32 %v864, %v981
      %v1014 = vmul.f32 %v866, %v982
      %v1015 = vmul.f32 %v868, %v983
      %v1016 = vmul.f32 %v870, %v984
      %v1017 = vmul.f32 %v872, %v985
      %v1018 = vmul.f32 %v874, %v986
      %v1019 = vmul.f32 %v876, %v987
      %v1020 = vmul.f32 %v878, %v988
      %v1021 = vmul.f32 %v880, %v989
      %v1022 = vmul.f32 %v882, %v990
      %v1023 = vmul.f32 %v884, %v991
      %v1024 = vmul.f32 %v886, %v992
      %v1025 = vmul.f32 %v888, %v993
      %v1026 = vmul.f32 %v890, %v994
      %v1027 = vmul.f32 %v892, %v995
      %v1028 = vmul.f32 %v894, %v996
      %v1029 = vmul.f32 %v896, %v997
      %v1030 = vmul.f32 %v898, %v998
      %v1031 = vmul.f32 %v900, %v999
      %v1032 = vmul.f32 %v902, %v1000
      %v1033 = vmul.f32 %v904, %v1001
      %v1034 = vmul.f32 %v906, %v1002
      %v1035 = vpack.c.bf16 %v1003, %v1003
      %v1036 = vpack.c.bf16 %v1004, %v1004
      %v1037 = vpack.c.bf16 %v1005, %v1005
      %v1038 = vpack.c.bf16 %v1006, %v1006
      %v1039 = vpack.c.bf16 %v1007, %v1007
      %v1040 = vpack.c.bf16 %v1008, %v1008
      %v1041 = vpack.c.bf16 %v1009, %v1009
      %v1042 = vpack.c.bf16 %v1010, %v1010
      %v1043 = vpack.c.bf16 %v1011, %v1011
      %v1044 = vpack.c.bf16 %v1012, %v1012
      %v1045 = vpack.c.bf16 %v1013, %v1013
      %v1046 = vpack.c.bf16 %v1014, %v1014
      %v1047 = vpack.c.bf16 %v1015, %v1015
      %v1048 = vpack.c.bf16 %v1016, %v1016
      %v1049 = vpack.c.bf16 %v1017, %v1017
      %v1050 = vpack.c.bf16 %v1018, %v1018
      %v1051 = vpack.c.bf16 %v1019, %v1019
      %v1052 = vpack.c.bf16 %v1020, %v1020
      %v1053 = vpack.c.bf16 %v1021, %v1021
      %v1054 = vpack.c.bf16 %v1022, %v1022
      %v1055 = vpack.c.bf16 %v1023, %v1023
      %v1056 = vpack.c.bf16 %v1024, %v1024
      %v1057 = vpack.c.bf16 %v1025, %v1025
      %v1058 = vpack.c.bf16 %v1026, %v1026
      %v1059 = vpack.c.bf16 %v1027, %v1027
      %v1060 = vpack.c.bf16 %v1028, %v1028
      %v1061 = vpack.c.bf16 %v1029, %v1029
      %v1062 = vpack.c.bf16 %v1030, %v1030
      %v1063 = vpack.c.bf16 %v1031, %v1031
      %v1064 = vpack.c.bf16 %v1032, %v1032
      %v1065 = vpack.c.bf16 %v1033, %v1033
      %v1066 = vpack.c.bf16 %v1034, %v1034
      %v1067 = vld [vmem:[%s280] sm:$0xf]
      %v1068 = vld [vmem:[%s280 + $0x4] sm:$0xf]
      %v1069 = vld [vmem:[%s280 + $0x8] sm:$0xf]
      %v1070 = vld [vmem:[%s280 + $0xc] sm:$0xf]
      %v1071 = vld [vmem:[%s280 + $0x10] sm:$0xf]
      %v1072 = vld [vmem:[%s280 + $0x14] sm:$0xf]
      %v1073 = vld [vmem:[%s280 + $0x18] sm:$0xf]
      %v1074 = vld [vmem:[%s280 + $0x1c] sm:$0xf]
      %v1075 = vld [vmem:[%s280 + $0x20] sm:$0xf]
      %v1076 = vld [vmem:[%s280 + $0x24] sm:$0xf]
      %v1077 = vld [vmem:[%s280 + $0x28] sm:$0xf]
      %v1078 = vld [vmem:[%s280 + $0x2c] sm:$0xf]
      %v1079 = vld [vmem:[%s280 + $0x30] sm:$0xf]
      %v1080 = vld [vmem:[%s280 + $0x34] sm:$0xf]
      %v1081 = vld [vmem:[%s280 + $0x38] sm:$0xf]
      %v1082 = vld [vmem:[%s280 + $0x3c] sm:$0xf]
      %v1083 = vld [vmem:[%s280 + $0x40] sm:$0xf]
      %v1084 = vld [vmem:[%s280 + $0x44] sm:$0xf]
      %v1085 = vld [vmem:[%s280 + $0x48] sm:$0xf]
      %v1086 = vld [vmem:[%s280 + $0x4c] sm:$0xf]
      %v1087 = vld [vmem:[%s280 + $0x50] sm:$0xf]
      %v1088 = vld [vmem:[%s280 + $0x54] sm:$0xf]
      %v1089 = vld [vmem:[%s280 + $0x58] sm:$0xf]
      %v1090 = vld [vmem:[%s280 + $0x5c] sm:$0xf]
      %v1091 = vld [vmem:[%s280 + $0x60] sm:$0xf]
      %v1092 = vld [vmem:[%s280 + $0x64] sm:$0xf]
      %v1093 = vld [vmem:[%s280 + $0x68] sm:$0xf]
      %v1094 = vld [vmem:[%s280 + $0x6c] sm:$0xf]
      %v1095 = vld [vmem:[%s280 + $0x70] sm:$0xf]
      %v1096 = vld [vmem:[%s280 + $0x74] sm:$0xf]
      %v1097 = vld [vmem:[%s280 + $0x78] sm:$0xf]
      %v1098 = vld [vmem:[%s280 + $0x7c] sm:$0xf]
      %v1115 = vunpack.c.l.b16 %v1035
      %v1116 = vunpack.c.l.b16 %v1036
      %v1117 = vunpack.c.l.b16 %v1037
      %v1118 = vunpack.c.l.b16 %v1038
      %v1119 = vunpack.c.l.b16 %v1039
      %v1120 = vunpack.c.l.b16 %v1040
      %v1121 = vunpack.c.l.b16 %v1041
      %v1122 = vunpack.c.l.b16 %v1042
      %v1123 = vunpack.c.l.b16 %v1043
      %v1124 = vunpack.c.l.b16 %v1044
      %v1125 = vunpack.c.l.b16 %v1045
      %v1126 = vunpack.c.l.b16 %v1046
      %v1127 = vunpack.c.l.b16 %v1047
      %v1128 = vunpack.c.l.b16 %v1048
      %v1129 = vunpack.c.l.b16 %v1049
      %v1130 = vunpack.c.l.b16 %v1050
      %v1131 = vpack.c.b16 %v1116, %v1115
      %v1132 = vpack.c.b16 %v1118, %v1117
      %v1133 = vpack.c.b16 %v1120, %v1119
      %v1134 = vpack.c.b16 %v1122, %v1121
      %v1135 = vpack.c.b16 %v1124, %v1123
      %v1136 = vpack.c.b16 %v1126, %v1125
      %v1137 = vpack.c.b16 %v1128, %v1127
      %v1138 = vpack.c.b16 %v1130, %v1129
      %v1163 = vunpack.c.l.b16 %v1067
      %v1164 = vunpack.c.l.b16 %v1068
      %v1165 = vunpack.c.l.b16 %v1069
      %v1166 = vunpack.c.l.b16 %v1070
      %v1167 = vunpack.c.l.b16 %v1071
      %v1168 = vunpack.c.l.b16 %v1072
      %v1169 = vunpack.c.l.b16 %v1073
      %v1170 = vunpack.c.l.b16 %v1074
      %v1171 = vunpack.c.l.b16 %v1075
      %v1172 = vunpack.c.l.b16 %v1076
      %v1173 = vunpack.c.l.b16 %v1077
      %v1174 = vunpack.c.l.b16 %v1078
      %v1175 = vunpack.c.l.b16 %v1079
      %v1176 = vunpack.c.l.b16 %v1080
      %v1177 = vunpack.c.l.b16 %v1081
      %v1178 = vunpack.c.l.b16 %v1082
      %v1179 = vpack.c.b16 %v1164, %v1163
      %v1180 = vpack.c.b16 %v1166, %v1165
      %v1181 = vpack.c.b16 %v1168, %v1167
      %v1182 = vpack.c.b16 %v1170, %v1169
      %v1183 = vpack.c.b16 %v1172, %v1171
      %v1184 = vpack.c.b16 %v1174, %v1173
      %v1185 = vpack.c.b16 %v1176, %v1175
      %v1186 = vpack.c.b16 %v1178, %v1177
      %1195 = vmatpush.bf16.msra.mxu0 %v1186
      %1196 = vmatpush.bf16.msra.mxu0 %v1185
      %1197 = vmatpush.bf16.msra.mxu0 %v1184
      %1198 = vmatpush.bf16.msra.mxu0 %v1183
      %1199 = vmatpush.bf16.msra.mxu0 %v1182
      %1200 = vmatpush.bf16.msra.mxu0 %v1181
      %1201 = vmatpush.bf16.msra.mxu0 %v1180
      %1202 = vmatpush.bf16.msra.mxu0 %v1179
      %1203 = vmatmul.bf16.gmra.mxu0 %v1131
      %v1204 = vpop.f32.mrf.mxu0
      %v1205 = vadd.f32 0.0, %v1204
      %v1206 = vpop.f32.mrf.mxu0
      %v1207 = vadd.f32 0.0, %v1206
      %1208 = vmatmul.bf16.gmra.mxu0 %v1132
      %v1209 = vpop.f32.mrf.mxu0
      %v1210 = vadd.f32 0.0, %v1209
      %v1211 = vpop.f32.mrf.mxu0
      %v1212 = vadd.f32 0.0, %v1211
      %1213 = vmatmul.bf16.gmra.mxu0 %v1133
      %v1214 = vpop.f32.mrf.mxu0
      %v1215 = vadd.f32 0.0, %v1214
      %v1216 = vpop.f32.mrf.mxu0
      %v1217 = vadd.f32 0.0, %v1216
      %1218 = vmatmul.bf16.gmra.mxu0 %v1134
      %v1219 = vpop.f32.mrf.mxu0
      %v1220 = vadd.f32 0.0, %v1219
      %v1221 = vpop.f32.mrf.mxu0
      %v1222 = vadd.f32 0.0, %v1221
      %1223 = vmatmul.bf16.gmra.mxu0 %v1135
      %v1224 = vpop.f32.mrf.mxu0
      %v1225 = vadd.f32 0.0, %v1224
      %v1226 = vpop.f32.mrf.mxu0
      %v1227 = vadd.f32 0.0, %v1226
      %1228 = vmatmul.bf16.gmra.mxu0 %v1136
      %v1229 = vpop.f32.mrf.mxu0
      %v1230 = vadd.f32 0.0, %v1229
      %v1231 = vpop.f32.mrf.mxu0
      %v1232 = vadd.f32 0.0, %v1231
      %1233 = vmatmul.bf16.gmra.mxu0 %v1137
      %v1234 = vpop.f32.mrf.mxu0
      %v1235 = vadd.f32 0.0, %v1234
      %v1236 = vpop.f32.mrf.mxu0
      %v1237 = vadd.f32 0.0, %v1236
      %1238 = vmatmul.bf16.gmra.mxu0 %v1138
      %v1239 = vpop.f32.mrf.mxu0
      %v1240 = vadd.f32 0.0, %v1239
      %v1241 = vpop.f32.mrf.mxu0
      %v1242 = vadd.f32 0.0, %v1241
      %1243 = vdwg.mxu0
      %v1260 = vunpack.c.l.b16 %v1051
      %v1261 = vunpack.c.l.b16 %v1052
      %v1262 = vunpack.c.l.b16 %v1053
      %v1263 = vunpack.c.l.b16 %v1054
      %v1264 = vunpack.c.l.b16 %v1055
      %v1265 = vunpack.c.l.b16 %v1056
      %v1266 = vunpack.c.l.b16 %v1057
      %v1267 = vunpack.c.l.b16 %v1058
      %v1268 = vunpack.c.l.b16 %v1059
      %v1269 = vunpack.c.l.b16 %v1060
      %v1270 = vunpack.c.l.b16 %v1061
      %v1271 = vunpack.c.l.b16 %v1062
      %v1272 = vunpack.c.l.b16 %v1063
      %v1273 = vunpack.c.l.b16 %v1064
      %v1274 = vunpack.c.l.b16 %v1065
      %v1275 = vunpack.c.l.b16 %v1066
      %v1276 = vpack.c.b16 %v1261, %v1260
      %v1277 = vpack.c.b16 %v1263, %v1262
      %v1278 = vpack.c.b16 %v1265, %v1264
      %v1279 = vpack.c.b16 %v1267, %v1266
      %v1280 = vpack.c.b16 %v1269, %v1268
      %v1281 = vpack.c.b16 %v1271, %v1270
      %v1282 = vpack.c.b16 %v1273, %v1272
      %v1283 = vpack.c.b16 %v1275, %v1274
      %v1308 = vunpack.c.l.b16 %v1083
      %v1309 = vunpack.c.l.b16 %v1084
      %v1310 = vunpack.c.l.b16 %v1085
      %v1311 = vunpack.c.l.b16 %v1086
      %v1312 = vunpack.c.l.b16 %v1087
      %v1313 = vunpack.c.l.b16 %v1088
      %v1314 = vunpack.c.l.b16 %v1089
      %v1315 = vunpack.c.l.b16 %v1090
      %v1316 = vunpack.c.l.b16 %v1091
      %v1317 = vunpack.c.l.b16 %v1092
      %v1318 = vunpack.c.l.b16 %v1093
      %v1319 = vunpack.c.l.b16 %v1094
      %v1320 = vunpack.c.l.b16 %v1095
      %v1321 = vunpack.c.l.b16 %v1096
      %v1322 = vunpack.c.l.b16 %v1097
      %v1323 = vunpack.c.l.b16 %v1098
      %v1324 = vpack.c.b16 %v1309, %v1308
      %v1325 = vpack.c.b16 %v1311, %v1310
      %v1326 = vpack.c.b16 %v1313, %v1312
      %v1327 = vpack.c.b16 %v1315, %v1314
      %v1328 = vpack.c.b16 %v1317, %v1316
      %v1329 = vpack.c.b16 %v1319, %v1318
      %v1330 = vpack.c.b16 %v1321, %v1320
      %v1331 = vpack.c.b16 %v1323, %v1322
      %1340 = vmatpush.bf16.msra.mxu0 %v1331
      %1341 = vmatpush.bf16.msra.mxu0 %v1330
      %1342 = vmatpush.bf16.msra.mxu0 %v1329
      %1343 = vmatpush.bf16.msra.mxu0 %v1328
      %1344 = vmatpush.bf16.msra.mxu0 %v1327
      %1345 = vmatpush.bf16.msra.mxu0 %v1326
      %1346 = vmatpush.bf16.msra.mxu0 %v1325
      %1347 = vmatpush.bf16.msra.mxu0 %v1324
      %1348 = vmatmul.bf16.gmra.mxu0 %v1276
      %v1349 = vpop.f32.mrf.mxu0
      %v1350 = vadd.f32 0.0, %v1349
      %v1351 = vpop.f32.mrf.mxu0
      %v1352 = vadd.f32 0.0, %v1351
      %1353 = vmatmul.bf16.gmra.mxu0 %v1277
      %v1354 = vpop.f32.mrf.mxu0
      %v1355 = vadd.f32 0.0, %v1354
      %v1356 = vpop.f32.mrf.mxu0
      %v1357 = vadd.f32 0.0, %v1356
      %1358 = vmatmul.bf16.gmra.mxu0 %v1278
      %v1359 = vpop.f32.mrf.mxu0
      %v1360 = vadd.f32 0.0, %v1359
      %v1361 = vpop.f32.mrf.mxu0
      %v1362 = vadd.f32 0.0, %v1361
      %1363 = vmatmul.bf16.gmra.mxu0 %v1279
      %v1364 = vpop.f32.mrf.mxu0
      %v1365 = vadd.f32 0.0, %v1364
      %v1366 = vpop.f32.mrf.mxu0
      %v1367 = vadd.f32 0.0, %v1366
      %1368 = vmatmul.bf16.gmra.mxu0 %v1280
      %v1369 = vpop.f32.mrf.mxu0
      %v1370 = vadd.f32 0.0, %v1369
      %v1371 = vpop.f32.mrf.mxu0
      %v1372 = vadd.f32 0.0, %v1371
      %1373 = vmatmul.bf16.gmra.mxu0 %v1281
      %v1374 = vpop.f32.mrf.mxu0
      %v1375 = vadd.f32 0.0, %v1374
      %v1376 = vpop.f32.mrf.mxu0
      %v1377 = vadd.f32 0.0, %v1376
      %1378 = vmatmul.bf16.gmra.mxu0 %v1282
      %v1379 = vpop.f32.mrf.mxu0
      %v1380 = vadd.f32 0.0, %v1379
      %v1381 = vpop.f32.mrf.mxu0
      %v1382 = vadd.f32 0.0, %v1381
      %1383 = vmatmul.bf16.gmra.mxu0 %v1283
      %v1384 = vpop.f32.mrf.mxu0
      %v1385 = vadd.f32 0.0, %v1384
      %v1386 = vpop.f32.mrf.mxu0
      %v1387 = vadd.f32 0.0, %v1386
      %1388 = vdwg.mxu0
      %v1389 = vpack.c.bf16 %v1205, %v1205
      %v1390 = vpack.c.bf16 %v1207, %v1207
      %v1391 = vpack.c.bf16 %v1210, %v1210
      %v1392 = vpack.c.bf16 %v1212, %v1212
      %v1393 = vpack.c.bf16 %v1215, %v1215
      %v1394 = vpack.c.bf16 %v1217, %v1217
      %v1395 = vpack.c.bf16 %v1220, %v1220
      %v1396 = vpack.c.bf16 %v1222, %v1222
      %v1397 = vpack.c.bf16 %v1225, %v1225
      %v1398 = vpack.c.bf16 %v1227, %v1227
      %v1399 = vpack.c.bf16 %v1230, %v1230
      %v1400 = vpack.c.bf16 %v1232, %v1232
      %v1401 = vpack.c.bf16 %v1235, %v1235
      %v1402 = vpack.c.bf16 %v1237, %v1237
      %v1403 = vpack.c.bf16 %v1240, %v1240
      %v1404 = vpack.c.bf16 %v1242, %v1242
      %v1405 = vpack.c.bf16 %v1350, %v1350
      %v1406 = vpack.c.bf16 %v1352, %v1352
      %v1407 = vpack.c.bf16 %v1355, %v1355
      %v1408 = vpack.c.bf16 %v1357, %v1357
      %v1409 = vpack.c.bf16 %v1360, %v1360
      %v1410 = vpack.c.bf16 %v1362, %v1362
      %v1411 = vpack.c.bf16 %v1365, %v1365
      %v1412 = vpack.c.bf16 %v1367, %v1367
      %v1413 = vpack.c.bf16 %v1370, %v1370
      %v1414 = vpack.c.bf16 %v1372, %v1372
      %v1415 = vpack.c.bf16 %v1375, %v1375
      %v1416 = vpack.c.bf16 %v1377, %v1377
      %v1417 = vpack.c.bf16 %v1380, %v1380
      %v1418 = vpack.c.bf16 %v1382, %v1382
      %v1419 = vpack.c.bf16 %v1385, %v1385
      %v1420 = vpack.c.bf16 %v1387, %v1387
      %vm1421 = vcmask 60416
      %1422 = vst.msk [vmem:[%s291] sm:$0xf] %vm1421, %v1389
      %1423 = vst.msk [vmem:[%s291 + $0x4] sm:$0xf] %vm1421, %v1390
      %1424 = vst.msk [vmem:[%s291 + $0x8] sm:$0xf] %vm1421, %v1391
      %1425 = vst.msk [vmem:[%s291 + $0xc] sm:$0xf] %vm1421, %v1392
      %1426 = vst.msk [vmem:[%s291 + $0x10] sm:$0xf] %vm1421, %v1393
      %1427 = vst.msk [vmem:[%s291 + $0x14] sm:$0xf] %vm1421, %v1394
      %1428 = vst.msk [vmem:[%s291 + $0x18] sm:$0xf] %vm1421, %v1395
      %1429 = vst.msk [vmem:[%s291 + $0x1c] sm:$0xf] %vm1421, %v1396
      %1430 = vst.msk [vmem:[%s291 + $0x20] sm:$0xf] %vm1421, %v1397
      %1431 = vst.msk [vmem:[%s291 + $0x24] sm:$0xf] %vm1421, %v1398
      %1432 = vst.msk [vmem:[%s291 + $0x28] sm:$0xf] %vm1421, %v1399
      %1433 = vst.msk [vmem:[%s291 + $0x2c] sm:$0xf] %vm1421, %v1400
      %1434 = vst.msk [vmem:[%s291 + $0x30] sm:$0xf] %vm1421, %v1401
      %1435 = vst.msk [vmem:[%s291 + $0x34] sm:$0xf] %vm1421, %v1402
      %1436 = vst.msk [vmem:[%s291 + $0x38] sm:$0xf] %vm1421, %v1403
      %1437 = vst.msk [vmem:[%s291 + $0x3c] sm:$0xf] %vm1421, %v1404
      %1438 = vst.msk [vmem:[%s291 + $0x40] sm:$0xf] %vm1421, %v1405
      %1439 = vst.msk [vmem:[%s291 + $0x44] sm:$0xf] %vm1421, %v1406
      %1440 = vst.msk [vmem:[%s291 + $0x48] sm:$0xf] %vm1421, %v1407
      %1441 = vst.msk [vmem:[%s291 + $0x4c] sm:$0xf] %vm1421, %v1408
      %1442 = vst.msk [vmem:[%s291 + $0x50] sm:$0xf] %vm1421, %v1409
      %1443 = vst.msk [vmem:[%s291 + $0x54] sm:$0xf] %vm1421, %v1410
      %1444 = vst.msk [vmem:[%s291 + $0x58] sm:$0xf] %vm1421, %v1411
      %1445 = vst.msk [vmem:[%s291 + $0x5c] sm:$0xf] %vm1421, %v1412
      %1446 = vst.msk [vmem:[%s291 + $0x60] sm:$0xf] %vm1421, %v1413
      %1447 = vst.msk [vmem:[%s291 + $0x64] sm:$0xf] %vm1421, %v1414
      %1448 = vst.msk [vmem:[%s291 + $0x68] sm:$0xf] %vm1421, %v1415
      %1449 = vst.msk [vmem:[%s291 + $0x6c] sm:$0xf] %vm1421, %v1416
      %1450 = vst.msk [vmem:[%s291 + $0x70] sm:$0xf] %vm1421, %v1417
      %1451 = vst.msk [vmem:[%s291 + $0x74] sm:$0xf] %vm1421, %v1418
      %1452 = vst.msk [vmem:[%s291 + $0x78] sm:$0xf] %vm1421, %v1419
      %1453 = vst.msk [vmem:[%s291 + $0x7c] sm:$0xf] %vm1421, %v1420
      %s1454 = smul.u32 2, %s19
      %p1455 = scmp.lt.s32.totalorder %s18, 1
      %s1456 = scalar_select %p1455, %s18, 1
      %p1457 = scmp.lt.s32.totalorder %s1454, 3
      %s1458 = scalar_select %p1457, %s1454, 3
      %s1459 = smul.addr %s1458, 16
      %s1460 = smul.addr %s1456, 64
      %s1461 = sadd.s32 %s1459, %s1460
      %s1462 = smul.addr %s1461, 4
      %s1463 = scalar_lea.vmem %s3, %s1462
      // Predicated region
      $region33: #{vit_forward.14} parent=31 // pred_check
        %p1464 = pneg %p130
      $region34: #{vit_forward.14} parent=31 // pred_check_branch
        %1466 = sbr.rel (%p1464) target = $region36
      $region35: #{vit_forward.14} parent=31 // pred_region
        %s1467 = smul.u32 2, %s19
      $region36: #{vit_forward.14} parent=31 // pred_fallthru
        _
    $region32: #{vit_forward.14} parent=5 // pred_fallthru
      _
    %p1468 = scmp.le.s32.totalorder 2, %s9
    // Predicated region
    $region37: #{vit_forward.14} parent=5 // pred_check
      %p1469 = pneg %p1468
    $region38: #{vit_forward.14} parent=5 // pred_check_branch
      %1471 = sbr.rel (%p1469) target = $region40
    $region39: #{vit_forward.14} parent=5 // pred_region
      %s1472 = ssub.s32 %s9, 2
      // Predicated region
      $region41: #{vit_forward.14} parent=39 // pred_check
        %p1473 = pneg %p136
      $region42: #{vit_forward.14} parent=39 // pred_check_branch
        %1475 = sbr.rel (%p1473) target = $region44
      $region43: #{vit_forward.14} parent=39 // pred_region
        %s1476 = smul.u32 2, %s21
        %p1477 = scmp.lt.s32.totalorder %s20, 1
        %s1478 = scalar_select %p1477, %s20, 1
        %p1479 = scmp.lt.s32.totalorder %s1476, 3
        %s1480 = scalar_select %p1479, %s1476, 3
        %s1481 = smul.addr %s1480, 16
        %s1482 = smul.addr %s1478, 64
        %s1483 = sadd.s32 %s1481, %s1482
        %s1484 = smul.addr %s1483, 4
        %s1485 = scalar_lea.vmem %s3, %s1484
      $region44: #{vit_forward.14} parent=39 // pred_fallthru
        _
    $region40: #{vit_forward.14} parent=5 // pred_fallthru
      _
  $region6: #{vit_forward.14} parent=0 // loop_footer
    %s13 = sadd.s32 1, %s9
  $region7: #{vit_forward.14} parent=0 // loop_footer_branch
    %8 = sbr.rel target = $region3
  $region8: #{vit_forward.14} parent=0 // loop_exit
    _

// kernel: vit_forward.16
$region0: #{vit_forward.16}
  #allocation0 [shape = 'u32[]', space=smem, size = 0x4, offset = 0x4, fixed_abs, tag = 'smem constant byte address 0x4 - core index']
  #allocation1 [shape = 'u32[72,128]{1,0:T(1,128)}', space=vmem, size = 0x9000, scoped, tag = 'internal scratch']
  #allocation2 [shape = 'f32[40,128]{1,0:T(8,128)}', space=vmem, size = 0x5000, scoped, tag = 'scratch operand']
  #allocation3 [shape = 'bf16[40,32]{1,0:T(8,128)(2,1)}', space=vmem, size = 0x2800, scoped, tag = 'scratch operand']
  %s0 = inlined_call_operand.vmem [shape: f32[40,32], index: 0, kind: input, shape index: {}]
  %s1 = inlined_call_operand.vmem [shape: bf16[32,128], index: 1, kind: input, shape index: {}]
  %s2 = inlined_call_operand.vmem [shape: f32[1,128], index: 2, kind: input, shape index: {}]
  %s3 = inlined_call_operand.vmem [shape: f32[1,32], index: 3, kind: input, shape index: {}]
  %s4 = inlined_call_operand.vmem [shape: f32[1,32], index: 4, kind: input, shape index: {}]
  %s5 = inlined_call_operand.vmem [shape: bf16[40,128], index: 5, kind: output, shape index: {}]
  %s6 = sld [smem:[#allocation0]]
  $region42: #{vit_forward.16} parent=0
    _
  %s8 = ssub.s32 1, %s6
  %s9 = scalar_select 0, %s8, %s6
  // Predicated region
  $region2: #{vit_forward.16} parent=0 // pred_check
    _
  $region3: #{vit_forward.16} parent=0 // pred_check_branch
    %11 = sbr.rel (0) target = $region5
  $region4: #{vit_forward.16} parent=0 // pred_region
    _
  $region5: #{vit_forward.16} parent=0 // pred_fallthru
    _
  // Predicated region
  $region6: #{vit_forward.16} parent=0 // pred_check
    _
  $region7: #{vit_forward.16} parent=0 // pred_check_branch
    %13 = sbr.rel (0) target = $region9
  $region8: #{vit_forward.16} parent=0 // pred_region
    _
  $region9: #{vit_forward.16} parent=0 // pred_fallthru
    _
  // Predicated region
  $region10: #{vit_forward.16} parent=0 // pred_check
    _
  $region11: #{vit_forward.16} parent=0 // pred_check_branch
    %15 = sbr.rel (0) target = $region13
  $region12: #{vit_forward.16} parent=0 // pred_region
    _
  $region13: #{vit_forward.16} parent=0 // pred_fallthru
    _
  // Predicated region
  $region14: #{vit_forward.16} parent=0 // pred_check
    _
  $region15: #{vit_forward.16} parent=0 // pred_check_branch
    %17 = sbr.rel (0) target = $region17
  $region16: #{vit_forward.16} parent=0 // pred_region
    _
  $region17: #{vit_forward.16} parent=0 // pred_fallthru
    _
  // Predicated region
  $region18: #{vit_forward.16} parent=0 // pred_check
    _
  $region19: #{vit_forward.16} parent=0 // pred_check_branch
    %19 = sbr.rel (0) target = $region21
  $region20: #{vit_forward.16} parent=0 // pred_region
    _
  $region21: #{vit_forward.16} parent=0 // pred_fallthru
    _
  %p21 = scmp.eq.s32.totalorder 0, 0
  // Predicated region
  $region22: #{vit_forward.16} parent=0 // pred_check
    %p22 = pneg %p21
  $region23: #{vit_forward.16} parent=0 // pred_check_branch
    %24 = sbr.rel (%p22) target = $region25
  $region24: #{vit_forward.16} parent=0 // pred_region
    %25 = vst [vmem:[#allocation2] sm:$0xff] 0.0
    %26 = vst [vmem:[#allocation2 + $0x8] sm:$0xff] 0.0
    %27 = vst [vmem:[#allocation2 + $0x10] sm:$0xff] 0.0
    %28 = vst [vmem:[#allocation2 + $0x18] sm:$0xff] 0.0
    %29 = vst [vmem:[#allocation2 + $0x20] sm:$0xff] 0.0
  $region25: #{vit_forward.16} parent=0 // pred_fallthru
    _
  %p30 = scmp.eq.s32.totalorder 0, 0
  // Predicated region
  $region26: #{vit_forward.16} parent=0 // pred_check
    %p31 = pneg %p30
  $region27: #{vit_forward.16} parent=0 // pred_check_branch
    %33 = sbr.rel (%p31) target = $region29
  $region28: #{vit_forward.16} parent=0 // pred_region
    %v34 = vld [vmem:[%s0] sm:$0xff]
    %v35 = vld [vmem:[%s0 + $0x8] sm:$0xff]
    %v36 = vld [vmem:[%s0 + $0x10] sm:$0xff]
    %v37 = vld [vmem:[%s0 + $0x18] sm:$0xff]
    %v38 = vld [vmem:[%s0 + $0x20] sm:$0xff]
    %vm39 = vcmask 261120
    %v40 = vsel %vm39, %v34, 0.0
    %41 = vadd.xlane.f32.xlu0 %v40
    %v42 = vpop.xlane.xlu0 %41
    %v43 = vsel %vm39, %v35, 0.0
    %44 = vadd.xlane.f32.xlu0 %v43
    %v45 = vpop.xlane.xlu0 %44
    %v46 = vsel %vm39, %v36, 0.0
    %47 = vadd.xlane.f32.xlu0 %v46
    %v48 = vpop.xlane.xlu0 %47
    %v49 = vsel %vm39, %v37, 0.0
    %50 = vadd.xlane.f32.xlu0 %v49
    %v51 = vpop.xlane.xlu0 %50
    %v52 = vsel %vm39, %v38, 0.0
    %53 = vadd.xlane.f32.xlu0 %v52
    %v54 = vpop.xlane.xlu0 %53
    %v55 = vrcp.pop 32.0
    %v56 = vmul.f32 32.0, %v55
    %v57 = vsub.f32 1.0, %v56
    %v58 = vmul.f32 %v55, %v57
    %v59 = vadd.f32 %v55, %v58
    %vm60 = vweird.f32 %v55
    %v61 = vsel %vm60, %v55, %v59
    %v62 = vmul.f32 %v42, %v61
    %v63 = vmul.f32 %v45, %v61
    %v64 = vmul.f32 %v48, %v61
    %v65 = vmul.f32 %v51, %v61
    %v66 = vmul.f32 %v54, %v61
    %v67 = vsub.f32 %v34, %v62
    %v68 = vsub.f32 %v35, %v63
    %v69 = vsub.f32 %v36, %v64
    %v70 = vsub.f32 %v37, %v65
    %v71 = vsub.f32 %v38, %v66
    %v72 = vmul.f32 %v67, %v67
    %v73 = vmul.f32 %v68, %v68
    %v74 = vmul.f32 %v69, %v69
    %v75 = vmul.f32 %v70, %v70
    %v76 = vmul.f32 %v71, %v71
    %v77 = vsel %vm39, %v72, 0.0
    %78 = vadd.xlane.f32.xlu0 %v77
    %v79 = vpop.xlane.xlu0 %78
    %v80 = vsel %vm39, %v73, 0.0
    %81 = vadd.xlane.f32.xlu0 %v80
    %v82 = vpop.xlane.xlu0 %81
    %v83 = vsel %vm39, %v74, 0.0
    %84 = vadd.xlane.f32.xlu0 %v83
    %v85 = vpop.xlane.xlu0 %84
    %v86 = vsel %vm39, %v75, 0.0
    %87 = vadd.xlane.f32.xlu0 %v86
    %v88 = vpop.xlane.xlu0 %87
    %v89 = vsel %vm39, %v76, 0.0
    %90 = vadd.xlane.f32.xlu0 %v89
    %v91 = vpop.xlane.xlu0 %90
    %v92 = vmul.f32 %v79, %v61
    %v93 = vmul.f32 %v82, %v61
    %v94 = vmul.f32 %v85, %v61
    %v95 = vmul.f32 %v88, %v61
    %v96 = vmul.f32 %v91, %v61
    %v97 = vadd.f32 %v92, 1e-05
    %v98 = vadd.f32 %v93, 1e-05
    %v99 = vadd.f32 %v94, 1e-05
    %v100 = vadd.f32 %v95, 1e-05
    %v101 = vadd.f32 %v96, 1e-05
    %v102 = vrsqrt.pop %v97
    %v103 = vmul.f32 %v102, %v97
    %v104 = vmul.f32 %v103, %v102
    %v105 = vmul.f32 0.5, %v104
    %v106 = vsub.f32 1.5, %v105
    %v107 = vmul.f32 %v102, %v106
    %vm108 = vweird.f32 %v97
    %vm109 = vweird.f32 %v102
    %vm110 = vmor %vm108, %vm109
    %v111 = vsel %vm110, %v102, %v107
    %v112 = vrsqrt.pop %v98
    %v113 = vmul.f32 %v112, %v98
    %v114 = vmul.f32 %v113, %v112
    %v115 = vmul.f32 0.5, %v114
    %v116 = vsub.f32 1.5, %v115
    %v117 = vmul.f32 %v112, %v116
    %vm118 = vweird.f32 %v98
    %vm119 = vweird.f32 %v112
    %vm120 = vmor %vm118, %vm119
    %v121 = vsel %vm120, %v112, %v117
    %v122 = vrsqrt.pop %v99
    %v123 = vmul.f32 %v122, %v99
    %v124 = vmul.f32 %v123, %v122
    %v125 = vmul.f32 0.5, %v124
    %v126 = vsub.f32 1.5, %v125
    %v127 = vmul.f32 %v122, %v126
    %vm128 = vweird.f32 %v99
    %vm129 = vweird.f32 %v122
    %vm130 = vmor %vm128, %vm129
    %v131 = vsel %vm130, %v122, %v127
    %v132 = vrsqrt.pop %v100
    %v133 = vmul.f32 %v132, %v100
    %v134 = vmul.f32 %v133, %v132
    %v135 = vmul.f32 0.5, %v134
    %v136 = vsub.f32 1.5, %v135
    %v137 = vmul.f32 %v132, %v136
    %vm138 = vweird.f32 %v100
    %vm139 = vweird.f32 %v132
    %vm140 = vmor %vm138, %vm139
    %v141 = vsel %vm140, %v132, %v137
    %v142 = vrsqrt.pop %v101
    %v143 = vmul.f32 %v142, %v101
    %v144 = vmul.f32 %v143, %v142
    %v145 = vmul.f32 0.5, %v144
    %v146 = vsub.f32 1.5, %v145
    %v147 = vmul.f32 %v142, %v146
    %vm148 = vweird.f32 %v101
    %vm149 = vweird.f32 %v142
    %vm150 = vmor %vm148, %vm149
    %v151 = vsel %vm150, %v142, %v147
    %v152 = vmul.f32 %v67, %v111
    %v153 = vmul.f32 %v68, %v121
    %v154 = vmul.f32 %v69, %v131
    %v155 = vmul.f32 %v70, %v141
    %v156 = vmul.f32 %v71, %v151
    %v157 = vld [vmem:[%s3] sm:$0x1]
    %v159 = vperm.slane %v157, 0
    %v161 = vmul.f32 %v152, %v159
    %v162 = vmul.f32 %v153, %v159
    %v163 = vmul.f32 %v154, %v159
    %v164 = vmul.f32 %v155, %v159
    %v165 = vmul.f32 %v156, %v159
    %v166 = vld [vmem:[%s4] sm:$0x1]
    %v168 = vperm.slane %v166, 0
    %v170 = vadd.f32 %v161, %v168
    %v171 = vadd.f32 %v162, %v168
    %v172 = vadd.f32 %v163, %v168
    %v173 = vadd.f32 %v164, %v168
    %v174 = vadd.f32 %v165, %v168
    %v175 = vpack.c.bf16 %v170, %v170
    %v176 = vpack.c.bf16 %v171, %v171
    %v177 = vpack.c.bf16 %v172, %v172
    %v178 = vpack.c.bf16 %v173, %v173
    %v179 = vpack.c.bf16 %v174, %v174
    %vm180 = vcmask 257024
    %181 = vst.msk [vmem:[#allocation3] sm:$0xf] %vm180, %v175
    %182 = vst.msk [vmem:[#allocation3 + $0x4] sm:$0xf] %vm180, %v176
    %183 = vst.msk [vmem:[#allocation3 + $0x8] sm:$0xf] %vm180, %v177
    %184 = vst.msk [vmem:[#allocation3 + $0xc] sm:$0xf] %vm180, %v178
    %185 = vst.msk [vmem:[#allocation3 + $0x10] sm:$0xf] %vm180, %v179
  $region29: #{vit_forward.16} parent=0 // pred_fallthru
    _
  %v186 = vld [vmem:[#allocation3] sm:$0xf]
  %v187 = vld [vmem:[#allocation3 + $0x4] sm:$0xf]
  %v188 = vld [vmem:[#allocation3 + $0x8] sm:$0xf]
  %v189 = vld [vmem:[#allocation3 + $0xc] sm:$0xf]
  %v190 = vld [vmem:[#allocation3 + $0x10] sm:$0xf]
  %v191 = vld [vmem:[#allocation2] sm:$0xff]
  %v192 = vld [vmem:[#allocation2 + $0x8] sm:$0xff]
  %v193 = vld [vmem:[#allocation2 + $0x10] sm:$0xff]
  %v194 = vld [vmem:[#allocation2 + $0x18] sm:$0xff]
  %v195 = vld [vmem:[#allocation2 + $0x20] sm:$0xff]
  %v196 = vld [vmem:[%s1] sm:$0xf]
  %v197 = vld [vmem:[%s1 + $0x4] sm:$0xf]
  %v198 = vld [vmem:[%s1 + $0x8] sm:$0xf]
  %v199 = vld [vmem:[%s1 + $0xc] sm:$0xf]
  %v205 = vunpack.c.l.b16 %v186
  %v206 = vunpack.c.l.b16 %v187
  %v207 = vunpack.c.l.b16 %v188
  %v208 = vunpack.c.l.b16 %v189
  %v209 = vunpack.c.l.b16 %v190
  %v210 = vpack.c.b16 %v206, %v205
  %v211 = vpack.c.b16 %v208, %v207
  %v212 = vpack.c.b16 %v209, %v209
  %v217 = vunpack.c.l.b16 %v196
  %v218 = vunpack.c.l.b16 %v197
  %v219 = vunpack.c.l.b16 %v198
  %v220 = vunpack.c.l.b16 %v199
  %v221 = vpack.c.b16 %v218, %v217
  %v222 = vpack.c.b16 %v220, %v219
  %vm225 = vcmask 261120
  %v227 = vsel %vm225, %v210, 0
  %v230 = vsel %vm225, %v211, 0
  %v233 = vsel %vm225, %v212, 0
  %235 = vmatpush.bf16.msra.mxu0 0
  %236 = vmatpush.bf16.msra.mxu0 0
  %237 = vmatpush.bf16.msra.mxu0 0
  %238 = vmatpush.bf16.msra.mxu0 0
  %239 = vmatpush.bf16.msra.mxu0 0
  %240 = vmatpush.bf16.msra.mxu0 0
  %241 = vmatpush.bf16.msra.mxu0 %v222
  %242 = vmatpush.bf16.msra.mxu0 %v221
  %243 = vmatmul.bf16.gmra.mxu0 %v227
  %v244 = vpop.f32.mrf.mxu0
  %v245 = vadd.f32 0.0, %v244
  %v246 = vpop.f32.mrf.mxu0
  %v247 = vadd.f32 0.0, %v246
  %248 = vmatmul.bf16.gmra.mxu0 %v230
  %v249 = vpop.f32.mrf.mxu0
  %v250 = vadd.f32 0.0, %v249
  %v251 = vpop.f32.mrf.mxu0
  %v252 = vadd.f32 0.0, %v251
  %253 = vmatmul.bf16.gmra.mxu0 %v233
  %v254 = vpop.f32.mrf.mxu0
  %v255 = vadd.f32 0.0, %v254
  %v256 = vpop.f32.mrf.mxu0
  %257 = vdwg.mxu0
  %v258 = vadd.f32 %v191, %v245
  %v259 = vadd.f32 %v192, %v247
  %v260 = vadd.f32 %v193, %v250
  %v261 = vadd.f32 %v194, %v252
  %v262 = vadd.f32 %v195, %v255
  %263 = vst [vmem:[#allocation2] sm:$0xff] %v258
  %264 = vst [vmem:[#allocation2 + $0x8] sm:$0xff] %v259
  %265 = vst [vmem:[#allocation2 + $0x10] sm:$0xff] %v260
  %266 = vst [vmem:[#allocation2 + $0x18] sm:$0xff] %v261
  %267 = vst [vmem:[#allocation2 + $0x20] sm:$0xff] %v262
  // Predicated region
  $region30: #{vit_forward.16} parent=0 // pred_check
    %p268 = pneg %p21
  $region31: #{vit_forward.16} parent=0 // pred_check_branch
    %270 = sbr.rel (%p268) target = $region33
  $region32: #{vit_forward.16} parent=0 // pred_region
    %v271 = vld [vmem:[#allocation2] sm:$0xff]
    %v272 = vld [vmem:[#allocation2 + $0x8] sm:$0xff]
    %v273 = vld [vmem:[#allocation2 + $0x10] sm:$0xff]
    %v274 = vld [vmem:[#allocation2 + $0x18] sm:$0xff]
    %v275 = vld [vmem:[#allocation2 + $0x20] sm:$0xff]
    %v276 = vld [vmem:[%s2] sm:$0x1]
    %v278 = vperm.slane %v276, 0
    %v280 = vadd.f32 %v271, %v278
    %v281 = vadd.f32 %v272, %v278
    %v282 = vadd.f32 %v273, %v278
    %v283 = vadd.f32 %v274, %v278
    %v284 = vadd.f32 %v275, %v278
    %v285 = vmul.f32 %v280, %v280
    %v286 = vmul.f32 %v281, %v281
    %v287 = vmul.f32 %v282, %v282
    %v288 = vmul.f32 %v283, %v283
    %v289 = vmul.f32 %v284, %v284
    %v290 = vmul.f32 %v280, %v285
    %v291 = vmul.f32 %v281, %v286
    %v292 = vmul.f32 %v282, %v287
    %v293 = vmul.f32 %v283, %v288
    %v294 = vmul.f32 %v284, %v289
    %v295 = vmul.f32 %v290, 0.044715
    %v296 = vmul.f32 %v291, 0.044715
    %v297 = vmul.f32 %v292, 0.044715
    %v298 = vmul.f32 %v293, 0.044715
    %v299 = vmul.f32 %v294, 0.044715
    %v300 = vadd.f32 %v280, %v295
    %v301 = vadd.f32 %v281, %v296
    %v302 = vadd.f32 %v282, %v297
    %v303 = vadd.f32 %v283, %v298
    %v304 = vadd.f32 %v284, %v299
    %v305 = vmul.f32 %v300, 0.7978846
    %v306 = vmul.f32 %v301, 0.7978846
    %v307 = vmul.f32 %v302, 0.7978846
    %v308 = vmul.f32 %v303, 0.7978846
    %v309 = vmul.f32 %v304, 0.7978846
    %v310 = vtanh.pop %v305
    %v311 = vtanh.pop %v306
    %v312 = vtanh.pop %v307
    %v313 = vtanh.pop %v308
    %v314 = vtanh.pop %v309
    %v315 = vadd.f32 %v310, 1.0
    %v316 = vadd.f32 %v311, 1.0
    %v317 = vadd.f32 %v312, 1.0
    %v318 = vadd.f32 %v313, 1.0
    %v319 = vadd.f32 %v314, 1.0
    %v320 = vmul.f32 %v315, 0.5
    %v321 = vmul.f32 %v316, 0.5
    %v322 = vmul.f32 %v317, 0.5
    %v323 = vmul.f32 %v318, 0.5
    %v324 = vmul.f32 %v319, 0.5
    %v325 = vmul.f32 %v280, %v320
    %v326 = vmul.f32 %v281, %v321
    %v327 = vmul.f32 %v282, %v322
    %v328 = vmul.f32 %v283, %v323
    %v329 = vmul.f32 %v284, %v324
    %v330 = vpack.c.bf16 %v325, %v325
    %v331 = vpack.c.bf16 %v326, %v326
    %v332 = vpack.c.bf16 %v327, %v327
    %v333 = vpack.c.bf16 %v328, %v328
    %v334 = vpack.c.bf16 %v329, %v329
    %335 = vst [vmem:[%s5] sm:$0xf] %v330
    %336 = vst [vmem:[%s5 + $0x4] sm:$0xf] %v331
    %337 = vst [vmem:[%s5 + $0x8] sm:$0xf] %v332
    %338 = vst [vmem:[%s5 + $0xc] sm:$0xf] %v333
    %339 = vst [vmem:[%s5 + $0x10] sm:$0xf] %v334
  $region33: #{vit_forward.16} parent=0 // pred_fallthru
    _
  // Predicated region
  $region34: #{vit_forward.16} parent=0 // pred_check
    _
  $region35: #{vit_forward.16} parent=0 // pred_check_branch
    %341 = sbr.rel (0) target = $region37
  $region36: #{vit_forward.16} parent=0 // pred_region
    _
  $region37: #{vit_forward.16} parent=0 // pred_fallthru
    _
  // Predicated region
  $region38: #{vit_forward.16} parent=0 // pred_check
    _
  $region39: #{vit_forward.16} parent=0 // pred_check_branch
    %343 = sbr.rel (0) target = $region41
  $region40: #{vit_forward.16} parent=0 // pred_region
    _
  $region41: #{vit_forward.16} parent=0 // pred_fallthru
    _

// kernel: vit_forward.15
$region0: #{vit_forward.15}
  #allocation0 [shape = 'u32[]', space=smem, size = 0x4, offset = 0x4, fixed_abs, tag = 'smem constant byte address 0x4 - core index']
  #allocation1 [shape = 'u32[72,128]{1,0:T(1,128)}', space=vmem, size = 0x9000, scoped, tag = 'internal scratch']
  #allocation2 [shape = 'f32[40,128]{1,0:T(8,128)}', space=vmem, size = 0x5000, scoped, tag = 'scratch operand']
  %s0 = inlined_call_operand.vmem [shape: bf16[40,32], index: 0, kind: input, shape index: {}]
  %s1 = inlined_call_operand.vmem [shape: bf16[32,128], index: 1, kind: input, shape index: {}]
  %s2 = inlined_call_operand.vmem [shape: f32[1,128], index: 2, kind: input, shape index: {}]
  %s3 = inlined_call_operand.vmem [shape: f32[40,128], index: 3, kind: input, shape index: {}]
  %s4 = inlined_call_operand.vmem [shape: f32[40,128], index: 4, kind: output, shape index: {}]
  %s5 = sld [smem:[#allocation0]]
  $region34: #{vit_forward.15} parent=0
    _
  %s7 = ssub.s32 1, %s5
  %s8 = scalar_select 0, %s7, %s5
  // Predicated region
  $region2: #{vit_forward.15} parent=0 // pred_check
    _
  $region3: #{vit_forward.15} parent=0 // pred_check_branch
    %10 = sbr.rel (0) target = $region5
  $region4: #{vit_forward.15} parent=0 // pred_region
    _
  $region5: #{vit_forward.15} parent=0 // pred_fallthru
    _
  // Predicated region
  $region6: #{vit_forward.15} parent=0 // pred_check
    _
  $region7: #{vit_forward.15} parent=0 // pred_check_branch
    %12 = sbr.rel (0) target = $region9
  $region8: #{vit_forward.15} parent=0 // pred_region
    _
  $region9: #{vit_forward.15} parent=0 // pred_fallthru
    _
  // Predicated region
  $region10: #{vit_forward.15} parent=0 // pred_check
    _
  $region11: #{vit_forward.15} parent=0 // pred_check_branch
    %14 = sbr.rel (0) target = $region13
  $region12: #{vit_forward.15} parent=0 // pred_region
    _
  $region13: #{vit_forward.15} parent=0 // pred_fallthru
    _
  // Predicated region
  $region14: #{vit_forward.15} parent=0 // pred_check
    _
  $region15: #{vit_forward.15} parent=0 // pred_check_branch
    %16 = sbr.rel (0) target = $region17
  $region16: #{vit_forward.15} parent=0 // pred_region
    _
  $region17: #{vit_forward.15} parent=0 // pred_fallthru
    _
  %p18 = scmp.eq.s32.totalorder 0, 0
  // Predicated region
  $region18: #{vit_forward.15} parent=0 // pred_check
    %p19 = pneg %p18
  $region19: #{vit_forward.15} parent=0 // pred_check_branch
    %21 = sbr.rel (%p19) target = $region21
  $region20: #{vit_forward.15} parent=0 // pred_region
    %22 = vst [vmem:[#allocation2] sm:$0xff] 0.0
    %23 = vst [vmem:[#allocation2 + $0x8] sm:$0xff] 0.0
    %24 = vst [vmem:[#allocation2 + $0x10] sm:$0xff] 0.0
    %25 = vst [vmem:[#allocation2 + $0x18] sm:$0xff] 0.0
    %26 = vst [vmem:[#allocation2 + $0x20] sm:$0xff] 0.0
  $region21: #{vit_forward.15} parent=0 // pred_fallthru
    _
  %v27 = vld [vmem:[%s0] sm:$0xf]
  %v28 = vld [vmem:[%s0 + $0x4] sm:$0xf]
  %v29 = vld [vmem:[%s0 + $0x8] sm:$0xf]
  %v30 = vld [vmem:[%s0 + $0xc] sm:$0xf]
  %v31 = vld [vmem:[%s0 + $0x10] sm:$0xf]
  %v32 = vld [vmem:[#allocation2] sm:$0xff]
  %v33 = vld [vmem:[#allocation2 + $0x8] sm:$0xff]
  %v34 = vld [vmem:[#allocation2 + $0x10] sm:$0xff]
  %v35 = vld [vmem:[#allocation2 + $0x18] sm:$0xff]
  %v36 = vld [vmem:[#allocation2 + $0x20] sm:$0xff]
  %v37 = vld [vmem:[%s1] sm:$0xf]
  %v38 = vld [vmem:[%s1 + $0x4] sm:$0xf]
  %v39 = vld [vmem:[%s1 + $0x8] sm:$0xf]
  %v40 = vld [vmem:[%s1 + $0xc] sm:$0xf]
  %v46 = vunpack.c.l.b16 %v27
  %v47 = vunpack.c.l.b16 %v28
  %v48 = vunpack.c.l.b16 %v29
  %v49 = vunpack.c.l.b16 %v30
  %v50 = vunpack.c.l.b16 %v31
  %v51 = vpack.c.b16 %v47, %v46
  %v52 = vpack.c.b16 %v49, %v48
  %v53 = vpack.c.b16 %v50, %v50
  %v58 = vunpack.c.l.b16 %v37
  %v59 = vunpack.c.l.b16 %v38
  %v60 = vunpack.c.l.b16 %v39
  %v61 = vunpack.c.l.b16 %v40
  %v62 = vpack.c.b16 %v59, %v58
  %v63 = vpack.c.b16 %v61, %v60
  %vm66 = vcmask 261120
  %v68 = vsel %vm66, %v51, 0
  %v71 = vsel %vm66, %v52, 0
  %v74 = vsel %vm66, %v53, 0
  %76 = vmatpush.bf16.msra.mxu0 0
  %77 = vmatpush.bf16.msra.mxu0 0
  %78 = vmatpush.bf16.msra.mxu0 0
  %79 = vmatpush.bf16.msra.mxu0 0
  %80 = vmatpush.bf16.msra.mxu0 0
  %81 = vmatpush.bf16.msra.mxu0 0
  %82 = vmatpush.bf16.msra.mxu0 %v63
  %83 = vmatpush.bf16.msra.mxu0 %v62
  %84 = vmatmul.bf16.gmra.mxu0 %v68
  %v85 = vpop.f32.mrf.mxu0
  %v86 = vadd.f32 0.0, %v85
  %v87 = vpop.f32.mrf.mxu0
  %v88 = vadd.f32 0.0, %v87
  %89 = vmatmul.bf16.gmra.mxu0 %v71
  %v90 = vpop.f32.mrf.mxu0
  %v91 = vadd.f32 0.0, %v90
  %v92 = vpop.f32.mrf.mxu0
  %v93 = vadd.f32 0.0, %v92
  %94 = vmatmul.bf16.gmra.mxu0 %v74
  %v95 = vpop.f32.mrf.mxu0
  %v96 = vadd.f32 0.0, %v95
  %v97 = vpop.f32.mrf.mxu0
  %98 = vdwg.mxu0
  %v99 = vadd.f32 %v32, %v86
  %v100 = vadd.f32 %v33, %v88
  %v101 = vadd.f32 %v34, %v91
  %v102 = vadd.f32 %v35, %v93
  %v103 = vadd.f32 %v36, %v96
  %104 = vst [vmem:[#allocation2] sm:$0xff] %v99
  %105 = vst [vmem:[#allocation2 + $0x8] sm:$0xff] %v100
  %106 = vst [vmem:[#allocation2 + $0x10] sm:$0xff] %v101
  %107 = vst [vmem:[#allocation2 + $0x18] sm:$0xff] %v102
  %108 = vst [vmem:[#allocation2 + $0x20] sm:$0xff] %v103
  // Predicated region
  $region22: #{vit_forward.15} parent=0 // pred_check
    %p109 = pneg %p18
  $region23: #{vit_forward.15} parent=0 // pred_check_branch
    %111 = sbr.rel (%p109) target = $region25
  $region24: #{vit_forward.15} parent=0 // pred_region
    %v112 = vld [vmem:[#allocation2] sm:$0xff]
    %v113 = vld [vmem:[#allocation2 + $0x8] sm:$0xff]
    %v114 = vld [vmem:[#allocation2 + $0x10] sm:$0xff]
    %v115 = vld [vmem:[#allocation2 + $0x18] sm:$0xff]
    %v116 = vld [vmem:[#allocation2 + $0x20] sm:$0xff]
    %v117 = vld [vmem:[%s2] sm:$0x1]
    %v119 = vperm.slane %v117, 0
    %v121 = vadd.f32 %v112, %v119
    %v122 = vadd.f32 %v113, %v119
    %v123 = vadd.f32 %v114, %v119
    %v124 = vadd.f32 %v115, %v119
    %v125 = vadd.f32 %v116, %v119
    %v126 = vld [vmem:[%s3] sm:$0xff]
    %v127 = vld [vmem:[%s3 + $0x8] sm:$0xff]
    %v128 = vld [vmem:[%s3 + $0x10] sm:$0xff]
    %v129 = vld [vmem:[%s3 + $0x18] sm:$0xff]
    %v130 = vld [vmem:[%s3 + $0x20] sm:$0xff]
    %v131 = vadd.f32 %v121, %v126
    %v132 = vadd.f32 %v122, %v127
    %v133 = vadd.f32 %v123, %v128
    %v134 = vadd.f32 %v124, %v129
    %v135 = vadd.f32 %v125, %v130
    %136 = vst [vmem:[%s4] sm:$0xff] %v131
    %137 = vst [vmem:[%s4 + $0x8] sm:$0xff] %v132
    %138 = vst [vmem:[%s4 + $0x10] sm:$0xff] %v133
    %139 = vst [vmem:[%s4 + $0x18] sm:$0xff] %v134
    %140 = vst [vmem:[%s4 + $0x20] sm:$0xff] %v135
  $region25: #{vit_forward.15} parent=0 // pred_fallthru
    _
  // Predicated region
  $region26: #{vit_forward.15} parent=0 // pred_check
    _
  $region27: #{vit_forward.15} parent=0 // pred_check_branch
    %142 = sbr.rel (0) target = $region29
  $region28: #{vit_forward.15} parent=0 // pred_region
    _
  $region29: #{vit_forward.15} parent=0 // pred_fallthru
    _
  // Predicated region
  $region30: #{vit_forward.15} parent=0 // pred_check
    _
  $region31: #{vit_forward.15} parent=0 // pred_check_branch
    %144 = sbr.rel (0) target = $region33
  $region32: #{vit_forward.15} parent=0 // pred_region
    _
  $region33: #{vit_forward.15} parent=0 // pred_fallthru
    _

// kernel: vit_forward.17
$region0: #{vit_forward.17}
  #allocation0 [shape = 'u32[]', space=smem, size = 0x4, offset = 0x4, fixed_abs, tag = 'smem constant byte address 0x4 - core index']
  #allocation1 [shape = 'u32[72,128]{1,0:T(1,128)}', space=vmem, size = 0x9000, scoped, tag = 'internal scratch']
  #allocation2 [shape = 'f32[40,128]{1,0:T(8,128)}', space=vmem, size = 0x5000, scoped, tag = 'scratch operand']
  %s0 = inlined_call_operand.vmem [shape: bf16[40,64], index: 0, kind: input, shape index: {}]
  %s1 = inlined_call_operand.vmem [shape: bf16[64,128], index: 1, kind: input, shape index: {}]
  %s2 = inlined_call_operand.vmem [shape: f32[1,128], index: 2, kind: input, shape index: {}]
  %s3 = inlined_call_operand.vmem [shape: f32[40,128], index: 3, kind: input, shape index: {}]
  %s4 = inlined_call_operand.vmem [shape: f32[40,128], index: 4, kind: output, shape index: {}]
  %s5 = sld [smem:[#allocation0]]
  $region34: #{vit_forward.17} parent=0
    _
  %s7 = ssub.s32 1, %s5
  %s8 = scalar_select 0, %s7, %s5
  // Predicated region
  $region2: #{vit_forward.17} parent=0 // pred_check
    _
  $region3: #{vit_forward.17} parent=0 // pred_check_branch
    %10 = sbr.rel (0) target = $region5
  $region4: #{vit_forward.17} parent=0 // pred_region
    _
  $region5: #{vit_forward.17} parent=0 // pred_fallthru
    _
  // Predicated region
  $region6: #{vit_forward.17} parent=0 // pred_check
    _
  $region7: #{vit_forward.17} parent=0 // pred_check_branch
    %12 = sbr.rel (0) target = $region9
  $region8: #{vit_forward.17} parent=0 // pred_region
    _
  $region9: #{vit_forward.17} parent=0 // pred_fallthru
    _
  // Predicated region
  $region10: #{vit_forward.17} parent=0 // pred_check
    _
  $region11: #{vit_forward.17} parent=0 // pred_check_branch
    %14 = sbr.rel (0) target = $region13
  $region12: #{vit_forward.17} parent=0 // pred_region
    _
  $region13: #{vit_forward.17} parent=0 // pred_fallthru
    _
  // Predicated region
  $region14: #{vit_forward.17} parent=0 // pred_check
    _
  $region15: #{vit_forward.17} parent=0 // pred_check_branch
    %16 = sbr.rel (0) target = $region17
  $region16: #{vit_forward.17} parent=0 // pred_region
    _
  $region17: #{vit_forward.17} parent=0 // pred_fallthru
    _
  %p18 = scmp.eq.s32.totalorder 0, 0
  // Predicated region
  $region18: #{vit_forward.17} parent=0 // pred_check
    %p19 = pneg %p18
  $region19: #{vit_forward.17} parent=0 // pred_check_branch
    %21 = sbr.rel (%p19) target = $region21
  $region20: #{vit_forward.17} parent=0 // pred_region
    %22 = vst [vmem:[#allocation2] sm:$0xff] 0.0
    %23 = vst [vmem:[#allocation2 + $0x8] sm:$0xff] 0.0
    %24 = vst [vmem:[#allocation2 + $0x10] sm:$0xff] 0.0
    %25 = vst [vmem:[#allocation2 + $0x18] sm:$0xff] 0.0
    %26 = vst [vmem:[#allocation2 + $0x20] sm:$0xff] 0.0
  $region21: #{vit_forward.17} parent=0 // pred_fallthru
    _
  %v27 = vld [vmem:[%s0] sm:$0xf]
  %v28 = vld [vmem:[%s0 + $0x4] sm:$0xf]
  %v29 = vld [vmem:[%s0 + $0x8] sm:$0xf]
  %v30 = vld [vmem:[%s0 + $0xc] sm:$0xf]
  %v31 = vld [vmem:[%s0 + $0x10] sm:$0xf]
  %v32 = vld [vmem:[#allocation2] sm:$0xff]
  %v33 = vld [vmem:[#allocation2 + $0x8] sm:$0xff]
  %v34 = vld [vmem:[#allocation2 + $0x10] sm:$0xff]
  %v35 = vld [vmem:[#allocation2 + $0x18] sm:$0xff]
  %v36 = vld [vmem:[#allocation2 + $0x20] sm:$0xff]
  %v37 = vld [vmem:[%s1] sm:$0xf]
  %v38 = vld [vmem:[%s1 + $0x4] sm:$0xf]
  %v39 = vld [vmem:[%s1 + $0x8] sm:$0xf]
  %v40 = vld [vmem:[%s1 + $0xc] sm:$0xf]
  %v41 = vld [vmem:[%s1 + $0x10] sm:$0xf]
  %v42 = vld [vmem:[%s1 + $0x14] sm:$0xf]
  %v43 = vld [vmem:[%s1 + $0x18] sm:$0xf]
  %v44 = vld [vmem:[%s1 + $0x1c] sm:$0xf]
  %v50 = vunpack.c.l.b16 %v27
  %v51 = vunpack.c.l.b16 %v28
  %v52 = vunpack.c.l.b16 %v29
  %v53 = vunpack.c.l.b16 %v30
  %v54 = vunpack.c.l.b16 %v31
  %v55 = vpack.c.b16 %v51, %v50
  %v56 = vpack.c.b16 %v53, %v52
  %v57 = vpack.c.b16 %v54, %v54
  %v66 = vunpack.c.l.b16 %v37
  %v67 = vunpack.c.l.b16 %v38
  %v68 = vunpack.c.l.b16 %v39
  %v69 = vunpack.c.l.b16 %v40
  %v70 = vunpack.c.l.b16 %v41
  %v71 = vunpack.c.l.b16 %v42
  %v72 = vunpack.c.l.b16 %v43
  %v73 = vunpack.c.l.b16 %v44
  %v74 = vpack.c.b16 %v67, %v66
  %v75 = vpack.c.b16 %v69, %v68
  %v76 = vpack.c.b16 %v71, %v70
  %v77 = vpack.c.b16 %v73, %v72
  %vm82 = vcmask 523264
  %v84 = vsel %vm82, %v55, 0
  %v87 = vsel %vm82, %v56, 0
  %v90 = vsel %vm82, %v57, 0
  %92 = vmatpush.bf16.msra.mxu0 0
  %93 = vmatpush.bf16.msra.mxu0 0
  %94 = vmatpush.bf16.msra.mxu0 0
  %95 = vmatpush.bf16.msra.mxu0 0
  %96 = vmatpush.bf16.msra.mxu0 %v77
  %97 = vmatpush.bf16.msra.mxu0 %v76
  %98 = vmatpush.bf16.msra.mxu0 %v75
  %99 = vmatpush.bf16.msra.mxu0 %v74
  %100 = vmatmul.bf16.gmra.mxu0 %v84
  %v101 = vpop.f32.mrf.mxu0
  %v102 = vadd.f32 0.0, %v101
  %v103 = vpop.f32.mrf.mxu0
  %v104 = vadd.f32 0.0, %v103
  %105 = vmatmul.bf16.gmra.mxu0 %v87
  %v106 = vpop.f32.mrf.mxu0
  %v107 = vadd.f32 0.0, %v106
  %v108 = vpop.f32.mrf.mxu0
  %v109 = vadd.f32 0.0, %v108
  %110 = vmatmul.bf16.gmra.mxu0 %v90
  %v111 = vpop.f32.mrf.mxu0
  %v112 = vadd.f32 0.0, %v111
  %v113 = vpop.f32.mrf.mxu0
  %114 = vdwg.mxu0
  %v115 = vadd.f32 %v32, %v102
  %v116 = vadd.f32 %v33, %v104
  %v117 = vadd.f32 %v34, %v107
  %v118 = vadd.f32 %v35, %v109
  %v119 = vadd.f32 %v36, %v112
  %120 = vst [vmem:[#allocation2] sm:$0xff] %v115
  %121 = vst [vmem:[#allocation2 + $0x8] sm:$0xff] %v116
  %122 = vst [vmem:[#allocation2 + $0x10] sm:$0xff] %v117
  %123 = vst [vmem:[#allocation2 + $0x18] sm:$0xff] %v118
  %124 = vst [vmem:[#allocation2 + $0x20] sm:$0xff] %v119
  // Predicated region
  $region22: #{vit_forward.17} parent=0 // pred_check
    %p125 = pneg %p18
  $region23: #{vit_forward.17} parent=0 // pred_check_branch
    %127 = sbr.rel (%p125) target = $region25
  $region24: #{vit_forward.17} parent=0 // pred_region
    %v128 = vld [vmem:[#allocation2] sm:$0xff]
    %v129 = vld [vmem:[#allocation2 + $0x8] sm:$0xff]
    %v130 = vld [vmem:[#allocation2 + $0x10] sm:$0xff]
    %v131 = vld [vmem:[#allocation2 + $0x18] sm:$0xff]
    %v132 = vld [vmem:[#allocation2 + $0x20] sm:$0xff]
    %v133 = vld [vmem:[%s2] sm:$0x1]
    %v135 = vperm.slane %v133, 0
    %v137 = vadd.f32 %v128, %v135
    %v138 = vadd.f32 %v129, %v135
    %v139 = vadd.f32 %v130, %v135
    %v140 = vadd.f32 %v131, %v135
    %v141 = vadd.f32 %v132, %v135
    %v142 = vld [vmem:[%s3] sm:$0xff]
    %v143 = vld [vmem:[%s3 + $0x8] sm:$0xff]
    %v144 = vld [vmem:[%s3 + $0x10] sm:$0xff]
    %v145 = vld [vmem:[%s3 + $0x18] sm:$0xff]
    %v146 = vld [vmem:[%s3 + $0x20] sm:$0xff]
    %v147 = vadd.f32 %v137, %v142
    %v148 = vadd.f32 %v138, %v143
    %v149 = vadd.f32 %v139, %v144
    %v150 = vadd.f32 %v140, %v145
    %v151 = vadd.f32 %v141, %v146
    %152 = vst [vmem:[%s4] sm:$0xff] %v147
    %153 = vst [vmem:[%s4 + $0x8] sm:$0xff] %v148
    %154 = vst [vmem:[%s4 + $0x10] sm:$0xff] %v149
    %155 = vst [vmem:[%s4 + $0x18] sm:$0xff] %v150
    %156 = vst [vmem:[%s4 + $0x20] sm:$0xff] %v151
  $region25: #{vit_forward.17} parent=0 // pred_fallthru
    _
  // Predicated region
  $region26: #{vit_forward.17} parent=0 // pred_check
    _
  $region27: #{vit_forward.17} parent=0 // pred_check_branch
    %158 = sbr.rel (0) target = $region29
  $region28: #{vit_forward.17} parent=0 // pred_region
    _
  $region29: #{vit_forward.17} parent=0 // pred_fallthru
    _
  // Predicated region
  $region30: #{vit_forward.17} parent=0 // pred_check
    _
  $region31: #{vit_forward.17} parent=0 // pred_check_branch
    %160 = sbr.rel (0) target = $region33
  $region32: #{vit_forward.17} parent=0 // pred_region
    _
  $region33: #{vit_forward.17} parent=0 // pred_fallthru
    _

// kernel: vit_forward.23
$region0: #{vit_forward.23}
  #allocation0 [shape = 'u32[]', space=smem, size = 0x4, offset = 0x4, fixed_abs, tag = 'smem constant byte address 0x4 - core index']
  #allocation1 [shape = 'u32[72,128]{1,0:T(1,128)}', space=vmem, size = 0x9000, scoped, tag = 'internal scratch']
  #allocation2 [shape = 'f32[40,128]{1,0:T(8,128)}', space=vmem, size = 0x5000, scoped, tag = 'scratch operand']
  #allocation3 [shape = 'bf16[40,32]{1,0:T(8,128)(2,1)}', space=vmem, size = 0x2800, scoped, tag = 'scratch operand']
  %s0 = inlined_call_operand.vmem [shape: f32[40,32], index: 0, kind: input, shape index: {}]
  %s1 = inlined_call_operand.vmem [shape: bf16[32,128], index: 1, kind: input, shape index: {}]
  %s2 = inlined_call_operand.vmem [shape: f32[1,128], index: 2, kind: input, shape index: {}]
  %s3 = inlined_call_operand.vmem [shape: f32[1,32], index: 3, kind: input, shape index: {}]
  %s4 = inlined_call_operand.vmem [shape: f32[1,32], index: 4, kind: input, shape index: {}]
  %s5 = inlined_call_operand.vmem [shape: f32[40,128], index: 5, kind: output, shape index: {}]
  %s6 = sld [smem:[#allocation0]]
  $region42: #{vit_forward.23} parent=0
    _
  %s8 = ssub.s32 1, %s6
  %s9 = scalar_select 0, %s8, %s6
  // Predicated region
  $region2: #{vit_forward.23} parent=0 // pred_check
    _
  $region3: #{vit_forward.23} parent=0 // pred_check_branch
    %11 = sbr.rel (0) target = $region5
  $region4: #{vit_forward.23} parent=0 // pred_region
    _
  $region5: #{vit_forward.23} parent=0 // pred_fallthru
    _
  // Predicated region
  $region6: #{vit_forward.23} parent=0 // pred_check
    _
  $region7: #{vit_forward.23} parent=0 // pred_check_branch
    %13 = sbr.rel (0) target = $region9
  $region8: #{vit_forward.23} parent=0 // pred_region
    _
  $region9: #{vit_forward.23} parent=0 // pred_fallthru
    _
  // Predicated region
  $region10: #{vit_forward.23} parent=0 // pred_check
    _
  $region11: #{vit_forward.23} parent=0 // pred_check_branch
    %15 = sbr.rel (0) target = $region13
  $region12: #{vit_forward.23} parent=0 // pred_region
    _
  $region13: #{vit_forward.23} parent=0 // pred_fallthru
    _
  // Predicated region
  $region14: #{vit_forward.23} parent=0 // pred_check
    _
  $region15: #{vit_forward.23} parent=0 // pred_check_branch
    %17 = sbr.rel (0) target = $region17
  $region16: #{vit_forward.23} parent=0 // pred_region
    _
  $region17: #{vit_forward.23} parent=0 // pred_fallthru
    _
  // Predicated region
  $region18: #{vit_forward.23} parent=0 // pred_check
    _
  $region19: #{vit_forward.23} parent=0 // pred_check_branch
    %19 = sbr.rel (0) target = $region21
  $region20: #{vit_forward.23} parent=0 // pred_region
    _
  $region21: #{vit_forward.23} parent=0 // pred_fallthru
    _
  %p21 = scmp.eq.s32.totalorder 0, 0
  // Predicated region
  $region22: #{vit_forward.23} parent=0 // pred_check
    %p22 = pneg %p21
  $region23: #{vit_forward.23} parent=0 // pred_check_branch
    %24 = sbr.rel (%p22) target = $region25
  $region24: #{vit_forward.23} parent=0 // pred_region
    %25 = vst [vmem:[#allocation2] sm:$0xff] 0.0
    %26 = vst [vmem:[#allocation2 + $0x8] sm:$0xff] 0.0
    %27 = vst [vmem:[#allocation2 + $0x10] sm:$0xff] 0.0
    %28 = vst [vmem:[#allocation2 + $0x18] sm:$0xff] 0.0
    %29 = vst [vmem:[#allocation2 + $0x20] sm:$0xff] 0.0
  $region25: #{vit_forward.23} parent=0 // pred_fallthru
    _
  %p30 = scmp.eq.s32.totalorder 0, 0
  // Predicated region
  $region26: #{vit_forward.23} parent=0 // pred_check
    %p31 = pneg %p30
  $region27: #{vit_forward.23} parent=0 // pred_check_branch
    %33 = sbr.rel (%p31) target = $region29
  $region28: #{vit_forward.23} parent=0 // pred_region
    %v34 = vld [vmem:[%s0] sm:$0xff]
    %v35 = vld [vmem:[%s0 + $0x8] sm:$0xff]
    %v36 = vld [vmem:[%s0 + $0x10] sm:$0xff]
    %v37 = vld [vmem:[%s0 + $0x18] sm:$0xff]
    %v38 = vld [vmem:[%s0 + $0x20] sm:$0xff]
    %vm39 = vcmask 261120
    %v40 = vsel %vm39, %v34, 0.0
    %41 = vadd.xlane.f32.xlu0 %v40
    %v42 = vpop.xlane.xlu0 %41
    %v43 = vsel %vm39, %v35, 0.0
    %44 = vadd.xlane.f32.xlu0 %v43
    %v45 = vpop.xlane.xlu0 %44
    %v46 = vsel %vm39, %v36, 0.0
    %47 = vadd.xlane.f32.xlu0 %v46
    %v48 = vpop.xlane.xlu0 %47
    %v49 = vsel %vm39, %v37, 0.0
    %50 = vadd.xlane.f32.xlu0 %v49
    %v51 = vpop.xlane.xlu0 %50
    %v52 = vsel %vm39, %v38, 0.0
    %53 = vadd.xlane.f32.xlu0 %v52
    %v54 = vpop.xlane.xlu0 %53
    %v55 = vrcp.pop 32.0
    %v56 = vmul.f32 32.0, %v55
    %v57 = vsub.f32 1.0, %v56
    %v58 = vmul.f32 %v55, %v57
    %v59 = vadd.f32 %v55, %v58
    %vm60 = vweird.f32 %v55
    %v61 = vsel %vm60, %v55, %v59
    %v62 = vmul.f32 %v42, %v61
    %v63 = vmul.f32 %v45, %v61
    %v64 = vmul.f32 %v48, %v61
    %v65 = vmul.f32 %v51, %v61
    %v66 = vmul.f32 %v54, %v61
    %v67 = vsub.f32 %v34, %v62
    %v68 = vsub.f32 %v35, %v63
    %v69 = vsub.f32 %v36, %v64
    %v70 = vsub.f32 %v37, %v65
    %v71 = vsub.f32 %v38, %v66
    %v72 = vmul.f32 %v67, %v67
    %v73 = vmul.f32 %v68, %v68
    %v74 = vmul.f32 %v69, %v69
    %v75 = vmul.f32 %v70, %v70
    %v76 = vmul.f32 %v71, %v71
    %v77 = vsel %vm39, %v72, 0.0
    %78 = vadd.xlane.f32.xlu0 %v77
    %v79 = vpop.xlane.xlu0 %78
    %v80 = vsel %vm39, %v73, 0.0
    %81 = vadd.xlane.f32.xlu0 %v80
    %v82 = vpop.xlane.xlu0 %81
    %v83 = vsel %vm39, %v74, 0.0
    %84 = vadd.xlane.f32.xlu0 %v83
    %v85 = vpop.xlane.xlu0 %84
    %v86 = vsel %vm39, %v75, 0.0
    %87 = vadd.xlane.f32.xlu0 %v86
    %v88 = vpop.xlane.xlu0 %87
    %v89 = vsel %vm39, %v76, 0.0
    %90 = vadd.xlane.f32.xlu0 %v89
    %v91 = vpop.xlane.xlu0 %90
    %v92 = vmul.f32 %v79, %v61
    %v93 = vmul.f32 %v82, %v61
    %v94 = vmul.f32 %v85, %v61
    %v95 = vmul.f32 %v88, %v61
    %v96 = vmul.f32 %v91, %v61
    %v97 = vadd.f32 %v92, 1e-05
    %v98 = vadd.f32 %v93, 1e-05
    %v99 = vadd.f32 %v94, 1e-05
    %v100 = vadd.f32 %v95, 1e-05
    %v101 = vadd.f32 %v96, 1e-05
    %v102 = vrsqrt.pop %v97
    %v103 = vmul.f32 %v102, %v97
    %v104 = vmul.f32 %v103, %v102
    %v105 = vmul.f32 0.5, %v104
    %v106 = vsub.f32 1.5, %v105
    %v107 = vmul.f32 %v102, %v106
    %vm108 = vweird.f32 %v97
    %vm109 = vweird.f32 %v102
    %vm110 = vmor %vm108, %vm109
    %v111 = vsel %vm110, %v102, %v107
    %v112 = vrsqrt.pop %v98
    %v113 = vmul.f32 %v112, %v98
    %v114 = vmul.f32 %v113, %v112
    %v115 = vmul.f32 0.5, %v114
    %v116 = vsub.f32 1.5, %v115
    %v117 = vmul.f32 %v112, %v116
    %vm118 = vweird.f32 %v98
    %vm119 = vweird.f32 %v112
    %vm120 = vmor %vm118, %vm119
    %v121 = vsel %vm120, %v112, %v117
    %v122 = vrsqrt.pop %v99
    %v123 = vmul.f32 %v122, %v99
    %v124 = vmul.f32 %v123, %v122
    %v125 = vmul.f32 0.5, %v124
    %v126 = vsub.f32 1.5, %v125
    %v127 = vmul.f32 %v122, %v126
    %vm128 = vweird.f32 %v99
    %vm129 = vweird.f32 %v122
    %vm130 = vmor %vm128, %vm129
    %v131 = vsel %vm130, %v122, %v127
    %v132 = vrsqrt.pop %v100
    %v133 = vmul.f32 %v132, %v100
    %v134 = vmul.f32 %v133, %v132
    %v135 = vmul.f32 0.5, %v134
    %v136 = vsub.f32 1.5, %v135
    %v137 = vmul.f32 %v132, %v136
    %vm138 = vweird.f32 %v100
    %vm139 = vweird.f32 %v132
    %vm140 = vmor %vm138, %vm139
    %v141 = vsel %vm140, %v132, %v137
    %v142 = vrsqrt.pop %v101
    %v143 = vmul.f32 %v142, %v101
    %v144 = vmul.f32 %v143, %v142
    %v145 = vmul.f32 0.5, %v144
    %v146 = vsub.f32 1.5, %v145
    %v147 = vmul.f32 %v142, %v146
    %vm148 = vweird.f32 %v101
    %vm149 = vweird.f32 %v142
    %vm150 = vmor %vm148, %vm149
    %v151 = vsel %vm150, %v142, %v147
    %v152 = vmul.f32 %v67, %v111
    %v153 = vmul.f32 %v68, %v121
    %v154 = vmul.f32 %v69, %v131
    %v155 = vmul.f32 %v70, %v141
    %v156 = vmul.f32 %v71, %v151
    %v157 = vld [vmem:[%s3] sm:$0x1]
    %v159 = vperm.slane %v157, 0
    %v161 = vmul.f32 %v152, %v159
    %v162 = vmul.f32 %v153, %v159
    %v163 = vmul.f32 %v154, %v159
    %v164 = vmul.f32 %v155, %v159
    %v165 = vmul.f32 %v156, %v159
    %v166 = vld [vmem:[%s4] sm:$0x1]
    %v168 = vperm.slane %v166, 0
    %v170 = vadd.f32 %v161, %v168
    %v171 = vadd.f32 %v162, %v168
    %v172 = vadd.f32 %v163, %v168
    %v173 = vadd.f32 %v164, %v168
    %v174 = vadd.f32 %v165, %v168
    %v175 = vpack.c.bf16 %v170, %v170
    %v176 = vpack.c.bf16 %v171, %v171
    %v177 = vpack.c.bf16 %v172, %v172
    %v178 = vpack.c.bf16 %v173, %v173
    %v179 = vpack.c.bf16 %v174, %v174
    %vm180 = vcmask 257024
    %181 = vst.msk [vmem:[#allocation3] sm:$0xf] %vm180, %v175
    %182 = vst.msk [vmem:[#allocation3 + $0x4] sm:$0xf] %vm180, %v176
    %183 = vst.msk [vmem:[#allocation3 + $0x8] sm:$0xf] %vm180, %v177
    %184 = vst.msk [vmem:[#allocation3 + $0xc] sm:$0xf] %vm180, %v178
    %185 = vst.msk [vmem:[#allocation3 + $0x10] sm:$0xf] %vm180, %v179
  $region29: #{vit_forward.23} parent=0 // pred_fallthru
    _
  %v186 = vld [vmem:[#allocation3] sm:$0xf]
  %v187 = vld [vmem:[#allocation3 + $0x4] sm:$0xf]
  %v188 = vld [vmem:[#allocation3 + $0x8] sm:$0xf]
  %v189 = vld [vmem:[#allocation3 + $0xc] sm:$0xf]
  %v190 = vld [vmem:[#allocation3 + $0x10] sm:$0xf]
  %v191 = vld [vmem:[#allocation2] sm:$0xff]
  %v192 = vld [vmem:[#allocation2 + $0x8] sm:$0xff]
  %v193 = vld [vmem:[#allocation2 + $0x10] sm:$0xff]
  %v194 = vld [vmem:[#allocation2 + $0x18] sm:$0xff]
  %v195 = vld [vmem:[#allocation2 + $0x20] sm:$0xff]
  %v196 = vld [vmem:[%s1] sm:$0xf]
  %v197 = vld [vmem:[%s1 + $0x4] sm:$0xf]
  %v198 = vld [vmem:[%s1 + $0x8] sm:$0xf]
  %v199 = vld [vmem:[%s1 + $0xc] sm:$0xf]
  %v205 = vunpack.c.l.b16 %v186
  %v206 = vunpack.c.l.b16 %v187
  %v207 = vunpack.c.l.b16 %v188
  %v208 = vunpack.c.l.b16 %v189
  %v209 = vunpack.c.l.b16 %v190
  %v210 = vpack.c.b16 %v206, %v205
  %v211 = vpack.c.b16 %v208, %v207
  %v212 = vpack.c.b16 %v209, %v209
  %v217 = vunpack.c.l.b16 %v196
  %v218 = vunpack.c.l.b16 %v197
  %v219 = vunpack.c.l.b16 %v198
  %v220 = vunpack.c.l.b16 %v199
  %v221 = vpack.c.b16 %v218, %v217
  %v222 = vpack.c.b16 %v220, %v219
  %vm225 = vcmask 261120
  %v227 = vsel %vm225, %v210, 0
  %v230 = vsel %vm225, %v211, 0
  %v233 = vsel %vm225, %v212, 0
  %235 = vmatpush.bf16.msra.mxu0 0
  %236 = vmatpush.bf16.msra.mxu0 0
  %237 = vmatpush.bf16.msra.mxu0 0
  %238 = vmatpush.bf16.msra.mxu0 0
  %239 = vmatpush.bf16.msra.mxu0 0
  %240 = vmatpush.bf16.msra.mxu0 0
  %241 = vmatpush.bf16.msra.mxu0 %v222
  %242 = vmatpush.bf16.msra.mxu0 %v221
  %243 = vmatmul.bf16.gmra.mxu0 %v227
  %v244 = vpop.f32.mrf.mxu0
  %v245 = vadd.f32 0.0, %v244
  %v246 = vpop.f32.mrf.mxu0
  %v247 = vadd.f32 0.0, %v246
  %248 = vmatmul.bf16.gmra.mxu0 %v230
  %v249 = vpop.f32.mrf.mxu0
  %v250 = vadd.f32 0.0, %v249
  %v251 = vpop.f32.mrf.mxu0
  %v252 = vadd.f32 0.0, %v251
  %253 = vmatmul.bf16.gmra.mxu0 %v233
  %v254 = vpop.f32.mrf.mxu0
  %v255 = vadd.f32 0.0, %v254
  %v256 = vpop.f32.mrf.mxu0
  %257 = vdwg.mxu0
  %v258 = vadd.f32 %v191, %v245
  %v259 = vadd.f32 %v192, %v247
  %v260 = vadd.f32 %v193, %v250
  %v261 = vadd.f32 %v194, %v252
  %v262 = vadd.f32 %v195, %v255
  %263 = vst [vmem:[#allocation2] sm:$0xff] %v258
  %264 = vst [vmem:[#allocation2 + $0x8] sm:$0xff] %v259
  %265 = vst [vmem:[#allocation2 + $0x10] sm:$0xff] %v260
  %266 = vst [vmem:[#allocation2 + $0x18] sm:$0xff] %v261
  %267 = vst [vmem:[#allocation2 + $0x20] sm:$0xff] %v262
  // Predicated region
  $region30: #{vit_forward.23} parent=0 // pred_check
    %p268 = pneg %p21
  $region31: #{vit_forward.23} parent=0 // pred_check_branch
    %270 = sbr.rel (%p268) target = $region33
  $region32: #{vit_forward.23} parent=0 // pred_region
    %v271 = vld [vmem:[#allocation2] sm:$0xff]
    %v272 = vld [vmem:[#allocation2 + $0x8] sm:$0xff]
    %v273 = vld [vmem:[#allocation2 + $0x10] sm:$0xff]
    %v274 = vld [vmem:[#allocation2 + $0x18] sm:$0xff]
    %v275 = vld [vmem:[#allocation2 + $0x20] sm:$0xff]
    %v276 = vld [vmem:[%s2] sm:$0x1]
    %v278 = vperm.slane %v276, 0
    %v280 = vadd.f32 %v271, %v278
    %v281 = vadd.f32 %v272, %v278
    %v282 = vadd.f32 %v273, %v278
    %v283 = vadd.f32 %v274, %v278
    %v284 = vadd.f32 %v275, %v278
    %285 = vst [vmem:[%s5] sm:$0xff] %v280
    %286 = vst [vmem:[%s5 + $0x8] sm:$0xff] %v281
    %287 = vst [vmem:[%s5 + $0x10] sm:$0xff] %v282
    %288 = vst [vmem:[%s5 + $0x18] sm:$0xff] %v283
    %289 = vst [vmem:[%s5 + $0x20] sm:$0xff] %v284
  $region33: #{vit_forward.23} parent=0 // pred_fallthru
    _
  // Predicated region
  $region34: #{vit_forward.23} parent=0 // pred_check
    _
  $region35: #{vit_forward.23} parent=0 // pred_check_branch
    %291 = sbr.rel (0) target = $region37
  $region36: #{vit_forward.23} parent=0 // pred_region
    _
  $region37: #{vit_forward.23} parent=0 // pred_fallthru
    _
  // Predicated region
  $region38: #{vit_forward.23} parent=0 // pred_check
    _
  $region39: #{vit_forward.23} parent=0 // pred_check_branch
    %293 = sbr.rel (0) target = $region41
  $region40: #{vit_forward.23} parent=0 // pred_region
    _
  $region41: #{vit_forward.23} parent=0 // pred_fallthru
    _

</llo_original>
